<compile_context>
chip_gen: v7x
topology: tpu7x:2x2x1
jax: 0.10.0
libtpu: 0.0.40
codegen_flags: <defaults>
</compile_context>

<pallas_src>
import functools
import math

import jax
import jax.numpy as jnp
from jax.experimental import pallas as pl
from jax.experimental.pallas import tpu as pltpu

BN_EPS = 1e-5


# ---------------------- per-generation compiler parameters ----------------------
@functools.lru_cache(maxsize=None)
def _vmem_limit_bytes():
    """VMEM budget from the actual chip (64 MiB/TC on v7x, 128 MiB on v5e/v6e)
    minus headroom, instead of a hard-coded 128 MiB."""
    try:
        cap = getattr(pltpu.get_tpu_info(), "vmem_capacity_bytes", None)
    except Exception:
        return None
    if not cap:
        return None
    return int(min(cap - (8 << 20), int(cap * 0.875)))


def _compiler_params(n_grid_axes=2):
    kwargs = dict(dimension_semantics=("parallel",) * n_grid_axes)
    limit = _vmem_limit_bytes()
    if limit is not None:
        kwargs["vmem_limit_bytes"] = limit
    return pltpu.CompilerParams(**kwargs)


def bn_fold(bn):
    s = bn["gamma"] * jax.lax.rsqrt(bn["var"] + BN_EPS)
    b = bn["beta"] - bn["mean"] * s
    return s, b


# ----------------------------- weight re-layouts --------------------------------
def _dw_weight_to_9c(w):
    # (C, 1, 3, 3) depthwise torch weights -> (9, C) tap-major, channel on lanes.
    return jnp.transpose(w[:, 0, :, :], (1, 2, 0)).reshape(9, w.shape[0])


def _pw_weight_to_mat(w):
    # (Cout, Cin, 1, 1) 1x1 torch weights -> (Cin, Cout) bf16 for the MXU.
    return jnp.transpose(w[:, :, 0, 0], (1, 0)).astype(jnp.bfloat16)


# ---------------------- K1: depthwise 3x3 conv + folded BN -----------------------
def _dw3x3_bn_row_kernel(xt_ref, xm_ref, xb_ref, w_ref, s_ref, b_ref, o_ref, *, W):
    # x?_ref: (1, 1, W+2, C) = rows r-1, r, r+1 of the zero-padded input.
    Wp, C = xt_ref.shape[2], xt_ref.shape[3]
    rows = [xt_ref[...].reshape(Wp, C).astype(jnp.float32),
            xm_ref[...].reshape(Wp, C).astype(jnp.float32),
            xb_ref[...].reshape(Wp, C).astype(jnp.float32)]
    w9 = w_ref[...]                                      # (9, C)
    acc = jnp.zeros((W, C), jnp.float32)
    for ki in range(3):
        xi = rows[ki]
        for kj in range(3):
            k = 3 * ki + kj
            acc = acc + xi[kj:kj + W, :] * w9[k:k + 1, :]
    y = acc * s_ref[...] + b_ref[...]                    # folded BN1, no activation
    o_ref[...] = y.reshape(1, 1, W, C).astype(o_ref.dtype)


def dwconv3x3_bn(x, w9, scale, bias, out_dtype=jnp.bfloat16):
    """Depthwise 3x3 (stride 1, pad 1) + folded BN, one output row per grid step."""
    N, H, W, C = x.shape
    xp = jnp.pad(x, ((0, 0), (1, 1), (1, 1), (0, 0)))

    def row_spec(off):
        return pl.BlockSpec((1, 1, W + 2, C), lambda n, r, o=off: (n, r + o, 0, 0))

    return pl.pallas_call(
        functools.partial(_dw3x3_bn_row_kernel, W=W),
        out_shape=jax.ShapeDtypeStruct((N, H, W, C), out_dtype),
        grid=(N, H),
        in_specs=[row_spec(0), row_spec(1), row_spec(2),
                  pl.BlockSpec((9, C), lambda n, r: (0, 0)),
                  pl.BlockSpec((1, C), lambda n, r: (0, 0)),
                  pl.BlockSpec((1, C), lambda n, r: (0, 0))],
        out_specs=pl.BlockSpec((1, 1, W, C), lambda n, r: (n, r, 0, 0)),
        compiler_params=_compiler_params(),
    )(xp, xp, xp, w9, scale.reshape(1, C), bias.reshape(1, C))


# --------- K2/K3: Ghost module fused with following BN (+ReLU6 / +residual) -----
def _make_ghost_kernel(H, W, relu6, with_res):
    def kernel(*refs):
        if with_res:
            (tt, tm, tb, wp_ref, sp_ref, bp_ref, wc_ref, sc_ref, bc_ref,
             so_ref, bo_ref, id_ref, o_ref) = refs
        else:
            (tt, tm, tb, wp_ref, sp_ref, bp_ref, wc_ref, sc_ref, bc_ref,
             so_ref, bo_ref, o_ref) = refs
            id_ref = None

        r = pl.program_id(1)
        Wp, Cin = tm.shape[2], tm.shape[3]
        wp = wp_ref[...]                                 # (Cin, Cp) bf16
        Cp = wp.shape[1]
        sp, bp = sp_ref[...], bp_ref[...]                # (1, Cp) folded primary BN

        # The cheap depthwise conv zero-pads x1, so x1 outside the image must be
        # exactly zero (NOT relu(bias)): mask halo rows / pad columns after BN+ReLU.
        col = jax.lax.broadcasted_iota(jnp.int32, (Wp, 1), 0)
        col_ok = jnp.logical_and(col >= 1, col <= W)

        # primary 1x1 conv + BN + ReLU on the three halo rows (MXU, bf16 in / f32 acc)
        x1 = []
        for i, ref in enumerate((tt, tm, tb)):
            ti = ref[...].reshape(Wp, Cin)               # bf16
            xi = jnp.dot(ti, wp, preferred_element_type=jnp.float32)
            xi = jnp.maximum(xi * sp + bp, 0.0)
            orig_row = r - 1 + i
            row_ok = jnp.logical_and(orig_row >= 0, orig_row < H)
            xi = jnp.where(col_ok, xi, 0.0) * jnp.where(row_ok, 1.0, 0.0)
            x1.append(xi)                                # (Wp, Cp) f32

        # cheap depthwise 3x3 + BN + ReLU (VPU, f32)
        wc = wc_ref[...]                                 # (9, Cp)
        acc = jnp.zeros((W, Cp), jnp.float32)
        for ki in range(3):
            for kj in range(3):
                k = 3 * ki + kj
                acc = acc + x1[ki][kj:kj + W, :] * wc[k:k + 1, :]
        x2 = jnp.maximum(acc * sc_ref[...] + bc_ref[...], 0.0)

        # concat -> one lane-dense 2*Cp write, with the outer BN fused in.
        y = jnp.concatenate([x1[1][1:1 + W, :], x2], axis=-1)   # (W, 2*Cp)
        y = y * so_ref[...] + bo_ref[...]
        if relu6:
            y = jnp.clip(y, 0.0, 6.0)
        if id_ref is not None:
            y = y + id_ref[...].reshape(W, 2 * Cp).astype(jnp.float32)
        o_ref[...] = y.reshape(1, 1, W, 2 * Cp).astype(o_ref.dtype)

    return kernel


def ghost_bn_fused(t, g, out_scale, out_bias, *, relu6, residual=None,
                   out_dtype=jnp.bfloat16):
    """GhostModule (1x1 conv+BN+ReLU, depthwise 3x3+BN+ReLU, concat) fused with the
    following per-channel affine (+ ReLU6 or + residual add). One output row/step."""
    N, H, W, Cin = t.shape
    wp = g["wp_mat"]                                     # (Cin, Cp) bf16
    Cp = int(wp.shape[1])
    Cout = 2 * Cp
    sp, bp = bn_fold(g["bnp"])
    sc, bc = bn_fold(g["bnc"])
    tp = jnp.pad(t, ((0, 0), (1, 1), (1, 1), (0, 0)))

    def row_spec(off):
        return pl.BlockSpec((1, 1, W + 2, Cin), lambda n, r, o=off: (n, r + o, 0, 0))

    def bcast(shape):
        return pl.BlockSpec(shape, lambda n, r: (0, 0))

    in_specs = [row_spec(0), row_spec(1), row_spec(2),
                bcast((Cin, Cp)), bcast((1, Cp)), bcast((1, Cp)),
                bcast((9, Cp)), bcast((1, Cp)), bcast((1, Cp)),
                bcast((1, Cout)), bcast((1, Cout))]
    args = [tp, tp, tp, wp, sp.reshape(1, Cp), bp.reshape(1, Cp),
            g["wc_mat"], sc.reshape(1, Cp), bc.reshape(1, Cp),
            out_scale.reshape(1, Cout), out_bias.reshape(1, Cout)]
    if residual is not None:
        in_specs.append(pl.BlockSpec((1, 1, W, Cout), lambda n, r: (n, r, 0, 0)))
        args.append(residual)

    return pl.pallas_call(
        _make_ghost_kernel(H, W, relu6, residual is not None),
        out_shape=jax.ShapeDtypeStruct((N, H, W, Cout), out_dtype),
        grid=(N, H),
        in_specs=in_specs,
        out_specs=pl.BlockSpec((1, 1, W, Cout), lambda n, r: (n, r, 0, 0)),
        compiler_params=_compiler_params(),
    )(*args)


# ------------------------------- parameters -------------------------------------
class ParamGen:
    def __init__(self, seed=0):
        self.key = jax.random.PRNGKey(seed)

    def _next(self):
        self.key, k = jax.random.split(self.key)
        return k

    def conv(self, cout, cin, kh, kw):
        fan_in = cin * kh * kw
        return jax.random.normal(self._next(), (cout, cin, kh, kw), jnp.float32) / math.sqrt(fan_in)

    def vec(self, c, scale=0.05):
        return jax.random.normal(self._next(), (c,), jnp.float32) * scale

    def bn(self, c):
        return dict(
            gamma=1.0 + self.vec(c), beta=self.vec(c), mean=self.vec(c),
            var=1.0 + 0.1 * jnp.abs(jax.random.normal(self._next(), (c,), jnp.float32)))


def make_ghost(pg, inp, oup):
    init_ch = math.ceil(oup / 2)
    # ratio=2 -> new_channels == init_channels; with even oup the [:oup] slice is identity.
    # TODO(synk): odd `oup` (GhostModule ceil + channel-slice path) not implemented in the fused kernel.
    return dict(wp=pg.conv(init_ch, inp, 1, 1), bnp=pg.bn(init_ch),
                wc=pg.conv(init_ch, 1, 3, 3), bnc=pg.bn(init_ch), oup=oup)


def make_basic_block1(pg, in_ch, out_ch):
    assert in_ch == out_ch and in_ch % 4 == 0
    # conv4/bn4 exist in the torch module but are unused in its forward().
    return dict(w1=pg.conv(in_ch, 1, 3, 3), bn1=pg.bn(in_ch),
                g2=make_ghost(pg, in_ch, in_ch // 2), bn2=pg.bn(in_ch // 2),
                g3=make_ghost(pg, in_ch // 2, out_ch), bn3=pg.bn(out_ch))


def _prep_ghost(g):
    return dict(wp_mat=_pw_weight_to_mat(g["wp"]), wc_mat=_dw_weight_to_9c(g["wc"]),
                bnp=g["bnp"], bnc=g["bnc"])


# ------------------------------- forward pass ------------------------------------
def basic_block1_forward(params, x_nchw):
    x = jnp.transpose(x_nchw, (0, 2, 3, 1)).astype(jnp.float32)   # NCHW -> NHWC
    # K1: conv1 (depthwise 3x3) + bn1, stored bf16 for the next MXU matmul
    s1, b1 = bn_fold(params["bn1"])
    t = dwconv3x3_bn(x, _dw_weight_to_9c(params["w1"]), s1, b1, out_dtype=jnp.bfloat16)
    # K2: GhostModule#2 + bn2 + ReLU6
    s2, b2 = bn_fold(params["bn2"])
    u = ghost_bn_fused(t, _prep_ghost(params["g2"]), s2, b2,
                       relu6=True, residual=None, out_dtype=jnp.bfloat16)
    # K3: GhostModule#3 + bn3 + residual add, final output f32
    s3, b3 = bn_fold(params["bn3"])
    y = ghost_bn_fused(u, _prep_ghost(params["g3"]), s3, b3,
                       relu6=False, residual=x, out_dtype=jnp.float32)
    return jnp.transpose(y, (0, 3, 1, 2))                          # NHWC -> NCHW


# --------------------------- plain-JAX reference ---------------------------------
def _conv_nhwc(x, w_oihw, padding, groups=1):
    w = jnp.transpose(w_oihw, (2, 3, 1, 0))      # OIHW -> HWIO
    return jax.lax.conv_general_dilated(
        x, w, window_strides=(1, 1), padding=[(padding, padding)] * 2,
        dimension_numbers=("NHWC", "HWIO", "NHWC"), feature_group_count=groups,
        precision=jax.lax.Precision.HIGHEST)


def _bn_ref(x, bn):
    s, b = bn_fold(bn)
    return x * s + b


def _q(x):   # mirror the kernels' bf16 storage / MXU operand precision
    return x.astype(jnp.bfloat16).astype(jnp.float32)


def ref_basic_block1(params, x_nchw):
    x = jnp.transpose(x_nchw, (0, 2, 3, 1)).astype(jnp.float32)
    C = x.shape[-1]

    def ghost(g, inp):
        x1 = jax.nn.relu(_bn_ref(_conv_nhwc(inp, _q(g["wp"]), 0), g["bnp"]))
        cp = g["wp"].shape[0]
        x2 = jax.nn.relu(_bn_ref(_conv_nhwc(x1, g["wc"], 1, groups=cp), g["bnc"]))
        return jnp.concatenate([x1, x2], axis=-1)[..., :g["oup"]]

    t = _q(_bn_ref(_conv_nhwc(x, params["w1"], 1, groups=C), params["bn1"]))
    u = ghost(params["g2"], t)
    u = _q(jnp.clip(_bn_ref(u, params["bn2"]), 0.0, 6.0))
    v = ghost(params["g3"], u)
    out = _bn_ref(v, params["bn3"]) + x
    return jnp.transpose(out, (0, 3, 1, 2))


# ------------------------------------ main ----------------------------------------
if __name__ == "__main__":
    # TODO(synk): training-mode BatchNorm (batch statistics) not implemented; BN is folded (eval mode).
    N, C, H, W = 2, 64, 16, 16
    pg = ParamGen(0)
    params = make_basic_block1(pg, C, C)
    x = jax.random.normal(jax.random.PRNGKey(0), (N, C, H, W), jnp.float32)  # NCHW

    fwd = jax.jit(basic_block1_forward)
    out = jax.block_until_ready(fwd(params, x))
    assert out.shape == (N, C, H, W), out.shape
    assert bool(jnp.all(jnp.isfinite(out)))

    ref = jax.block_until_ready(ref_basic_block1(params, x))
    max_err = float(jnp.max(jnp.abs(out - ref)))
    assert max_err < 5e-2, f"max |pallas - ref| = {max_err}"
    print("KERNEL_OK")
</pallas_src>

<mosaic_0001>
module attributes {stable_mosaic.version = 11 : i64} {
  func.func @_dw3x3_bn_row_kernel(%arg0: i32, %arg1: i32, %arg2: memref<1x1x18x64xf32, #tpu.memory_space<vmem>>, %arg3: memref<1x1x18x64xf32, #tpu.memory_space<vmem>>, %arg4: memref<1x1x18x64xf32, #tpu.memory_space<vmem>>, %arg5: memref<9x64xf32, #tpu.memory_space<vmem>>, %arg6: memref<1x64xf32, #tpu.memory_space<vmem>>, %arg7: memref<1x64xf32, #tpu.memory_space<vmem>>, %arg8: memref<1x1x16x64xbf16, #tpu.memory_space<vmem>>) attributes {dimension_semantics = [#tpu.dimension_semantics<parallel>, #tpu.dimension_semantics<parallel>], iteration_bounds = array<i64: 2, 16>, scalar_prefetch = 0 : i64, scratch_operands = 0 : i64, tpu.core_type = #tpu.core_type<tc>, window_params = [{transform_indices = @transform_0, window_bounds = array<i64: 1, 1, 18, 64>}, {transform_indices = @transform_1, window_bounds = array<i64: 1, 1, 18, 64>}, {transform_indices = @transform_2, window_bounds = array<i64: 1, 1, 18, 64>}, {pipeline_mode = #tpu.pipeline_mode<synchronous>, transform_indices = @transform_3, window_bounds = array<i64: 9, 64>}, {pipeline_mode = #tpu.pipeline_mode<synchronous>, transform_indices = @transform_4, window_bounds = array<i64: 1, 64>}, {pipeline_mode = #tpu.pipeline_mode<synchronous>, transform_indices = @transform_5, window_bounds = array<i64: 1, 64>}, {transform_indices = @transform_6, window_bounds = array<i64: 1, 1, 16, 64>}]} {
    %c0 = arith.constant 0 : index
    %c0_0 = arith.constant 0 : index
    %c0_1 = arith.constant 0 : index
    %c0_2 = arith.constant 0 : index
    %0 = vector.load %arg2[%c0, %c0_0, %c0_1, %c0_2] : memref<1x1x18x64xf32, #tpu.memory_space<vmem>>, vector<1x1x18x64xf32>
    %1 = vector.shape_cast %0 : vector<1x1x18x64xf32> to vector<18x64xf32>
    %c0_3 = arith.constant 0 : index
    %c0_4 = arith.constant 0 : index
    %c0_5 = arith.constant 0 : index
    %c0_6 = arith.constant 0 : index
    %2 = vector.load %arg3[%c0_3, %c0_4, %c0_5, %c0_6] : memref<1x1x18x64xf32, #tpu.memory_space<vmem>>, vector<1x1x18x64xf32>
    %3 = vector.shape_cast %2 : vector<1x1x18x64xf32> to vector<18x64xf32>
    %c0_7 = arith.constant 0 : index
    %c0_8 = arith.constant 0 : index
    %c0_9 = arith.constant 0 : index
    %c0_10 = arith.constant 0 : index
    %4 = vector.load %arg4[%c0_7, %c0_8, %c0_9, %c0_10] : memref<1x1x18x64xf32, #tpu.memory_space<vmem>>, vector<1x1x18x64xf32>
    %5 = vector.shape_cast %4 : vector<1x1x18x64xf32> to vector<18x64xf32>
    %c0_11 = arith.constant 0 : index
    %c0_12 = arith.constant 0 : index
    %6 = vector.load %arg5[%c0_11, %c0_12] : memref<9x64xf32, #tpu.memory_space<vmem>>, vector<9x64xf32>
    %cst = arith.constant 0.000000e+00 : f32
    %7 = vector.broadcast %cst : f32 to vector<16x64xf32>
    %8 = vector.extract_strided_slice %1 {offsets = [0, 0], sizes = [16, 64], strides = [1, 1]} : vector<18x64xf32> to vector<16x64xf32>
    %9 = vector.extract_strided_slice %6 {offsets = [0, 0], sizes = [1, 64], strides = [1, 1]} : vector<9x64xf32> to vector<1x64xf32>
    %10 = vector.broadcast %9 : vector<1x64xf32> to vector<16x64xf32>
    %11 = arith.mulf %8, %10 : vector<16x64xf32>
    %12 = arith.addf %7, %11 : vector<16x64xf32>
    %13 = vector.extract_strided_slice %1 {offsets = [1, 0], sizes = [16, 64], strides = [1, 1]} : vector<18x64xf32> to vector<16x64xf32>
    %14 = vector.extract_strided_slice %6 {offsets = [1, 0], sizes = [1, 64], strides = [1, 1]} : vector<9x64xf32> to vector<1x64xf32>
    %15 = vector.broadcast %14 : vector<1x64xf32> to vector<16x64xf32>
    %16 = arith.mulf %13, %15 : vector<16x64xf32>
    %17 = arith.addf %12, %16 : vector<16x64xf32>
    %18 = vector.extract_strided_slice %1 {offsets = [2, 0], sizes = [16, 64], strides = [1, 1]} : vector<18x64xf32> to vector<16x64xf32>
    %19 = vector.extract_strided_slice %6 {offsets = [2, 0], sizes = [1, 64], strides = [1, 1]} : vector<9x64xf32> to vector<1x64xf32>
    %20 = vector.broadcast %19 : vector<1x64xf32> to vector<16x64xf32>
    %21 = arith.mulf %18, %20 : vector<16x64xf32>
    %22 = arith.addf %17, %21 : vector<16x64xf32>
    %23 = vector.extract_strided_slice %3 {offsets = [0, 0], sizes = [16, 64], strides = [1, 1]} : vector<18x64xf32> to vector<16x64xf32>
    %24 = vector.extract_strided_slice %6 {offsets = [3, 0], sizes = [1, 64], strides = [1, 1]} : vector<9x64xf32> to vector<1x64xf32>
    %25 = vector.broadcast %24 : vector<1x64xf32> to vector<16x64xf32>
    %26 = arith.mulf %23, %25 : vector<16x64xf32>
    %27 = arith.addf %22, %26 : vector<16x64xf32>
    %28 = vector.extract_strided_slice %3 {offsets = [1, 0], sizes = [16, 64], strides = [1, 1]} : vector<18x64xf32> to vector<16x64xf32>
    %29 = vector.extract_strided_slice %6 {offsets = [4, 0], sizes = [1, 64], strides = [1, 1]} : vector<9x64xf32> to vector<1x64xf32>
    %30 = vector.broadcast %29 : vector<1x64xf32> to vector<16x64xf32>
    %31 = arith.mulf %28, %30 : vector<16x64xf32>
    %32 = arith.addf %27, %31 : vector<16x64xf32>
    %33 = vector.extract_strided_slice %3 {offsets = [2, 0], sizes = [16, 64], strides = [1, 1]} : vector<18x64xf32> to vector<16x64xf32>
    %34 = vector.extract_strided_slice %6 {offsets = [5, 0], sizes = [1, 64], strides = [1, 1]} : vector<9x64xf32> to vector<1x64xf32>
    %35 = vector.broadcast %34 : vector<1x64xf32> to vector<16x64xf32>
    %36 = arith.mulf %33, %35 : vector<16x64xf32>
    %37 = arith.addf %32, %36 : vector<16x64xf32>
    %38 = vector.extract_strided_slice %5 {offsets = [0, 0], sizes = [16, 64], strides = [1, 1]} : vector<18x64xf32> to vector<16x64xf32>
    %39 = vector.extract_strided_slice %6 {offsets = [6, 0], sizes = [1, 64], strides = [1, 1]} : vector<9x64xf32> to vector<1x64xf32>
    %40 = vector.broadcast %39 : vector<1x64xf32> to vector<16x64xf32>
    %41 = arith.mulf %38, %40 : vector<16x64xf32>
    %42 = arith.addf %37, %41 : vector<16x64xf32>
    %43 = vector.extract_strided_slice %5 {offsets = [1, 0], sizes = [16, 64], strides = [1, 1]} : vector<18x64xf32> to vector<16x64xf32>
    %44 = vector.extract_strided_slice %6 {offsets = [7, 0], sizes = [1, 64], strides = [1, 1]} : vector<9x64xf32> to vector<1x64xf32>
    %45 = vector.broadcast %44 : vector<1x64xf32> to vector<16x64xf32>
    %46 = arith.mulf %43, %45 : vector<16x64xf32>
    %47 = arith.addf %42, %46 : vector<16x64xf32>
    %48 = vector.extract_strided_slice %5 {offsets = [2, 0], sizes = [16, 64], strides = [1, 1]} : vector<18x64xf32> to vector<16x64xf32>
    %49 = vector.extract_strided_slice %6 {offsets = [8, 0], sizes = [1, 64], strides = [1, 1]} : vector<9x64xf32> to vector<1x64xf32>
    %50 = vector.broadcast %49 : vector<1x64xf32> to vector<16x64xf32>
    %51 = arith.mulf %48, %50 : vector<16x64xf32>
    %52 = arith.addf %47, %51 : vector<16x64xf32>
    %c0_13 = arith.constant 0 : index
    %c0_14 = arith.constant 0 : index
    %53 = vector.load %arg6[%c0_13, %c0_14] : memref<1x64xf32, #tpu.memory_space<vmem>>, vector<1x64xf32>
    %54 = vector.broadcast %53 : vector<1x64xf32> to vector<16x64xf32>
    %55 = arith.mulf %52, %54 : vector<16x64xf32>
    %c0_15 = arith.constant 0 : index
    %c0_16 = arith.constant 0 : index
    %56 = vector.load %arg7[%c0_15, %c0_16] : memref<1x64xf32, #tpu.memory_space<vmem>>, vector<1x64xf32>
    %57 = vector.broadcast %56 : vector<1x64xf32> to vector<16x64xf32>
    %58 = arith.addf %55, %57 : vector<16x64xf32>
    %59 = vector.shape_cast %58 : vector<16x64xf32> to vector<1x1x16x64xf32>
    %60 = arith.truncf %59 : vector<1x1x16x64xf32> to vector<1x1x16x64xbf16>
    %c0_17 = arith.constant 0 : index
    %c0_18 = arith.constant 0 : index
    %c0_19 = arith.constant 0 : index
    %c0_20 = arith.constant 0 : index
    %61 = vector.load %arg8[%c0_17, %c0_18, %c0_19, %c0_20] : memref<1x1x16x64xbf16, #tpu.memory_space<vmem>>, vector<1x1x16x64xbf16>
    tpu.vector_store %arg8[%c0_17, %c0_18, %c0_19, %c0_20], %60 {strides = array<i32>} : memref<1x1x16x64xbf16, #tpu.memory_space<vmem>>, vector<1x1x16x64xbf16>,
    return
  }
  func.func @transform_0(%arg0: i32, %arg1: i32) -> (i32, i32, i32, i32) {
    %c0_i32 = arith.constant 0 : i32
    %0 = arith.addi %arg1, %c0_i32 : i32
    %c0_i32_0 = arith.constant 0 : i32
    %c0_i32_1 = arith.constant 0 : i32
    %c0_i32_2 = arith.constant 0 : i32
    return %arg0, %0, %c0_i32_0, %c0_i32_1 : i32, i32, i32, i32
  }
  func.func @transform_1(%arg0: i32, %arg1: i32) -> (i32, i32, i32, i32) {
    %c1_i32 = arith.constant 1 : i32
    %0 = arith.addi %arg1, %c1_i32 : i32
    %c0_i32 = arith.constant 0 : i32
    %c0_i32_0 = arith.constant 0 : i32
    %c0_i32_1 = arith.constant 0 : i32
    return %arg0, %0, %c0_i32, %c0_i32_0 : i32, i32, i32, i32
  }
  func.func @transform_2(%arg0: i32, %arg1: i32) -> (i32, i32, i32, i32) {
    %c2_i32 = arith.constant 2 : i32
    %0 = arith.addi %arg1, %c2_i32 : i32
    %c0_i32 = arith.constant 0 : i32
    %c0_i32_0 = arith.constant 0 : i32
    %c0_i32_1 = arith.constant 0 : i32
    return %arg0, %0, %c0_i32, %c0_i32_0 : i32, i32, i32, i32
  }
  func.func @transform_3(%arg0: i32, %arg1: i32) -> (i32, i32) {
    %c0_i32 = arith.constant 0 : i32
    %c0_i32_0 = arith.constant 0 : i32
    %c0_i32_1 = arith.constant 0 : i32
    return %c0_i32, %c0_i32_0 : i32, i32
  }
  func.func @transform_4(%arg0: i32, %arg1: i32) -> (i32, i32) {
    %c0_i32 = arith.constant 0 : i32
    %c0_i32_0 = arith.constant 0 : i32
    %c0_i32_1 = arith.constant 0 : i32
    return %c0_i32, %c0_i32_0 : i32, i32
  }
  func.func @transform_5(%arg0: i32, %arg1: i32) -> (i32, i32) {
    %c0_i32 = arith.constant 0 : i32
    %c0_i32_0 = arith.constant 0 : i32
    %c0_i32_1 = arith.constant 0 : i32
    return %c0_i32, %c0_i32_0 : i32, i32
  }
  func.func @transform_6(%arg0: i32, %arg1: i32) -> (i32, i32, i32, i32) {
    %c0_i32 = arith.constant 0 : i32
    %c0_i32_0 = arith.constant 0 : i32
    %c0_i32_1 = arith.constant 0 : i32
    return %arg0, %arg1, %c0_i32, %c0_i32_0 : i32, i32, i32, i32
  }
}

module attributes {stable_mosaic.version = 11 : i64} {
  func.func @kernel(%arg0: i32, %arg1: i32, %arg2: memref<1x1x18x64xbf16, #tpu.memory_space<vmem>>, %arg3: memref<1x1x18x64xbf16, #tpu.memory_space<vmem>>, %arg4: memref<1x1x18x64xbf16, #tpu.memory_space<vmem>>, %arg5: memref<64x16xbf16, #tpu.memory_space<vmem>>, %arg6: memref<1x16xf32, #tpu.memory_space<vmem>>, %arg7: memref<1x16xf32, #tpu.memory_space<vmem>>, %arg8: memref<9x16xf32, #tpu.memory_space<vmem>>, %arg9: memref<1x16xf32, #tpu.memory_space<vmem>>, %arg10: memref<1x16xf32, #tpu.memory_space<vmem>>, %arg11: memref<1x32xf32, #tpu.memory_space<vmem>>, %arg12: memref<1x32xf32, #tpu.memory_space<vmem>>, %arg13: memref<1x1x16x32xbf16, #tpu.memory_space<vmem>>) attributes {dimension_semantics = [#tpu.dimension_semantics<parallel>, #tpu.dimension_semantics<parallel>], iteration_bounds = array<i64: 2, 16>, scalar_prefetch = 0 : i64, scratch_operands = 0 : i64, tpu.core_type = #tpu.core_type<tc>, window_params = [{transform_indices = @transform_0, window_bounds = array<i64: 1, 1, 18, 64>}, {transform_indices = @transform_1, window_bounds = array<i64: 1, 1, 18, 64>}, {transform_indices = @transform_2, window_bounds = array<i64: 1, 1, 18, 64>}, {pipeline_mode = #tpu.pipeline_mode<synchronous>, transform_indices = @transform_3, window_bounds = array<i64: 64, 16>}, {pipeline_mode = #tpu.pipeline_mode<synchronous>, transform_indices = @transform_4, window_bounds = array<i64: 1, 16>}, {pipeline_mode = #tpu.pipeline_mode<synchronous>, transform_indices = @transform_5, window_bounds = array<i64: 1, 16>}, {pipeline_mode = #tpu.pipeline_mode<synchronous>, transform_indices = @transform_6, window_bounds = array<i64: 9, 16>}, {pipeline_mode = #tpu.pipeline_mode<synchronous>, transform_indices = @transform_7, window_bounds = array<i64: 1, 16>}, {pipeline_mode = #tpu.pipeline_mode<synchronous>, transform_indices = @transform_8, window_bounds = array<i64: 1, 16>}, {pipeline_mode = #tpu.pipeline_mode<synchronous>, transform_indices = @transform_9, window_bounds = array<i64: 1, 32>}, {pipeline_mode = #tpu.pipeline_mode<synchronous>, transform_indices = @transform_10, window_bounds = array<i64: 1, 32>}, {transform_indices = @transform_11, window_bounds = array<i64: 1, 1, 16, 32>}]} {
    %c0 = arith.constant 0 : index
    %c0_0 = arith.constant 0 : index
    %0 = vector.load %arg5[%c0, %c0_0] : memref<64x16xbf16, #tpu.memory_space<vmem>>, vector<64x16xbf16>
    %c0_1 = arith.constant 0 : index
    %c0_2 = arith.constant 0 : index
    %1 = vector.load %arg6[%c0_1, %c0_2] : memref<1x16xf32, #tpu.memory_space<vmem>>, vector<1x16xf32>
    %c0_3 = arith.constant 0 : index
    %c0_4 = arith.constant 0 : index
    %2 = vector.load %arg7[%c0_3, %c0_4] : memref<1x16xf32, #tpu.memory_space<vmem>>, vector<1x16xf32>
    %3 = tpu.iota {dimensions = array<i32: 0>} : vector<18x1xi32>
    %c1_i32 = arith.constant 1 : i32
    %4 = vector.broadcast %c1_i32 : i32 to vector<18x1xi32>
    %5 = arith.cmpi sge, %3, %4 : vector<18x1xi32>
    %c16_i32 = arith.constant 16 : i32
    %6 = vector.broadcast %c16_i32 : i32 to vector<18x1xi32>
    %7 = arith.cmpi sle, %3, %6 : vector<18x1xi32>
    %8 = arith.andi %5, %7 : vector<18x1xi1>
    %c0_5 = arith.constant 0 : index
    %c0_6 = arith.constant 0 : index
    %c0_7 = arith.constant 0 : index
    %c0_8 = arith.constant 0 : index
    %9 = vector.load %arg2[%c0_5, %c0_6, %c0_7, %c0_8] : memref<1x1x18x64xbf16, #tpu.memory_space<vmem>>, vector<1x1x18x64xbf16>
    %10 = vector.shape_cast %9 : vector<1x1x18x64xbf16> to vector<18x64xbf16>
    %cst = arith.constant dense<0.000000e+00> : vector<18x16xf32>
    %11 = tpu.matmul %10, %0, %cst {dimension_numbers = #tpu.dot_dimension_numbers<[1], [0], [0], [1], [0, 0, 1, 1], [], []>} : vector<18x64xbf16>, vector<64x16xbf16>, vector<18x16xf32> -> vector<18x16xf32>
    %12 = vector.broadcast %1 : vector<1x16xf32> to vector<18x16xf32>
    %13 = arith.mulf %11, %12 : vector<18x16xf32>
    %14 = vector.broadcast %2 : vector<1x16xf32> to vector<18x16xf32>
    %15 = arith.addf %13, %14 : vector<18x16xf32>
    %cst_9 = arith.constant 0.000000e+00 : f32
    %16 = vector.broadcast %cst_9 : f32 to vector<18x16xf32>
    %17 = arith.maximumf %15, %16 : vector<18x16xf32>
    %c1_i32_10 = arith.constant 1 : i32
    %18 = arith.subi %arg1, %c1_i32_10 : i32
    %c0_i32 = arith.constant 0 : i32
    %19 = arith.addi %18, %c0_i32 : i32
    %c0_i32_11 = arith.constant 0 : i32
    %20 = arith.cmpi sge, %19, %c0_i32_11 : i32
    %c16_i32_12 = arith.constant 16 : i32
    %21 = arith.cmpi slt, %19, %c16_i32_12 : i32
    %22 = arith.andi %20, %21 : i1
    %cst_13 = arith.constant 0.000000e+00 : f32
    %23 = vector.shape_cast %8 : vector<18x1xi1> to vector<18x1xi1>
    %24 = vector.broadcast %23 : vector<18x1xi1> to vector<18x16xi1>
    %25 = vector.broadcast %cst_13 : f32 to vector<18x16xf32>
    %26 = arith.select %24, %17, %25 : vector<18x16xi1>, vector<18x16xf32>
    %cst_14 = arith.constant 1.000000e+00 : f32
    %cst_15 = arith.constant 0.000000e+00 : f32
    %27 = arith.select %22, %cst_14, %cst_15 : f32
    %28 = vector.broadcast %27 : f32 to vector<18x16xf32>
    %29 = arith.mulf %26, %28 : vector<18x16xf32>
    %c0_16 = arith.constant 0 : index
    %c0_17 = arith.constant 0 : index
    %c0_18 = arith.constant 0 : index
    %c0_19 = arith.constant 0 : index
    %30 = vector.load %arg3[%c0_16, %c0_17, %c0_18, %c0_19] : memref<1x1x18x64xbf16, #tpu.memory_space<vmem>>, vector<1x1x18x64xbf16>
    %31 = vector.shape_cast %30 : vector<1x1x18x64xbf16> to vector<18x64xbf16>
    %cst_20 = arith.constant dense<0.000000e+00> : vector<18x16xf32>
    %32 = tpu.matmul %31, %0, %cst_20 {dimension_numbers = #tpu.dot_dimension_numbers<[1], [0], [0], [1], [0, 0, 1, 1], [], []>} : vector<18x64xbf16>, vector<64x16xbf16>, vector<18x16xf32> -> vector<18x16xf32>
    %33 = vector.broadcast %1 : vector<1x16xf32> to vector<18x16xf32>
    %34 = arith.mulf %32, %33 : vector<18x16xf32>
    %35 = vector.broadcast %2 : vector<1x16xf32> to vector<18x16xf32>
    %36 = arith.addf %34, %35 : vector<18x16xf32>
    %cst_21 = arith.constant 0.000000e+00 : f32
    %37 = vector.broadcast %cst_21 : f32 to vector<18x16xf32>
    %38 = arith.maximumf %36, %37 : vector<18x16xf32>
    %c1_i32_22 = arith.constant 1 : i32
    %39 = arith.subi %arg1, %c1_i32_22 : i32
    %c1_i32_23 = arith.constant 1 : i32
    %40 = arith.addi %39, %c1_i32_23 : i32
    %c0_i32_24 = arith.constant 0 : i32
    %41 = arith.cmpi sge, %40, %c0_i32_24 : i32
    %c16_i32_25 = arith.constant 16 : i32
    %42 = arith.cmpi slt, %40, %c16_i32_25 : i32
    %43 = arith.andi %41, %42 : i1
    %cst_26 = arith.constant 0.000000e+00 : f32
    %44 = vector.shape_cast %8 : vector<18x1xi1> to vector<18x1xi1>
    %45 = vector.broadcast %44 : vector<18x1xi1> to vector<18x16xi1>
    %46 = vector.broadcast %cst_26 : f32 to vector<18x16xf32>
    %47 = arith.select %45, %38, %46 : vector<18x16xi1>, vector<18x16xf32>
    %cst_27 = arith.constant 1.000000e+00 : f32
    %cst_28 = arith.constant 0.000000e+00 : f32
    %48 = arith.select %43, %cst_27, %cst_28 : f32
    %49 = vector.broadcast %48 : f32 to vector<18x16xf32>
    %50 = arith.mulf %47, %49 : vector<18x16xf32>
    %c0_29 = arith.constant 0 : index
    %c0_30 = arith.constant 0 : index
    %c0_31 = arith.constant 0 : index
    %c0_32 = arith.constant 0 : index
    %51 = vector.load %arg4[%c0_29, %c0_30, %c0_31, %c0_32] : memref<1x1x18x64xbf16, #tpu.memory_space<vmem>>, vector<1x1x18x64xbf16>
    %52 = vector.shape_cast %51 : vector<1x1x18x64xbf16> to vector<18x64xbf16>
    %cst_33 = arith.constant dense<0.000000e+00> : vector<18x16xf32>
    %53 = tpu.matmul %52, %0, %cst_33 {dimension_numbers = #tpu.dot_dimension_numbers<[1], [0], [0], [1], [0, 0, 1, 1], [], []>} : vector<18x64xbf16>, vector<64x16xbf16>, vector<18x16xf32> -> vector<18x16xf32>
    %54 = vector.broadcast %1 : vector<1x16xf32> to vector<18x16xf32>
    %55 = arith.mulf %53, %54 : vector<18x16xf32>
    %56 = vector.broadcast %2 : vector<1x16xf32> to vector<18x16xf32>
    %57 = arith.addf %55, %56 : vector<18x16xf32>
    %cst_34 = arith.constant 0.000000e+00 : f32
    %58 = vector.broadcast %cst_34 : f32 to vector<18x16xf32>
    %59 = arith.maximumf %57, %58 : vector<18x16xf32>
    %c1_i32_35 = arith.constant 1 : i32
    %60 = arith.subi %arg1, %c1_i32_35 : i32
    %c2_i32 = arith.constant 2 : i32
    %61 = arith.addi %60, %c2_i32 : i32
    %c0_i32_36 = arith.constant 0 : i32
    %62 = arith.cmpi sge, %61, %c0_i32_36 : i32
    %c16_i32_37 = arith.constant 16 : i32
    %63 = arith.cmpi slt, %61, %c16_i32_37 : i32
    %64 = arith.andi %62, %63 : i1
    %cst_38 = arith.constant 0.000000e+00 : f32
    %65 = vector.shape_cast %8 : vector<18x1xi1> to vector<18x1xi1>
    %66 = vector.broadcast %65 : vector<18x1xi1> to vector<18x16xi1>
    %67 = vector.broadcast %cst_38 : f32 to vector<18x16xf32>
    %68 = arith.select %66, %59, %67 : vector<18x16xi1>, vector<18x16xf32>
    %cst_39 = arith.constant 1.000000e+00 : f32
    %cst_40 = arith.constant 0.000000e+00 : f32
    %69 = arith.select %64, %cst_39, %cst_40 : f32
    %70 = vector.broadcast %69 : f32 to vector<18x16xf32>
    %71 = arith.mulf %68, %70 : vector<18x16xf32>
    %c0_41 = arith.constant 0 : index
    %c0_42 = arith.constant 0 : index
    %72 = vector.load %arg8[%c0_41, %c0_42] : memref<9x16xf32, #tpu.memory_space<vmem>>, vector<9x16xf32>
    %cst_43 = arith.constant 0.000000e+00 : f32
    %73 = vector.broadcast %cst_43 : f32 to vector<16x16xf32>
    %74 = vector.extract_strided_slice %29 {offsets = [0, 0], sizes = [16, 16], strides = [1, 1]} : vector<18x16xf32> to vector<16x16xf32>
    %75 = vector.extract_strided_slice %72 {offsets = [0, 0], sizes = [1, 16], strides = [1, 1]} : vector<9x16xf32> to vector<1x16xf32>
    %76 = vector.broadcast %75 : vector<1x16xf32> to vector<16x16xf32>
    %77 = arith.mulf %74, %76 : vector<16x16xf32>
    %78 = arith.addf %73, %77 : vector<16x16xf32>
    %79 = vector.extract_strided_slice %29 {offsets = [1, 0], sizes = [16, 16], strides = [1, 1]} : vector<18x16xf32> to vector<16x16xf32>
    %80 = vector.extract_strided_slice %72 {offsets = [1, 0], sizes = [1, 16], strides = [1, 1]} : vector<9x16xf32> to vector<1x16xf32>
    %81 = vector.broadcast %80 : vector<1x16xf32> to vector<16x16xf32>
    %82 = arith.mulf %79, %81 : vector<16x16xf32>
    %83 = arith.addf %78, %82 : vector<16x16xf32>
    %84 = vector.extract_strided_slice %29 {offsets = [2, 0], sizes = [16, 16], strides = [1, 1]} : vector<18x16xf32> to vector<16x16xf32>
    %85 = vector.extract_strided_slice %72 {offsets = [2, 0], sizes = [1, 16], strides = [1, 1]} : vector<9x16xf32> to vector<1x16xf32>
    %86 = vector.broadcast %85 : vector<1x16xf32> to vector<16x16xf32>
    %87 = arith.mulf %84, %86 : vector<16x16xf32>
    %88 = arith.addf %83, %87 : vector<16x16xf32>
    %89 = vector.extract_strided_slice %50 {offsets = [0, 0], sizes = [16, 16], strides = [1, 1]} : vector<18x16xf32> to vector<16x16xf32>
    %90 = vector.extract_strided_slice %72 {offsets = [3, 0], sizes = [1, 16], strides = [1, 1]} : vector<9x16xf32> to vector<1x16xf32>
    %91 = vector.broadcast %90 : vector<1x16xf32> to vector<16x16xf32>
    %92 = arith.mulf %89, %91 : vector<16x16xf32>
    %93 = arith.addf %88, %92 : vector<16x16xf32>
    %94 = vector.extract_strided_slice %50 {offsets = [1, 0], sizes = [16, 16], strides = [1, 1]} : vector<18x16xf32> to vector<16x16xf32>
    %95 = vector.extract_strided_slice %72 {offsets = [4, 0], sizes = [1, 16], strides = [1, 1]} : vector<9x16xf32> to vector<1x16xf32>
    %96 = vector.broadcast %95 : vector<1x16xf32> to vector<16x16xf32>
    %97 = arith.mulf %94, %96 : vector<16x16xf32>
    %98 = arith.addf %93, %97 : vector<16x16xf32>
    %99 = vector.extract_strided_slice %50 {offsets = [2, 0], sizes = [16, 16], strides = [1, 1]} : vector<18x16xf32> to vector<16x16xf32>
    %100 = vector.extract_strided_slice %72 {offsets = [5, 0], sizes = [1, 16], strides = [1, 1]} : vector<9x16xf32> to vector<1x16xf32>
    %101 = vector.broadcast %100 : vector<1x16xf32> to vector<16x16xf32>
    %102 = arith.mulf %99, %101 : vector<16x16xf32>
    %103 = arith.addf %98, %102 : vector<16x16xf32>
    %104 = vector.extract_strided_slice %71 {offsets = [0, 0], sizes = [16, 16], strides = [1, 1]} : vector<18x16xf32> to vector<16x16xf32>
    %105 = vector.extract_strided_slice %72 {offsets = [6, 0], sizes = [1, 16], strides = [1, 1]} : vector<9x16xf32> to vector<1x16xf32>
    %106 = vector.broadcast %105 : vector<1x16xf32> to vector<16x16xf32>
    %107 = arith.mulf %104, %106 : vector<16x16xf32>
    %108 = arith.addf %103, %107 : vector<16x16xf32>
    %109 = vector.extract_strided_slice %71 {offsets = [1, 0], sizes = [16, 16], strides = [1, 1]} : vector<18x16xf32> to vector<16x16xf32>
    %110 = vector.extract_strided_slice %72 {offsets = [7, 0], sizes = [1, 16], strides = [1, 1]} : vector<9x16xf32> to vector<1x16xf32>
    %111 = vector.broadcast %110 : vector<1x16xf32> to vector<16x16xf32>
    %112 = arith.mulf %109, %111 : vector<16x16xf32>
    %113 = arith.addf %108, %112 : vector<16x16xf32>
    %114 = vector.extract_strided_slice %71 {offsets = [2, 0], sizes = [16, 16], strides = [1, 1]} : vector<18x16xf32> to vector<16x16xf32>
    %115 = vector.extract_strided_slice %72 {offsets = [8, 0], sizes = [1, 16], strides = [1, 1]} : vector<9x16xf32> to vector<1x16xf32>
    %116 = vector.broadcast %115 : vector<1x16xf32> to vector<16x16xf32>
    %117 = arith.mulf %114, %116 : vector<16x16xf32>
    %118 = arith.addf %113, %117 : vector<16x16xf32>
    %c0_44 = arith.constant 0 : index
    %c0_45 = arith.constant 0 : index
    %119 = vector.load %arg9[%c0_44, %c0_45] : memref<1x16xf32, #tpu.memory_space<vmem>>, vector<1x16xf32>
    %120 = vector.broadcast %119 : vector<1x16xf32> to vector<16x16xf32>
    %121 = arith.mulf %118, %120 : vector<16x16xf32>
    %c0_46 = arith.constant 0 : index
    %c0_47 = arith.constant 0 : index
    %122 = vector.load %arg10[%c0_46, %c0_47] : memref<1x16xf32, #tpu.memory_space<vmem>>, vector<1x16xf32>
    %123 = vector.broadcast %122 : vector<1x16xf32> to vector<16x16xf32>
    %124 = arith.addf %121, %123 : vector<16x16xf32>
    %cst_48 = arith.constant 0.000000e+00 : f32
    %125 = vector.broadcast %cst_48 : f32 to vector<16x16xf32>
    %126 = arith.maximumf %124, %125 : vector<16x16xf32>
    %127 = vector.extract_strided_slice %50 {offsets = [1, 0], sizes = [16, 16], strides = [1, 1]} : vector<18x16xf32> to vector<16x16xf32>
    %128 = tpu.concatenate %127, %126 in 1 : vector<16x16xf32>, vector<16x16xf32> -> vector<16x32xf32>
    %c0_49 = arith.constant 0 : index
    %c0_50 = arith.constant 0 : index
    %129 = vector.load %arg11[%c0_49, %c0_50] : memref<1x32xf32, #tpu.memory_space<vmem>>, vector<1x32xf32>
    %130 = vector.broadcast %129 : vector<1x32xf32> to vector<16x32xf32>
    %131 = arith.mulf %128, %130 : vector<16x32xf32>
    %c0_51 = arith.constant 0 : index
    %c0_52 = arith.constant 0 : index
    %132 = vector.load %arg12[%c0_51, %c0_52] : memref<1x32xf32, #tpu.memory_space<vmem>>, vector<1x32xf32>
    %133 = vector.broadcast %132 : vector<1x32xf32> to vector<16x32xf32>
    %134 = arith.addf %131, %133 : vector<16x32xf32>
    %cst_53 = arith.constant 0.000000e+00 : f32
    %cst_54 = arith.constant 6.000000e+00 : f32
    %135 = vector.broadcast %cst_53 : f32 to vector<16x32xf32>
    %136 = arith.maximumf %135, %134 : vector<16x32xf32>
    %137 = vector.broadcast %cst_54 : f32 to vector<16x32xf32>
    %138 = arith.minimumf %137, %136 : vector<16x32xf32>
    %139 = vector.shape_cast %138 : vector<16x32xf32> to vector<1x1x16x32xf32>
    %140 = arith.truncf %139 : vector<1x1x16x32xf32> to vector<1x1x16x32xbf16>
    %c0_55 = arith.constant 0 : index
    %c0_56 = arith.constant 0 : index
    %c0_57 = arith.constant 0 : index
    %c0_58 = arith.constant 0 : index
    %141 = vector.load %arg13[%c0_55, %c0_56, %c0_57, %c0_58] : memref<1x1x16x32xbf16, #tpu.memory_space<vmem>>, vector<1x1x16x32xbf16>
    tpu.vector_store %arg13[%c0_55, %c0_56, %c0_57, %c0_58], %140 {strides = array<i32>} : memref<1x1x16x32xbf16, #tpu.memory_space<vmem>>, vector<1x1x16x32xbf16>,
    return
  }
  func.func @transform_0(%arg0: i32, %arg1: i32) -> (i32, i32, i32, i32) {
    %c0_i32 = arith.constant 0 : i32
    %0 = arith.addi %arg1, %c0_i32 : i32
    %c0_i32_0 = arith.constant 0 : i32
    %c0_i32_1 = arith.constant 0 : i32
    %c0_i32_2 = arith.constant 0 : i32
    return %arg0, %0, %c0_i32_0, %c0_i32_1 : i32, i32, i32, i32
  }
  func.func @transform_1(%arg0: i32, %arg1: i32) -> (i32, i32, i32, i32) {
    %c1_i32 = arith.constant 1 : i32
    %0 = arith.addi %arg1, %c1_i32 : i32
    %c0_i32 = arith.constant 0 : i32
    %c0_i32_0 = arith.constant 0 : i32
    %c0_i32_1 = arith.constant 0 : i32
    return %arg0, %0, %c0_i32, %c0_i32_0 : i32, i32, i32, i32
  }
  func.func @transform_2(%arg0: i32, %arg1: i32) -> (i32, i32, i32, i32) {
    %c2_i32 = arith.constant 2 : i32
    %0 = arith.addi %arg1, %c2_i32 : i32
    %c0_i32 = arith.constant 0 : i32
    %c0_i32_0 = arith.constant 0 : i32
    %c0_i32_1 = arith.constant 0 : i32
    return %arg0, %0, %c0_i32, %c0_i32_0 : i32, i32, i32, i32
  }
  func.func @transform_3(%arg0: i32, %arg1: i32) -> (i32, i32) {
    %c0_i32 = arith.constant 0 : i32
    %c0_i32_0 = arith.constant 0 : i32
    %c0_i32_1 = arith.constant 0 : i32
    return %c0_i32, %c0_i32_0 : i32, i32
  }
  func.func @transform_4(%arg0: i32, %arg1: i32) -> (i32, i32) {
    %c0_i32 = arith.constant 0 : i32
    %c0_i32_0 = arith.constant 0 : i32
    %c0_i32_1 = arith.constant 0 : i32
    return %c0_i32, %c0_i32_0 : i32, i32
  }
  func.func @transform_5(%arg0: i32, %arg1: i32) -> (i32, i32) {
    %c0_i32 = arith.constant 0 : i32
    %c0_i32_0 = arith.constant 0 : i32
    %c0_i32_1 = arith.constant 0 : i32
    return %c0_i32, %c0_i32_0 : i32, i32
  }
  func.func @transform_6(%arg0: i32, %arg1: i32) -> (i32, i32) {
    %c0_i32 = arith.constant 0 : i32
    %c0_i32_0 = arith.constant 0 : i32
    %c0_i32_1 = arith.constant 0 : i32
    return %c0_i32, %c0_i32_0 : i32, i32
  }
  func.func @transform_7(%arg0: i32, %arg1: i32) -> (i32, i32) {
    %c0_i32 = arith.constant 0 : i32
    %c0_i32_0 = arith.constant 0 : i32
    %c0_i32_1 = arith.constant 0 : i32
    return %c0_i32, %c0_i32_0 : i32, i32
  }
  func.func @transform_8(%arg0: i32, %arg1: i32) -> (i32, i32) {
    %c0_i32 = arith.constant 0 : i32
    %c0_i32_0 = arith.constant 0 : i32
    %c0_i32_1 = arith.constant 0 : i32
    return %c0_i32, %c0_i32_0 : i32, i32
  }
  func.func @transform_9(%arg0: i32, %arg1: i32) -> (i32, i32) {
    %c0_i32 = arith.constant 0 : i32
    %c0_i32_0 = arith.constant 0 : i32
    %c0_i32_1 = arith.constant 0 : i32
    return %c0_i32, %c0_i32_0 : i32, i32
  }
  func.func @transform_10(%arg0: i32, %arg1: i32) -> (i32, i32) {
    %c0_i32 = arith.constant 0 : i32
    %c0_i32_0 = arith.constant 0 : i32
    %c0_i32_1 = arith.constant 0 : i32
    return %c0_i32, %c0_i32_0 : i32, i32
  }
  func.func @transform_11(%arg0: i32, %arg1: i32) -> (i32, i32, i32, i32) {
    %c0_i32 = arith.constant 0 : i32
    %c0_i32_0 = arith.constant 0 : i32
    %c0_i32_1 = arith.constant 0 : i32
    return %arg0, %arg1, %c0_i32, %c0_i32_0 : i32, i32, i32, i32
  }
}

module attributes {stable_mosaic.version = 11 : i64} {
  func.func @kernel(%arg0: i32, %arg1: i32, %arg2: memref<1x1x18x32xbf16, #tpu.memory_space<vmem>>, %arg3: memref<1x1x18x32xbf16, #tpu.memory_space<vmem>>, %arg4: memref<1x1x18x32xbf16, #tpu.memory_space<vmem>>, %arg5: memref<32x32xbf16, #tpu.memory_space<vmem>>, %arg6: memref<1x32xf32, #tpu.memory_space<vmem>>, %arg7: memref<1x32xf32, #tpu.memory_space<vmem>>, %arg8: memref<9x32xf32, #tpu.memory_space<vmem>>, %arg9: memref<1x32xf32, #tpu.memory_space<vmem>>, %arg10: memref<1x32xf32, #tpu.memory_space<vmem>>, %arg11: memref<1x64xf32, #tpu.memory_space<vmem>>, %arg12: memref<1x64xf32, #tpu.memory_space<vmem>>, %arg13: memref<1x1x16x64xf32, #tpu.memory_space<vmem>>, %arg14: memref<1x1x16x64xf32, #tpu.memory_space<vmem>>) attributes {dimension_semantics = [#tpu.dimension_semantics<parallel>, #tpu.dimension_semantics<parallel>], iteration_bounds = array<i64: 2, 16>, scalar_prefetch = 0 : i64, scratch_operands = 0 : i64, tpu.core_type = #tpu.core_type<tc>, window_params = [{transform_indices = @transform_0, window_bounds = array<i64: 1, 1, 18, 32>}, {transform_indices = @transform_1, window_bounds = array<i64: 1, 1, 18, 32>}, {transform_indices = @transform_2, window_bounds = array<i64: 1, 1, 18, 32>}, {pipeline_mode = #tpu.pipeline_mode<synchronous>, transform_indices = @transform_3, window_bounds = array<i64: 32, 32>}, {pipeline_mode = #tpu.pipeline_mode<synchronous>, transform_indices = @transform_4, window_bounds = array<i64: 1, 32>}, {pipeline_mode = #tpu.pipeline_mode<synchronous>, transform_indices = @transform_5, window_bounds = array<i64: 1, 32>}, {pipeline_mode = #tpu.pipeline_mode<synchronous>, transform_indices = @transform_6, window_bounds = array<i64: 9, 32>}, {pipeline_mode = #tpu.pipeline_mode<synchronous>, transform_indices = @transform_7, window_bounds = array<i64: 1, 32>}, {pipeline_mode = #tpu.pipeline_mode<synchronous>, transform_indices = @transform_8, window_bounds = array<i64: 1, 32>}, {pipeline_mode = #tpu.pipeline_mode<synchronous>, transform_indices = @transform_9, window_bounds = array<i64: 1, 64>}, {pipeline_mode = #tpu.pipeline_mode<synchronous>, transform_indices = @transform_10, window_bounds = array<i64: 1, 64>}, {transform_indices = @transform_11, window_bounds = array<i64: 1, 1, 16, 64>}, {transform_indices = @transform_12, window_bounds = array<i64: 1, 1, 16, 64>}]} {
    %c0 = arith.constant 0 : index
    %c0_0 = arith.constant 0 : index
    %0 = vector.load %arg5[%c0, %c0_0] : memref<32x32xbf16, #tpu.memory_space<vmem>>, vector<32x32xbf16>
    %c0_1 = arith.constant 0 : index
    %c0_2 = arith.constant 0 : index
    %1 = vector.load %arg6[%c0_1, %c0_2] : memref<1x32xf32, #tpu.memory_space<vmem>>, vector<1x32xf32>
    %c0_3 = arith.constant 0 : index
    %c0_4 = arith.constant 0 : index
    %2 = vector.load %arg7[%c0_3, %c0_4] : memref<1x32xf32, #tpu.memory_space<vmem>>, vector<1x32xf32>
    %3 = tpu.iota {dimensions = array<i32: 0>} : vector<18x1xi32>
    %c1_i32 = arith.constant 1 : i32
    %4 = vector.broadcast %c1_i32 : i32 to vector<18x1xi32>
    %5 = arith.cmpi sge, %3, %4 : vector<18x1xi32>
    %c16_i32 = arith.constant 16 : i32
    %6 = vector.broadcast %c16_i32 : i32 to vector<18x1xi32>
    %7 = arith.cmpi sle, %3, %6 : vector<18x1xi32>
    %8 = arith.andi %5, %7 : vector<18x1xi1>
    %c0_5 = arith.constant 0 : index
    %c0_6 = arith.constant 0 : index
    %c0_7 = arith.constant 0 : index
    %c0_8 = arith.constant 0 : index
    %9 = vector.load %arg2[%c0_5, %c0_6, %c0_7, %c0_8] : memref<1x1x18x32xbf16, #tpu.memory_space<vmem>>, vector<1x1x18x32xbf16>
    %10 = vector.shape_cast %9 : vector<1x1x18x32xbf16> to vector<18x32xbf16>
    %cst = arith.constant dense<0.000000e+00> : vector<18x32xf32>
    %11 = tpu.matmul %10, %0, %cst {dimension_numbers = #tpu.dot_dimension_numbers<[1], [0], [0], [1], [0, 0, 1, 1], [], []>} : vector<18x32xbf16>, vector<32x32xbf16>, vector<18x32xf32> -> vector<18x32xf32>
    %12 = vector.broadcast %1 : vector<1x32xf32> to vector<18x32xf32>
    %13 = arith.mulf %11, %12 : vector<18x32xf32>
    %14 = vector.broadcast %2 : vector<1x32xf32> to vector<18x32xf32>
    %15 = arith.addf %13, %14 : vector<18x32xf32>
    %cst_9 = arith.constant 0.000000e+00 : f32
    %16 = vector.broadcast %cst_9 : f32 to vector<18x32xf32>
    %17 = arith.maximumf %15, %16 : vector<18x32xf32>
    %c1_i32_10 = arith.constant 1 : i32
    %18 = arith.subi %arg1, %c1_i32_10 : i32
    %c0_i32 = arith.constant 0 : i32
    %19 = arith.addi %18, %c0_i32 : i32
    %c0_i32_11 = arith.constant 0 : i32
    %20 = arith.cmpi sge, %19, %c0_i32_11 : i32
    %c16_i32_12 = arith.constant 16 : i32
    %21 = arith.cmpi slt, %19, %c16_i32_12 : i32
    %22 = arith.andi %20, %21 : i1
    %cst_13 = arith.constant 0.000000e+00 : f32
    %23 = vector.shape_cast %8 : vector<18x1xi1> to vector<18x1xi1>
    %24 = vector.broadcast %23 : vector<18x1xi1> to vector<18x32xi1>
    %25 = vector.broadcast %cst_13 : f32 to vector<18x32xf32>
    %26 = arith.select %24, %17, %25 : vector<18x32xi1>, vector<18x32xf32>
    %cst_14 = arith.constant 1.000000e+00 : f32
    %cst_15 = arith.constant 0.000000e+00 : f32
    %27 = arith.select %22, %cst_14, %cst_15 : f32
    %28 = vector.broadcast %27 : f32 to vector<18x32xf32>
    %29 = arith.mulf %26, %28 : vector<18x32xf32>
    %c0_16 = arith.constant 0 : index
    %c0_17 = arith.constant 0 : index
    %c0_18 = arith.constant 0 : index
    %c0_19 = arith.constant 0 : index
    %30 = vector.load %arg3[%c0_16, %c0_17, %c0_18, %c0_19] : memref<1x1x18x32xbf16, #tpu.memory_space<vmem>>, vector<1x1x18x32xbf16>
    %31 = vector.shape_cast %30 : vector<1x1x18x32xbf16> to vector<18x32xbf16>
    %cst_20 = arith.constant dense<0.000000e+00> : vector<18x32xf32>
    %32 = tpu.matmul %31, %0, %cst_20 {dimension_numbers = #tpu.dot_dimension_numbers<[1], [0], [0], [1], [0, 0, 1, 1], [], []>} : vector<18x32xbf16>, vector<32x32xbf16>, vector<18x32xf32> -> vector<18x32xf32>
    %33 = vector.broadcast %1 : vector<1x32xf32> to vector<18x32xf32>
    %34 = arith.mulf %32, %33 : vector<18x32xf32>
    %35 = vector.broadcast %2 : vector<1x32xf32> to vector<18x32xf32>
    %36 = arith.addf %34, %35 : vector<18x32xf32>
    %cst_21 = arith.constant 0.000000e+00 : f32
    %37 = vector.broadcast %cst_21 : f32 to vector<18x32xf32>
    %38 = arith.maximumf %36, %37 : vector<18x32xf32>
    %c1_i32_22 = arith.constant 1 : i32
    %39 = arith.subi %arg1, %c1_i32_22 : i32
    %c1_i32_23 = arith.constant 1 : i32
    %40 = arith.addi %39, %c1_i32_23 : i32
    %c0_i32_24 = arith.constant 0 : i32
    %41 = arith.cmpi sge, %40, %c0_i32_24 : i32
    %c16_i32_25 = arith.constant 16 : i32
    %42 = arith.cmpi slt, %40, %c16_i32_25 : i32
    %43 = arith.andi %41, %42 : i1
    %cst_26 = arith.constant 0.000000e+00 : f32
    %44 = vector.shape_cast %8 : vector<18x1xi1> to vector<18x1xi1>
    %45 = vector.broadcast %44 : vector<18x1xi1> to vector<18x32xi1>
    %46 = vector.broadcast %cst_26 : f32 to vector<18x32xf32>
    %47 = arith.select %45, %38, %46 : vector<18x32xi1>, vector<18x32xf32>
    %cst_27 = arith.constant 1.000000e+00 : f32
    %cst_28 = arith.constant 0.000000e+00 : f32
    %48 = arith.select %43, %cst_27, %cst_28 : f32
    %49 = vector.broadcast %48 : f32 to vector<18x32xf32>
    %50 = arith.mulf %47, %49 : vector<18x32xf32>
    %c0_29 = arith.constant 0 : index
    %c0_30 = arith.constant 0 : index
    %c0_31 = arith.constant 0 : index
    %c0_32 = arith.constant 0 : index
    %51 = vector.load %arg4[%c0_29, %c0_30, %c0_31, %c0_32] : memref<1x1x18x32xbf16, #tpu.memory_space<vmem>>, vector<1x1x18x32xbf16>
    %52 = vector.shape_cast %51 : vector<1x1x18x32xbf16> to vector<18x32xbf16>
    %cst_33 = arith.constant dense<0.000000e+00> : vector<18x32xf32>
    %53 = tpu.matmul %52, %0, %cst_33 {dimension_numbers = #tpu.dot_dimension_numbers<[1], [0], [0], [1], [0, 0, 1, 1], [], []>} : vector<18x32xbf16>, vector<32x32xbf16>, vector<18x32xf32> -> vector<18x32xf32>
    %54 = vector.broadcast %1 : vector<1x32xf32> to vector<18x32xf32>
    %55 = arith.mulf %53, %54 : vector<18x32xf32>
    %56 = vector.broadcast %2 : vector<1x32xf32> to vector<18x32xf32>
    %57 = arith.addf %55, %56 : vector<18x32xf32>
    %cst_34 = arith.constant 0.000000e+00 : f32
    %58 = vector.broadcast %cst_34 : f32 to vector<18x32xf32>
    %59 = arith.maximumf %57, %58 : vector<18x32xf32>
    %c1_i32_35 = arith.constant 1 : i32
    %60 = arith.subi %arg1, %c1_i32_35 : i32
    %c2_i32 = arith.constant 2 : i32
    %61 = arith.addi %60, %c2_i32 : i32
    %c0_i32_36 = arith.constant 0 : i32
    %62 = arith.cmpi sge, %61, %c0_i32_36 : i32
    %c16_i32_37 = arith.constant 16 : i32
    %63 = arith.cmpi slt, %61, %c16_i32_37 : i32
    %64 = arith.andi %62, %63 : i1
    %cst_38 = arith.constant 0.000000e+00 : f32
    %65 = vector.shape_cast %8 : vector<18x1xi1> to vector<18x1xi1>
    %66 = vector.broadcast %65 : vector<18x1xi1> to vector<18x32xi1>
    %67 = vector.broadcast %cst_38 : f32 to vector<18x32xf32>
    %68 = arith.select %66, %59, %67 : vector<18x32xi1>, vector<18x32xf32>
    %cst_39 = arith.constant 1.000000e+00 : f32
    %cst_40 = arith.constant 0.000000e+00 : f32
    %69 = arith.select %64, %cst_39, %cst_40 : f32
    %70 = vector.broadcast %69 : f32 to vector<18x32xf32>
    %71 = arith.mulf %68, %70 : vector<18x32xf32>
    %c0_41 = arith.constant 0 : index
    %c0_42 = arith.constant 0 : index
    %72 = vector.load %arg8[%c0_41, %c0_42] : memref<9x32xf32, #tpu.memory_space<vmem>>, vector<9x32xf32>
    %cst_43 = arith.constant 0.000000e+00 : f32
    %73 = vector.broadcast %cst_43 : f32 to vector<16x32xf32>
    %74 = vector.extract_strided_slice %29 {offsets = [0, 0], sizes = [16, 32], strides = [1, 1]} : vector<18x32xf32> to vector<16x32xf32>
    %75 = vector.extract_strided_slice %72 {offsets = [0, 0], sizes = [1, 32], strides = [1, 1]} : vector<9x32xf32> to vector<1x32xf32>
    %76 = vector.broadcast %75 : vector<1x32xf32> to vector<16x32xf32>
    %77 = arith.mulf %74, %76 : vector<16x32xf32>
    %78 = arith.addf %73, %77 : vector<16x32xf32>
    %79 = vector.extract_strided_slice %29 {offsets = [1, 0], sizes = [16, 32], strides = [1, 1]} : vector<18x32xf32> to vector<16x32xf32>
    %80 = vector.extract_strided_slice %72 {offsets = [1, 0], sizes = [1, 32], strides = [1, 1]} : vector<9x32xf32> to vector<1x32xf32>
    %81 = vector.broadcast %80 : vector<1x32xf32> to vector<16x32xf32>
    %82 = arith.mulf %79, %81 : vector<16x32xf32>
    %83 = arith.addf %78, %82 : vector<16x32xf32>
    %84 = vector.extract_strided_slice %29 {offsets = [2, 0], sizes = [16, 32], strides = [1, 1]} : vector<18x32xf32> to vector<16x32xf32>
    %85 = vector.extract_strided_slice %72 {offsets = [2, 0], sizes = [1, 32], strides = [1, 1]} : vector<9x32xf32> to vector<1x32xf32>
    %86 = vector.broadcast %85 : vector<1x32xf32> to vector<16x32xf32>
    %87 = arith.mulf %84, %86 : vector<16x32xf32>
    %88 = arith.addf %83, %87 : vector<16x32xf32>
    %89 = vector.extract_strided_slice %50 {offsets = [0, 0], sizes = [16, 32], strides = [1, 1]} : vector<18x32xf32> to vector<16x32xf32>
    %90 = vector.extract_strided_slice %72 {offsets = [3, 0], sizes = [1, 32], strides = [1, 1]} : vector<9x32xf32> to vector<1x32xf32>
    %91 = vector.broadcast %90 : vector<1x32xf32> to vector<16x32xf32>
    %92 = arith.mulf %89, %91 : vector<16x32xf32>
    %93 = arith.addf %88, %92 : vector<16x32xf32>
    %94 = vector.extract_strided_slice %50 {offsets = [1, 0], sizes = [16, 32], strides = [1, 1]} : vector<18x32xf32> to vector<16x32xf32>
    %95 = vector.extract_strided_slice %72 {offsets = [4, 0], sizes = [1, 32], strides = [1, 1]} : vector<9x32xf32> to vector<1x32xf32>
    %96 = vector.broadcast %95 : vector<1x32xf32> to vector<16x32xf32>
    %97 = arith.mulf %94, %96 : vector<16x32xf32>
    %98 = arith.addf %93, %97 : vector<16x32xf32>
    %99 = vector.extract_strided_slice %50 {offsets = [2, 0], sizes = [16, 32], strides = [1, 1]} : vector<18x32xf32> to vector<16x32xf32>
    %100 = vector.extract_strided_slice %72 {offsets = [5, 0], sizes = [1, 32], strides = [1, 1]} : vector<9x32xf32> to vector<1x32xf32>
    %101 = vector.broadcast %100 : vector<1x32xf32> to vector<16x32xf32>
    %102 = arith.mulf %99, %101 : vector<16x32xf32>
    %103 = arith.addf %98, %102 : vector<16x32xf32>
    %104 = vector.extract_strided_slice %71 {offsets = [0, 0], sizes = [16, 32], strides = [1, 1]} : vector<18x32xf32> to vector<16x32xf32>
    %105 = vector.extract_strided_slice %72 {offsets = [6, 0], sizes = [1, 32], strides = [1, 1]} : vector<9x32xf32> to vector<1x32xf32>
    %106 = vector.broadcast %105 : vector<1x32xf32> to vector<16x32xf32>
    %107 = arith.mulf %104, %106 : vector<16x32xf32>
    %108 = arith.addf %103, %107 : vector<16x32xf32>
    %109 = vector.extract_strided_slice %71 {offsets = [1, 0], sizes = [16, 32], strides = [1, 1]} : vector<18x32xf32> to vector<16x32xf32>
    %110 = vector.extract_strided_slice %72 {offsets = [7, 0], sizes = [1, 32], strides = [1, 1]} : vector<9x32xf32> to vector<1x32xf32>
    %111 = vector.broadcast %110 : vector<1x32xf32> to vector<16x32xf32>
    %112 = arith.mulf %109, %111 : vector<16x32xf32>
    %113 = arith.addf %108, %112 : vector<16x32xf32>
    %114 = vector.extract_strided_slice %71 {offsets = [2, 0], sizes = [16, 32], strides = [1, 1]} : vector<18x32xf32> to vector<16x32xf32>
    %115 = vector.extract_strided_slice %72 {offsets = [8, 0], sizes = [1, 32], strides = [1, 1]} : vector<9x32xf32> to vector<1x32xf32>
    %116 = vector.broadcast %115 : vector<1x32xf32> to vector<16x32xf32>
    %117 = arith.mulf %114, %116 : vector<16x32xf32>
    %118 = arith.addf %113, %117 : vector<16x32xf32>
    %c0_44 = arith.constant 0 : index
    %c0_45 = arith.constant 0 : index
    %119 = vector.load %arg9[%c0_44, %c0_45] : memref<1x32xf32, #tpu.memory_space<vmem>>, vector<1x32xf32>
    %120 = vector.broadcast %119 : vector<1x32xf32> to vector<16x32xf32>
    %121 = arith.mulf %118, %120 : vector<16x32xf32>
    %c0_46 = arith.constant 0 : index
    %c0_47 = arith.constant 0 : index
    %122 = vector.load %arg10[%c0_46, %c0_47] : memref<1x32xf32, #tpu.memory_space<vmem>>, vector<1x32xf32>
    %123 = vector.broadcast %122 : vector<1x32xf32> to vector<16x32xf32>
    %124 = arith.addf %121, %123 : vector<16x32xf32>
    %cst_48 = arith.constant 0.000000e+00 : f32
    %125 = vector.broadcast %cst_48 : f32 to vector<16x32xf32>
    %126 = arith.maximumf %124, %125 : vector<16x32xf32>
    %127 = vector.extract_strided_slice %50 {offsets = [1, 0], sizes = [16, 32], strides = [1, 1]} : vector<18x32xf32> to vector<16x32xf32>
    %128 = tpu.concatenate %127, %126 in 1 : vector<16x32xf32>, vector<16x32xf32> -> vector<16x64xf32>
    %c0_49 = arith.constant 0 : index
    %c0_50 = arith.constant 0 : index
    %129 = vector.load %arg11[%c0_49, %c0_50] : memref<1x64xf32, #tpu.memory_space<vmem>>, vector<1x64xf32>
    %130 = vector.broadcast %129 : vector<1x64xf32> to vector<16x64xf32>
    %131 = arith.mulf %128, %130 : vector<16x64xf32>
    %c0_51 = arith.constant 0 : index
    %c0_52 = arith.constant 0 : index
    %132 = vector.load %arg12[%c0_51, %c0_52] : memref<1x64xf32, #tpu.memory_space<vmem>>, vector<1x64xf32>
    %133 = vector.broadcast %132 : vector<1x64xf32> to vector<16x64xf32>
    %134 = arith.addf %131, %133 : vector<16x64xf32>
    %c0_53 = arith.constant 0 : index
    %c0_54 = arith.constant 0 : index
    %c0_55 = arith.constant 0 : index
    %c0_56 = arith.constant 0 : index
    %135 = vector.load %arg13[%c0_53, %c0_54, %c0_55, %c0_56] : memref<1x1x16x64xf32, #tpu.memory_space<vmem>>, vector<1x1x16x64xf32>
    %136 = vector.shape_cast %135 : vector<1x1x16x64xf32> to vector<16x64xf32>
    %137 = arith.addf %134, %136 : vector<16x64xf32>
    %138 = vector.shape_cast %137 : vector<16x64xf32> to vector<1x1x16x64xf32>
    %c0_57 = arith.constant 0 : index
    %c0_58 = arith.constant 0 : index
    %c0_59 = arith.constant 0 : index
    %c0_60 = arith.constant 0 : index
    %139 = vector.load %arg14[%c0_57, %c0_58, %c0_59, %c0_60] : memref<1x1x16x64xf32, #tpu.memory_space<vmem>>, vector<1x1x16x64xf32>
    tpu.vector_store %arg14[%c0_57, %c0_58, %c0_59, %c0_60], %138 {strides = array<i32>} : memref<1x1x16x64xf32, #tpu.memory_space<vmem>>, vector<1x1x16x64xf32>,
    return
  }
  func.func @transform_0(%arg0: i32, %arg1: i32) -> (i32, i32, i32, i32) {
    %c0_i32 = arith.constant 0 : i32
    %0 = arith.addi %arg1, %c0_i32 : i32
    %c0_i32_0 = arith.constant 0 : i32
    %c0_i32_1 = arith.constant 0 : i32
    %c0_i32_2 = arith.constant 0 : i32
    return %arg0, %0, %c0_i32_0, %c0_i32_1 : i32, i32, i32, i32
  }
  func.func @transform_1(%arg0: i32, %arg1: i32) -> (i32, i32, i32, i32) {
    %c1_i32 = arith.constant 1 : i32
    %0 = arith.addi %arg1, %c1_i32 : i32
    %c0_i32 = arith.constant 0 : i32
    %c0_i32_0 = arith.constant 0 : i32
    %c0_i32_1 = arith.constant 0 : i32
    return %arg0, %0, %c0_i32, %c0_i32_0 : i32, i32, i32, i32
  }
  func.func @transform_2(%arg0: i32, %arg1: i32) -> (i32, i32, i32, i32) {
    %c2_i32 = arith.constant 2 : i32
    %0 = arith.addi %arg1, %c2_i32 : i32
    %c0_i32 = arith.constant 0 : i32
    %c0_i32_0 = arith.constant 0 : i32
    %c0_i32_1 = arith.constant 0 : i32
    return %arg0, %0, %c0_i32, %c0_i32_0 : i32, i32, i32, i32
  }
  func.func @transform_3(%arg0: i32, %arg1: i32) -> (i32, i32) {
    %c0_i32 = arith.constant 0 : i32
    %c0_i32_0 = arith.constant 0 : i32
    %c0_i32_1 = arith.constant 0 : i32
    return %c0_i32, %c0_i32_0 : i32, i32
  }
  func.func @transform_4(%arg0: i32, %arg1: i32) -> (i32, i32) {
    %c0_i32 = arith.constant 0 : i32
    %c0_i32_0 = arith.constant 0 : i32
    %c0_i32_1 = arith.constant 0 : i32
    return %c0_i32, %c0_i32_0 : i32, i32
  }
  func.func @transform_5(%arg0: i32, %arg1: i32) -> (i32, i32) {
    %c0_i32 = arith.constant 0 : i32
    %c0_i32_0 = arith.constant 0 : i32
    %c0_i32_1 = arith.constant 0 : i32
    return %c0_i32, %c0_i32_0 : i32, i32
  }
  func.func @transform_6(%arg0: i32, %arg1: i32) -> (i32, i32) {
    %c0_i32 = arith.constant 0 : i32
    %c0_i32_0 = arith.constant 0 : i32
    %c0_i32_1 = arith.constant 0 : i32
    return %c0_i32, %c0_i32_0 : i32, i32
  }
  func.func @transform_7(%arg0: i32, %arg1: i32) -> (i32, i32) {
    %c0_i32 = arith.constant 0 : i32
    %c0_i32_0 = arith.constant 0 : i32
    %c0_i32_1 = arith.constant 0 : i32
    return %c0_i32, %c0_i32_0 : i32, i32
  }
  func.func @transform_8(%arg0: i32, %arg1: i32) -> (i32, i32) {
    %c0_i32 = arith.constant 0 : i32
    %c0_i32_0 = arith.constant 0 : i32
    %c0_i32_1 = arith.constant 0 : i32
    return %c0_i32, %c0_i32_0 : i32, i32
  }
  func.func @transform_9(%arg0: i32, %arg1: i32) -> (i32, i32) {
    %c0_i32 = arith.constant 0 : i32
    %c0_i32_0 = arith.constant 0 : i32
    %c0_i32_1 = arith.constant 0 : i32
    return %c0_i32, %c0_i32_0 : i32, i32
  }
  func.func @transform_10(%arg0: i32, %arg1: i32) -> (i32, i32) {
    %c0_i32 = arith.constant 0 : i32
    %c0_i32_0 = arith.constant 0 : i32
    %c0_i32_1 = arith.constant 0 : i32
    return %c0_i32, %c0_i32_0 : i32, i32
  }
  func.func @transform_11(%arg0: i32, %arg1: i32) -> (i32, i32, i32, i32) {
    %c0_i32 = arith.constant 0 : i32
    %c0_i32_0 = arith.constant 0 : i32
    %c0_i32_1 = arith.constant 0 : i32
    return %arg0, %arg1, %c0_i32, %c0_i32_0 : i32, i32, i32, i32
  }
  func.func @transform_12(%arg0: i32, %arg1: i32) -> (i32, i32, i32, i32) {
    %c0_i32 = arith.constant 0 : i32
    %c0_i32_0 = arith.constant 0 : i32
    %c0_i32_1 = arith.constant 0 : i32
    return %arg0, %arg1, %c0_i32, %c0_i32_0 : i32, i32, i32, i32
  }
}

</mosaic_0001>

<llo_original>
// kernel: basic_block1_forward.3
$region0: #{basic_block1_forward.3}
  #allocation0 [shape = 'u32[]', space=smem, size = 0x4, offset = 0x4, fixed_abs, tag = 'smem constant byte address 0x4 - core index']
  #allocation1 [shape = 'u32[144,128]{1,0:T(1,128)}', space=vmem, size = 0x12000, scoped, tag = 'internal scratch']
  %s0 = inlined_call_operand.vmem [shape: f32[2,18,18,64], index: 0, kind: input, shape index: {}, may-alias: {0,1,2}]
  %s1 = inlined_call_operand.vmem [shape: f32[2,18,18,64], index: 1, kind: input, shape index: {}, may-alias: {0,1,2}]
  %s2 = inlined_call_operand.vmem [shape: f32[2,18,18,64], index: 2, kind: input, shape index: {}, may-alias: {0,1,2}]
  %s3 = inlined_call_operand.vmem [shape: f32[9,64], index: 3, kind: input, shape index: {}]
  %s4 = inlined_call_operand.vmem [shape: f32[1,64], index: 4, kind: input, shape index: {}]
  %s5 = inlined_call_operand.vmem [shape: f32[1,64], index: 5, kind: input, shape index: {}]
  %s6 = inlined_call_operand.vmem [shape: bf16[2,16,16,64], index: 6, kind: output, shape index: {}]
  %s7 = sld [smem:[#allocation0]]
  $region57: #{basic_block1_forward.3} parent=0
    _
  %s9 = ssub.s32 1, %s7
  %s10 = scalar_select 0, %s9, %s7
  loop: start=0, step=1, limit=34
  $region2: #{basic_block1_forward.3} parent=0 // loop_pre_header
    _
  $region3: #{basic_block1_forward.3} parent=0 // loop_header
    %s12 = sphi 0, %s16
    %p13 = scmp.ge.s32.totalorder %s12, 34
    %s19 = sphi 0, %s31
    %s20 = sphi 0, %s27
    %s21 = sphi 0, %s19
    %s22 = sphi 0, %s20
    %s23 = sphi 0, %s21
    %s24 = sphi 0, %s22
    %s36 = sphi 0, %s38
    %s39 = sphi 0, %s36
    %s40 = sphi 0, %s39
    %s56 = sphi 0, %s40
    %s66 = sphi 0, %s68
    %s69 = sphi 0, %s66
    %s70 = sphi 0, %s69
    %s86 = sphi 0, %s70
    %s96 = sphi 0, %s98
    %s99 = sphi 0, %s96
    %s100 = sphi 0, %s99
    %s116 = sphi 0, %s100
    %s120 = sphi 0, %s120
    %s122 = sphi 0, %s120
    %s123 = sphi 0, %s122
    %s137 = sphi 0, %s123
    %s141 = sphi 0, %s141
    %s143 = sphi 0, %s141
    %s144 = sphi 0, %s143
    %s158 = sphi 0, %s144
    %s162 = sphi 0, %s162
    %s164 = sphi 0, %s162
    %s165 = sphi 0, %s164
    %s179 = sphi 0, %s165
    %s187 = sphi 0, %s189
    %s190 = sphi 0, %s187
    %s191 = sphi 0, %s190
    %s207 = sphi 0, %s191
  $region4: #{basic_block1_forward.3} parent=0 // loop_header_branch
    %15 = sbr.rel (%p13) target = $region8
  $region5: #{basic_block1_forward.3} parent=0 // loop_body
    %s17 = ssub.s32 %s12, 1
    %s18 = ssub.s32 %s12, 2
    %s25 = sadd.s32 1, %s20
    %p26 = scmp.ge.s32.totalorder %s25, 16
    %s27 = scalar_select %p26, 0, %s25
    %s28 = sadd.s32 1, %s19
    %s29 = scalar_select %p26, %s28, %s19
    %p30 = scmp.ge.s32.totalorder %s29, 2
    %s31 = scalar_select %p30, 0, %s29
    %s32 = ssub.s32 %s19, %s31
    %s33 = ssub.s32 %s20, %s27
    %s34 = sor.u32 %s32, %s33
    %p35 = scmp.eq.s32.totalorder %s34, 0
    %s37 = sadd.s32 %s36, 1
    %s38 = scalar_select %p35, %s36, %s37
    %p41 = pneg %p35
    %p42 = scmp.eq.s32.totalorder %s12, 31
    %p43 = por %p41, %p42
    %p44 = scmp.ne.s32.totalorder %s36, %s39
    %p45 = scmp.eq.s32.totalorder %s12, 0
    %p46 = por %p44, %p45
    %p47 = scmp.ne.s32.totalorder %s36, %s39
    %p48 = scmp.eq.s32.totalorder %s17, 31
    %p49 = por %p47, %p48
    %p50 = scmp.ne.s32.totalorder %s39, %s40
    %p51 = scmp.eq.s32.totalorder %s17, 0
    %p52 = por %p50, %p51
    %p53 = scmp.ne.s32.totalorder %s39, %s40
    %p54 = scmp.eq.s32.totalorder %s18, 31
    %p55 = por %p53, %p54
    %p57 = scmp.ne.s32.totalorder %s40, %s56
    %p58 = scmp.eq.s32.totalorder %s18, 0
    %p59 = por %p57, %p58
    %s60 = sadd.s32 %s20, 1
    %s61 = sadd.s32 %s27, 1
    %s62 = ssub.s32 %s19, %s31
    %s63 = ssub.s32 %s60, %s61
    %s64 = sor.u32 %s62, %s63
    %p65 = scmp.eq.s32.totalorder %s64, 0
    %s67 = sadd.s32 %s66, 1
    %s68 = scalar_select %p65, %s66, %s67
    %p71 = pneg %p65
    %p72 = scmp.eq.s32.totalorder %s12, 31
    %p73 = por %p71, %p72
    %p74 = scmp.ne.s32.totalorder %s66, %s69
    %p75 = scmp.eq.s32.totalorder %s12, 0
    %p76 = por %p74, %p75
    %p77 = scmp.ne.s32.totalorder %s66, %s69
    %p78 = scmp.eq.s32.totalorder %s17, 31
    %p79 = por %p77, %p78
    %p80 = scmp.ne.s32.totalorder %s69, %s70
    %p81 = scmp.eq.s32.totalorder %s17, 0
    %p82 = por %p80, %p81
    %p83 = scmp.ne.s32.totalorder %s69, %s70
    %p84 = scmp.eq.s32.totalorder %s18, 31
    %p85 = por %p83, %p84
    %p87 = scmp.ne.s32.totalorder %s70, %s86
    %p88 = scmp.eq.s32.totalorder %s18, 0
    %p89 = por %p87, %p88
    %s90 = sadd.s32 %s20, 2
    %s91 = sadd.s32 %s27, 2
    %s92 = ssub.s32 %s19, %s31
    %s93 = ssub.s32 %s90, %s91
    %s94 = sor.u32 %s92, %s93
    %p95 = scmp.eq.s32.totalorder %s94, 0
    %s97 = sadd.s32 %s96, 1
    %s98 = scalar_select %p95, %s96, %s97
    %p101 = pneg %p95
    %p102 = scmp.eq.s32.totalorder %s12, 31
    %p103 = por %p101, %p102
    %p104 = scmp.ne.s32.totalorder %s96, %s99
    %p105 = scmp.eq.s32.totalorder %s12, 0
    %p106 = por %p104, %p105
    %p107 = scmp.ne.s32.totalorder %s96, %s99
    %p108 = scmp.eq.s32.totalorder %s17, 31
    %p109 = por %p107, %p108
    %p110 = scmp.ne.s32.totalorder %s99, %s100
    %p111 = scmp.eq.s32.totalorder %s17, 0
    %p112 = por %p110, %p111
    %p113 = scmp.ne.s32.totalorder %s99, %s100
    %p114 = scmp.eq.s32.totalorder %s18, 31
    %p115 = por %p113, %p114
    %p117 = scmp.ne.s32.totalorder %s100, %s116
    %p118 = scmp.eq.s32.totalorder %s18, 0
    %p119 = por %p117, %p118
    %s121 = sadd.s32 %s120, 1
    %p124 = scmp.eq.s32.totalorder %s12, 31
    %p125 = scmp.ne.s32.totalorder %s120, %s122
    %p126 = scmp.eq.s32.totalorder %s12, 0
    %p127 = por %p125, %p126
    %p128 = scmp.ne.s32.totalorder %s120, %s122
    %p129 = scmp.eq.s32.totalorder %s17, 31
    %p130 = por %p128, %p129
    %p131 = scmp.ne.s32.totalorder %s122, %s123
    %p132 = scmp.eq.s32.totalorder %s17, 0
    %p133 = por %p131, %p132
    %p134 = scmp.ne.s32.totalorder %s122, %s123
    %p135 = scmp.eq.s32.totalorder %s18, 31
    %p136 = por %p134, %p135
    %p138 = scmp.ne.s32.totalorder %s123, %s137
    %p139 = scmp.eq.s32.totalorder %s18, 0
    %p140 = por %p138, %p139
    %s142 = sadd.s32 %s141, 1
    %p145 = scmp.eq.s32.totalorder %s12, 31
    %p146 = scmp.ne.s32.totalorder %s141, %s143
    %p147 = scmp.eq.s32.totalorder %s12, 0
    %p148 = por %p146, %p147
    %p149 = scmp.ne.s32.totalorder %s141, %s143
    %p150 = scmp.eq.s32.totalorder %s17, 31
    %p151 = por %p149, %p150
    %p152 = scmp.ne.s32.totalorder %s143, %s144
    %p153 = scmp.eq.s32.totalorder %s17, 0
    %p154 = por %p152, %p153
    %p155 = scmp.ne.s32.totalorder %s143, %s144
    %p156 = scmp.eq.s32.totalorder %s18, 31
    %p157 = por %p155, %p156
    %p159 = scmp.ne.s32.totalorder %s144, %s158
    %p160 = scmp.eq.s32.totalorder %s18, 0
    %p161 = por %p159, %p160
    %s163 = sadd.s32 %s162, 1
    %p166 = scmp.eq.s32.totalorder %s12, 31
    %p167 = scmp.ne.s32.totalorder %s162, %s164
    %p168 = scmp.eq.s32.totalorder %s12, 0
    %p169 = por %p167, %p168
    %p170 = scmp.ne.s32.totalorder %s162, %s164
    %p171 = scmp.eq.s32.totalorder %s17, 31
    %p172 = por %p170, %p171
    %p173 = scmp.ne.s32.totalorder %s164, %s165
    %p174 = scmp.eq.s32.totalorder %s17, 0
    %p175 = por %p173, %p174
    %p176 = scmp.ne.s32.totalorder %s164, %s165
    %p177 = scmp.eq.s32.totalorder %s18, 31
    %p178 = por %p176, %p177
    %p180 = scmp.ne.s32.totalorder %s165, %s179
    %p181 = scmp.eq.s32.totalorder %s18, 0
    %p182 = por %p180, %p181
    %s183 = ssub.s32 %s19, %s31
    %s184 = ssub.s32 %s20, %s27
    %s185 = sor.u32 %s183, %s184
    %p186 = scmp.eq.s32.totalorder %s185, 0
    %s188 = sadd.s32 %s187, 1
    %s189 = scalar_select %p186, %s187, %s188
    %p192 = pneg %p186
    %p193 = scmp.eq.s32.totalorder %s12, 31
    %p194 = por %p192, %p193
    %p195 = scmp.ne.s32.totalorder %s187, %s190
    %p196 = scmp.eq.s32.totalorder %s12, 0
    %p197 = por %p195, %p196
    %p198 = scmp.ne.s32.totalorder %s187, %s190
    %p199 = scmp.eq.s32.totalorder %s17, 31
    %p200 = por %p198, %p199
    %p201 = scmp.ne.s32.totalorder %s190, %s191
    %p202 = scmp.eq.s32.totalorder %s17, 0
    %p203 = por %p201, %p202
    %p204 = scmp.ne.s32.totalorder %s190, %s191
    %p205 = scmp.eq.s32.totalorder %s18, 31
    %p206 = por %p204, %p205
    %p208 = scmp.ne.s32.totalorder %s191, %s207
    %p209 = scmp.eq.s32.totalorder %s18, 0
    %p210 = por %p208, %p209
    %p211 = scmp.le.s32.totalorder 1, %s12
    %p212 = scmp.lt.s32.totalorder %s12, 33
    %p213 = pnand %p211, %p212
    %p214 = pneg %p213
    // Predicated region
    $region9: #{basic_block1_forward.3} parent=5 // pred_check
      _
    $region10: #{basic_block1_forward.3} parent=5 // pred_check_branch
      %216 = sbr.rel (%p213) target = $region12
    $region11: #{basic_block1_forward.3} parent=5 // pred_region
      %s217 = ssub.s32 %s12, 1
      // Predicated region
      $region13: #{basic_block1_forward.3} parent=11 // pred_check
        %p218 = pneg %p133
      $region14: #{basic_block1_forward.3} parent=11 // pred_check_branch
        %220 = sbr.rel (%p218) target = $region16
      $region15: #{basic_block1_forward.3} parent=11 // pred_region
        _
      $region16: #{basic_block1_forward.3} parent=11 // pred_fallthru
        _
      // Predicated region
      $region17: #{basic_block1_forward.3} parent=11 // pred_check
        %p221 = pneg %p154
      $region18: #{basic_block1_forward.3} parent=11 // pred_check_branch
        %223 = sbr.rel (%p221) target = $region20
      $region19: #{basic_block1_forward.3} parent=11 // pred_region
        _
      $region20: #{basic_block1_forward.3} parent=11 // pred_fallthru
        _
      // Predicated region
      $region21: #{basic_block1_forward.3} parent=11 // pred_check
        %p224 = pneg %p175
      $region22: #{basic_block1_forward.3} parent=11 // pred_check_branch
        %226 = sbr.rel (%p224) target = $region24
      $region23: #{basic_block1_forward.3} parent=11 // pred_region
        _
      $region24: #{basic_block1_forward.3} parent=11 // pred_fallthru
        _
    $region12: #{basic_block1_forward.3} parent=5 // pred_fallthru
      _
    %p227 = scmp.lt.s32.totalorder %s12, 32
    // Predicated region
    $region25: #{basic_block1_forward.3} parent=5 // pred_check
      %p228 = pneg %p227
    $region26: #{basic_block1_forward.3} parent=5 // pred_check_branch
      %230 = sbr.rel (%p228) target = $region28
    $region27: #{basic_block1_forward.3} parent=5 // pred_region
      // Predicated region
      $region29: #{basic_block1_forward.3} parent=27 // pred_check
        %p231 = pneg %p46
      $region30: #{basic_block1_forward.3} parent=27 // pred_check_branch
        %233 = sbr.rel (%p231) target = $region32
      $region31: #{basic_block1_forward.3} parent=27 // pred_region
        %p234 = scmp.lt.s32.totalorder %s19, 1
        %s235 = scalar_select %p234, %s19, 1
        %p236 = scmp.lt.s32.totalorder %s20, 17
        %s237 = scalar_select %p236, %s20, 17
        %s238 = smul.addr %s237, 3
        %s239 = smul.addr %s235, 54
        %s240 = sadd.s32 %s238, %s239
        %s241 = smul.addr %s240, 8
        %s242 = scalar_lea.vmem %s0, %s241
      $region32: #{basic_block1_forward.3} parent=27 // pred_fallthru
        _
      // Predicated region
      $region33: #{basic_block1_forward.3} parent=27 // pred_check
        %p243 = pneg %p76
      $region34: #{basic_block1_forward.3} parent=27 // pred_check_branch
        %245 = sbr.rel (%p243) target = $region36
      $region35: #{basic_block1_forward.3} parent=27 // pred_region
        %s246 = sadd.s32 %s20, 1
        %p247 = scmp.lt.s32.totalorder %s19, 1
        %s248 = scalar_select %p247, %s19, 1
        %p249 = scmp.lt.s32.totalorder %s246, 17
        %s250 = scalar_select %p249, %s246, 17
        %s251 = smul.addr %s250, 3
        %s252 = smul.addr %s248, 54
        %s253 = sadd.s32 %s251, %s252
        %s254 = smul.addr %s253, 8
        %s255 = scalar_lea.vmem %s1, %s254
        %s256 = sadd.s32 %s20, 1
      $region36: #{basic_block1_forward.3} parent=27 // pred_fallthru
        _
      // Predicated region
      $region37: #{basic_block1_forward.3} parent=27 // pred_check
        %p257 = pneg %p106
      $region38: #{basic_block1_forward.3} parent=27 // pred_check_branch
        %259 = sbr.rel (%p257) target = $region40
      $region39: #{basic_block1_forward.3} parent=27 // pred_region
        %s260 = sadd.s32 %s20, 2
        %p261 = scmp.lt.s32.totalorder %s19, 1
        %s262 = scalar_select %p261, %s19, 1
        %p263 = scmp.lt.s32.totalorder %s260, 17
        %s264 = scalar_select %p263, %s260, 17
        %s265 = smul.addr %s264, 3
        %s266 = smul.addr %s262, 54
        %s267 = sadd.s32 %s265, %s266
        %s268 = smul.addr %s267, 8
        %s269 = scalar_lea.vmem %s2, %s268
        %s270 = sadd.s32 %s20, 2
      $region40: #{basic_block1_forward.3} parent=27 // pred_fallthru
        _
    $region28: #{basic_block1_forward.3} parent=5 // pred_fallthru
      _
    %p271 = scmp.le.s32.totalorder 1, %s12
    %p272 = scmp.lt.s32.totalorder %s12, 33
    %p273 = pnand %p271, %p272
    %p274 = pneg %p273
    // Predicated region
    $region41: #{basic_block1_forward.3} parent=5 // pred_check
      _
    $region42: #{basic_block1_forward.3} parent=5 // pred_check_branch
      %276 = sbr.rel (%p273) target = $region44
    $region43: #{basic_block1_forward.3} parent=5 // pred_region
      %s277 = ssub.s32 %s12, 1
      %p278 = scmp.lt.s32.totalorder %s21, 1
      %s279 = scalar_select %p278, %s21, 1
      %p280 = scmp.lt.s32.totalorder %s22, 17
      %s281 = scalar_select %p280, %s22, 17
      %s282 = smul.addr %s281, 3
      %s283 = smul.addr %s279, 54
      %s284 = sadd.s32 %s282, %s283
      %s285 = smul.addr %s284, 8
      %s286 = scalar_lea.vmem %s0, %s285
      %p287 = pneg %p52
      %p288 = pneg %p49
      %s289 = sadd.s32 %s22, 1
      %p290 = scmp.lt.s32.totalorder %s21, 1
      %s291 = scalar_select %p290, %s21, 1
      %p292 = scmp.lt.s32.totalorder %s289, 17
      %s293 = scalar_select %p292, %s289, 17
      %s294 = smul.addr %s293, 3
      %s295 = smul.addr %s291, 54
      %s296 = sadd.s32 %s294, %s295
      %s297 = smul.addr %s296, 8
      %s298 = scalar_lea.vmem %s1, %s297
      %p299 = pneg %p82
      %p300 = pneg %p79
      %s301 = sadd.s32 %s22, 2
      %p302 = scmp.lt.s32.totalorder %s21, 1
      %s303 = scalar_select %p302, %s21, 1
      %p304 = scmp.lt.s32.totalorder %s301, 17
      %s305 = scalar_select %p304, %s301, 17
      %s306 = smul.addr %s305, 3
      %s307 = smul.addr %s303, 54
      %s308 = sadd.s32 %s306, %s307
      %s309 = smul.addr %s308, 8
      %s310 = scalar_lea.vmem %s2, %s309
      %p311 = pneg %p112
      %p312 = pneg %p109
      %p313 = pneg %p133
      %p314 = pneg %p130
      %p315 = pneg %p154
      %p316 = pneg %p151
      %p317 = pneg %p175
      %p318 = pneg %p172
      %p319 = pneg %p203
      %p320 = pneg %p200
      %p321 = scmp.lt.s32.totalorder %s21, 1
      %s322 = scalar_select %p321, %s21, 1
      %p323 = scmp.lt.s32.totalorder %s22, 15
      %s324 = scalar_select %p323, %s22, 15
      %s325 = smul.addr %s324, 2
      %s326 = smul.addr %s322, 32
      %s327 = sadd.s32 %s325, %s326
      %s328 = smul.addr %s327, 4
      %s329 = scalar_lea.vmem %s6, %s328
      %p330 = scmp.lt.s32.totalorder %s21, 1
      %s331 = scalar_select %p330, %s21, 1
      %p332 = scmp.lt.s32.totalorder %s22, 17
      %s333 = scalar_select %p332, %s22, 17
      %s334 = smul.addr %s333, 3
      %s335 = smul.addr %s331, 54
      %s336 = sadd.s32 %s334, %s335
      %s337 = smul.addr %s336, 8
      %s338 = scalar_lea.vmem %s0, %s337
      %s339 = sadd.s32 %s22, 1
      %p340 = scmp.lt.s32.totalorder %s21, 1
      %s341 = scalar_select %p340, %s21, 1
      %p342 = scmp.lt.s32.totalorder %s339, 17
      %s343 = scalar_select %p342, %s339, 17
      %s344 = smul.addr %s343, 3
      %s345 = smul.addr %s341, 54
      %s346 = sadd.s32 %s344, %s345
      %s347 = smul.addr %s346, 8
      %s348 = scalar_lea.vmem %s1, %s347
      %s349 = sadd.s32 %s22, 1
      %s350 = sadd.s32 %s22, 2
      %p351 = scmp.lt.s32.totalorder %s21, 1
      %s352 = scalar_select %p351, %s21, 1
      %p353 = scmp.lt.s32.totalorder %s350, 17
      %s354 = scalar_select %p353, %s350, 17
      %s355 = smul.addr %s354, 3
      %s356 = smul.addr %s352, 54
      %s357 = sadd.s32 %s355, %s356
      %s358 = smul.addr %s357, 8
      %s359 = scalar_lea.vmem %s2, %s358
      %s360 = sadd.s32 %s22, 2
      %p361 = scmp.lt.s32.totalorder %s21, 1
      %s362 = scalar_select %p361, %s21, 1
      %p363 = scmp.lt.s32.totalorder %s22, 15
      %s364 = scalar_select %p363, %s22, 15
      %s365 = smul.addr %s364, 2
      %s366 = smul.addr %s362, 32
      %s367 = sadd.s32 %s365, %s366
      %s368 = smul.addr %s367, 4
      %s369 = scalar_lea.vmem %s6, %s368
      %v370 = vld [vmem:[%s338] sm:$0xff]
      %v371 = vld [vmem:[%s338 + $0x8] sm:$0xff]
      %v372 = vld [vmem:[%s338 + $0x10] sm:$0x3]
      %v373 = vld [vmem:[%s348] sm:$0xff]
      %v374 = vld [vmem:[%s348 + $0x8] sm:$0xff]
      %v375 = vld [vmem:[%s348 + $0x10] sm:$0x3]
      %v376 = vld [vmem:[%s359] sm:$0xff]
      %v377 = vld [vmem:[%s359 + $0x8] sm:$0xff]
      %v378 = vld [vmem:[%s359 + $0x10] sm:$0x3]
      %v379 = vld [vmem:[%s3] sm:$0xff]
      %v380 = vld [vmem:[%s3 + $0x8] sm:$0x1]
      %v381 = vlaneseq
      %v382 = vshrl.u32 %v381, 7
      %v383 = vsub.s32 0, %v382
      %v384 = vrot.slane %v379, %v383
      %v385 = vmul.f32 %v370, %v384
      %v386 = vmul.f32 %v371, %v384
      %v387 = vadd.f32 %v385, 0.0
      %v388 = vadd.f32 %v386, 0.0
      %v389 = vlaneseq
      %v390 = vshrl.u32 %v389, 7
      %v391 = vsub.s32 1, %v390
      %v392 = vrot.slane %v379, %v391
      %v393 = vmul.f32 %v370, %v392
      %v394 = vmul.f32 %v371, %v392
      %v395 = vmul.f32 %v372, %v392
      %vm399 = vcmask 1046528
      %v400 = vrot.slane %v393, 1
      %v401 = vrot.slane %v394, 1
      %v402 = vsel %vm399, %v400, %v401
      %v403 = vrot.slane %v395, 1
      %v404 = vsel %vm399, %v401, %v403
      %v407 = vadd.f32 %v387, %v402
      %v408 = vadd.f32 %v388, %v404
      %v409 = vlaneseq
      %v410 = vshrl.u32 %v409, 7
      %v411 = vsub.s32 2, %v410
      %v412 = vrot.slane %v379, %v411
      %v413 = vmul.f32 %v370, %v412
      %v414 = vmul.f32 %v371, %v412
      %v415 = vmul.f32 %v372, %v412
      %vm419 = vcmask 1045504
      %v420 = vrot.slane %v413, 2
      %v421 = vrot.slane %v414, 2
      %v422 = vsel %vm419, %v420, %v421
      %v423 = vrot.slane %v415, 2
      %v424 = vsel %vm419, %v421, %v423
      %v427 = vadd.f32 %v407, %v422
      %v428 = vadd.f32 %v408, %v424
      %v429 = vlaneseq
      %v430 = vshrl.u32 %v429, 7
      %v431 = vsub.s32 3, %v430
      %v432 = vrot.slane %v379, %v431
      %v433 = vmul.f32 %v373, %v432
      %v434 = vmul.f32 %v374, %v432
      %v435 = vadd.f32 %v427, %v433
      %v436 = vadd.f32 %v428, %v434
      %v437 = vlaneseq
      %v438 = vshrl.u32 %v437, 7
      %v439 = vsub.s32 4, %v438
      %v440 = vrot.slane %v379, %v439
      %v441 = vmul.f32 %v373, %v440
      %v442 = vmul.f32 %v374, %v440
      %v443 = vmul.f32 %v375, %v440
      %v447 = vrot.slane %v441, 1
      %v448 = vrot.slane %v442, 1
      %v449 = vsel %vm399, %v447, %v448
      %v450 = vrot.slane %v443, 1
      %v451 = vsel %vm399, %v448, %v450
      %v454 = vadd.f32 %v435, %v449
      %v455 = vadd.f32 %v436, %v451
      %v456 = vlaneseq
      %v457 = vshrl.u32 %v456, 7
      %v458 = vsub.s32 5, %v457
      %v459 = vrot.slane %v379, %v458
      %v460 = vmul.f32 %v373, %v459
      %v461 = vmul.f32 %v374, %v459
      %v462 = vmul.f32 %v375, %v459
      %v466 = vrot.slane %v460, 2
      %v467 = vrot.slane %v461, 2
      %v468 = vsel %vm419, %v466, %v467
      %v469 = vrot.slane %v462, 2
      %v470 = vsel %vm419, %v467, %v469
      %v473 = vadd.f32 %v454, %v468
      %v474 = vadd.f32 %v455, %v470
      %v475 = vlaneseq
      %v476 = vshrl.u32 %v475, 7
      %v477 = vsub.s32 6, %v476
      %v478 = vrot.slane %v379, %v477
      %v479 = vmul.f32 %v376, %v478
      %v480 = vmul.f32 %v377, %v478
      %v481 = vadd.f32 %v473, %v479
      %v482 = vadd.f32 %v474, %v480
      %v483 = vlaneseq
      %v484 = vshrl.u32 %v483, 7
      %v485 = vsub.s32 7, %v484
      %v486 = vrot.slane %v379, %v485
      %v487 = vmul.f32 %v376, %v486
      %v488 = vmul.f32 %v377, %v486
      %v489 = vmul.f32 %v378, %v486
      %v493 = vrot.slane %v487, 1
      %v494 = vrot.slane %v488, 1
      %v495 = vsel %vm399, %v493, %v494
      %v496 = vrot.slane %v489, 1
      %v497 = vsel %vm399, %v494, %v496
      %v500 = vadd.f32 %v481, %v495
      %v501 = vadd.f32 %v482, %v497
      %v502 = vlaneseq
      %v503 = vshrl.u32 %v502, 7
      %v504 = vsub.s32 0, %v503
      %v505 = vrot.slane %v380, %v504
      %v506 = vmul.f32 %v376, %v505
      %v507 = vmul.f32 %v377, %v505
      %v508 = vmul.f32 %v378, %v505
      %v512 = vrot.slane %v506, 2
      %v513 = vrot.slane %v507, 2
      %v514 = vsel %vm419, %v512, %v513
      %v515 = vrot.slane %v508, 2
      %v516 = vsel %vm419, %v513, %v515
      %v519 = vadd.f32 %v500, %v514
      %v520 = vadd.f32 %v501, %v516
      %v521 = vld [vmem:[%s4] sm:$0x1]
      %v523 = vlaneseq
      %v524 = vshrl.u32 %v523, 7
      %v525 = vsub.s32 0, %v524
      %v526 = vrot.slane %v521, %v525
      %v528 = vmul.f32 %v519, %v526
      %v529 = vmul.f32 %v520, %v526
      %v530 = vld [vmem:[%s5] sm:$0x1]
      %v532 = vlaneseq
      %v533 = vshrl.u32 %v532, 7
      %v534 = vsub.s32 0, %v533
      %v535 = vrot.slane %v530, %v534
      %v537 = vadd.f32 %v528, %v535
      %v538 = vadd.f32 %v529, %v535
      %v539 = vpack.c.bf16 %v538, %v537
      %v541 = vunpack.c.l.b16 %v539
      %v542 = vunpack.c.h.b16 %v539
      %v543 = vpack.c.b16 %v541, %v541
      %v544 = vpack.c.b16 %v542, %v542
      %vm547 = vcmask 519168
      %548 = vst.msk [vmem:[%s369] sm:$0xf] %vm547, %v543
      %549 = vst.msk [vmem:[%s369 + $0x4] sm:$0xf] %vm547, %v544
      %p550 = scmp.lt.s32.totalorder %s21, 1
      %s551 = scalar_select %p550, %s21, 1
      %p552 = scmp.lt.s32.totalorder %s22, 15
      %s553 = scalar_select %p552, %s22, 15
      %s554 = smul.addr %s553, 2
      %s555 = smul.addr %s551, 32
      %s556 = sadd.s32 %s554, %s555
      %s557 = smul.addr %s556, 4
      %s558 = scalar_lea.vmem %s6, %s557
      // Predicated region
      $region45: #{basic_block1_forward.3} parent=43 // pred_check
        %p559 = pneg %p200
      $region46: #{basic_block1_forward.3} parent=43 // pred_check_branch
        %561 = sbr.rel (%p559) target = $region48
      $region47: #{basic_block1_forward.3} parent=43 // pred_region
        _
      $region48: #{basic_block1_forward.3} parent=43 // pred_fallthru
        _
    $region44: #{basic_block1_forward.3} parent=5 // pred_fallthru
      _
    %p562 = scmp.le.s32.totalorder 2, %s12
    // Predicated region
    $region49: #{basic_block1_forward.3} parent=5 // pred_check
      %p563 = pneg %p562
    $region50: #{basic_block1_forward.3} parent=5 // pred_check_branch
      %565 = sbr.rel (%p563) target = $region52
    $region51: #{basic_block1_forward.3} parent=5 // pred_region
      %s566 = ssub.s32 %s12, 2
      // Predicated region
      $region53: #{basic_block1_forward.3} parent=51 // pred_check
        %p567 = pneg %p206
      $region54: #{basic_block1_forward.3} parent=51 // pred_check_branch
        %569 = sbr.rel (%p567) target = $region56
      $region55: #{basic_block1_forward.3} parent=51 // pred_region
        %p570 = scmp.lt.s32.totalorder %s23, 1
        %s571 = scalar_select %p570, %s23, 1
        %p572 = scmp.lt.s32.totalorder %s24, 15
        %s573 = scalar_select %p572, %s24, 15
        %s574 = smul.addr %s573, 2
        %s575 = smul.addr %s571, 32
        %s576 = sadd.s32 %s574, %s575
        %s577 = smul.addr %s576, 4
        %s578 = scalar_lea.vmem %s6, %s577
      $region56: #{basic_block1_forward.3} parent=51 // pred_fallthru
        _
    $region52: #{basic_block1_forward.3} parent=5 // pred_fallthru
      _
  $region6: #{basic_block1_forward.3} parent=0 // loop_footer
    %s16 = sadd.s32 1, %s12
  $region7: #{basic_block1_forward.3} parent=0 // loop_footer_branch
    %11 = sbr.rel target = $region3
  $region8: #{basic_block1_forward.3} parent=0 // loop_exit
    _

// kernel: basic_block1_forward.4
$region0: #{basic_block1_forward.4}
  #allocation0 [shape = 'u32[]', space=smem, size = 0x4, offset = 0x4, fixed_abs, tag = 'smem constant byte address 0x4 - core index']
  #allocation1 [shape = 'u32[144,128]{1,0:T(1,128)}', space=vmem, size = 0x12000, scoped, tag = 'internal scratch']
  %s0 = inlined_call_operand.vmem [shape: bf16[2,18,18,64], index: 0, kind: input, shape index: {}, may-alias: {0,1,2}]
  %s1 = inlined_call_operand.vmem [shape: bf16[2,18,18,64], index: 1, kind: input, shape index: {}, may-alias: {0,1,2}]
  %s2 = inlined_call_operand.vmem [shape: bf16[2,18,18,64], index: 2, kind: input, shape index: {}, may-alias: {0,1,2}]
  %s3 = inlined_call_operand.vmem [shape: bf16[64,16], index: 3, kind: input, shape index: {}]
  %s4 = inlined_call_operand.vmem [shape: f32[1,16], index: 4, kind: input, shape index: {}]
  %s5 = inlined_call_operand.vmem [shape: f32[1,16], index: 5, kind: input, shape index: {}]
  %s6 = inlined_call_operand.vmem [shape: f32[9,16], index: 6, kind: input, shape index: {}]
  %s7 = inlined_call_operand.vmem [shape: f32[1,16], index: 7, kind: input, shape index: {}]
  %s8 = inlined_call_operand.vmem [shape: f32[1,16], index: 8, kind: input, shape index: {}]
  %s9 = inlined_call_operand.vmem [shape: f32[1,32], index: 9, kind: input, shape index: {}]
  %s10 = inlined_call_operand.vmem [shape: f32[1,32], index: 10, kind: input, shape index: {}]
  %s11 = inlined_call_operand.vmem [shape: bf16[2,16,16,32], index: 11, kind: output, shape index: {}]
  %s12 = sld [smem:[#allocation0]]
  $region77: #{basic_block1_forward.4} parent=0
    _
  %s14 = ssub.s32 1, %s12
  %s15 = scalar_select 0, %s14, %s12
  loop: start=0, step=1, limit=34
  $region2: #{basic_block1_forward.4} parent=0 // loop_pre_header
    _
  $region3: #{basic_block1_forward.4} parent=0 // loop_header
    %s17 = sphi 0, %s21
    %p18 = scmp.ge.s32.totalorder %s17, 34
    %s24 = sphi 0, %s36
    %s25 = sphi 0, %s32
    %s26 = sphi 0, %s24
    %s27 = sphi 0, %s25
    %s28 = sphi 0, %s26
    %s29 = sphi 0, %s27
    %s41 = sphi 0, %s43
    %s44 = sphi 0, %s41
    %s45 = sphi 0, %s44
    %s61 = sphi 0, %s45
    %s71 = sphi 0, %s73
    %s74 = sphi 0, %s71
    %s75 = sphi 0, %s74
    %s91 = sphi 0, %s75
    %s101 = sphi 0, %s103
    %s104 = sphi 0, %s101
    %s105 = sphi 0, %s104
    %s121 = sphi 0, %s105
    %s125 = sphi 0, %s125
    %s127 = sphi 0, %s125
    %s128 = sphi 0, %s127
    %s142 = sphi 0, %s128
    %s146 = sphi 0, %s146
    %s148 = sphi 0, %s146
    %s149 = sphi 0, %s148
    %s163 = sphi 0, %s149
    %s167 = sphi 0, %s167
    %s169 = sphi 0, %s167
    %s170 = sphi 0, %s169
    %s184 = sphi 0, %s170
    %s188 = sphi 0, %s188
    %s190 = sphi 0, %s188
    %s191 = sphi 0, %s190
    %s205 = sphi 0, %s191
    %s209 = sphi 0, %s209
    %s211 = sphi 0, %s209
    %s212 = sphi 0, %s211
    %s226 = sphi 0, %s212
    %s230 = sphi 0, %s230
    %s232 = sphi 0, %s230
    %s233 = sphi 0, %s232
    %s247 = sphi 0, %s233
    %s251 = sphi 0, %s251
    %s253 = sphi 0, %s251
    %s254 = sphi 0, %s253
    %s268 = sphi 0, %s254
    %s272 = sphi 0, %s272
    %s274 = sphi 0, %s272
    %s275 = sphi 0, %s274
    %s289 = sphi 0, %s275
    %s297 = sphi 0, %s299
    %s300 = sphi 0, %s297
    %s301 = sphi 0, %s300
    %s317 = sphi 0, %s301
  $region4: #{basic_block1_forward.4} parent=0 // loop_header_branch
    %20 = sbr.rel (%p18) target = $region8
  $region5: #{basic_block1_forward.4} parent=0 // loop_body
    %s22 = ssub.s32 %s17, 1
    %s23 = ssub.s32 %s17, 2
    %s30 = sadd.s32 1, %s25
    %p31 = scmp.ge.s32.totalorder %s30, 16
    %s32 = scalar_select %p31, 0, %s30
    %s33 = sadd.s32 1, %s24
    %s34 = scalar_select %p31, %s33, %s24
    %p35 = scmp.ge.s32.totalorder %s34, 2
    %s36 = scalar_select %p35, 0, %s34
    %s37 = ssub.s32 %s24, %s36
    %s38 = ssub.s32 %s25, %s32
    %s39 = sor.u32 %s37, %s38
    %p40 = scmp.eq.s32.totalorder %s39, 0
    %s42 = sadd.s32 %s41, 1
    %s43 = scalar_select %p40, %s41, %s42
    %p46 = pneg %p40
    %p47 = scmp.eq.s32.totalorder %s17, 31
    %p48 = por %p46, %p47
    %p49 = scmp.ne.s32.totalorder %s41, %s44
    %p50 = scmp.eq.s32.totalorder %s17, 0
    %p51 = por %p49, %p50
    %p52 = scmp.ne.s32.totalorder %s41, %s44
    %p53 = scmp.eq.s32.totalorder %s22, 31
    %p54 = por %p52, %p53
    %p55 = scmp.ne.s32.totalorder %s44, %s45
    %p56 = scmp.eq.s32.totalorder %s22, 0
    %p57 = por %p55, %p56
    %p58 = scmp.ne.s32.totalorder %s44, %s45
    %p59 = scmp.eq.s32.totalorder %s23, 31
    %p60 = por %p58, %p59
    %p62 = scmp.ne.s32.totalorder %s45, %s61
    %p63 = scmp.eq.s32.totalorder %s23, 0
    %p64 = por %p62, %p63
    %s65 = sadd.s32 %s25, 1
    %s66 = sadd.s32 %s32, 1
    %s67 = ssub.s32 %s24, %s36
    %s68 = ssub.s32 %s65, %s66
    %s69 = sor.u32 %s67, %s68
    %p70 = scmp.eq.s32.totalorder %s69, 0
    %s72 = sadd.s32 %s71, 1
    %s73 = scalar_select %p70, %s71, %s72
    %p76 = pneg %p70
    %p77 = scmp.eq.s32.totalorder %s17, 31
    %p78 = por %p76, %p77
    %p79 = scmp.ne.s32.totalorder %s71, %s74
    %p80 = scmp.eq.s32.totalorder %s17, 0
    %p81 = por %p79, %p80
    %p82 = scmp.ne.s32.totalorder %s71, %s74
    %p83 = scmp.eq.s32.totalorder %s22, 31
    %p84 = por %p82, %p83
    %p85 = scmp.ne.s32.totalorder %s74, %s75
    %p86 = scmp.eq.s32.totalorder %s22, 0
    %p87 = por %p85, %p86
    %p88 = scmp.ne.s32.totalorder %s74, %s75
    %p89 = scmp.eq.s32.totalorder %s23, 31
    %p90 = por %p88, %p89
    %p92 = scmp.ne.s32.totalorder %s75, %s91
    %p93 = scmp.eq.s32.totalorder %s23, 0
    %p94 = por %p92, %p93
    %s95 = sadd.s32 %s25, 2
    %s96 = sadd.s32 %s32, 2
    %s97 = ssub.s32 %s24, %s36
    %s98 = ssub.s32 %s95, %s96
    %s99 = sor.u32 %s97, %s98
    %p100 = scmp.eq.s32.totalorder %s99, 0
    %s102 = sadd.s32 %s101, 1
    %s103 = scalar_select %p100, %s101, %s102
    %p106 = pneg %p100
    %p107 = scmp.eq.s32.totalorder %s17, 31
    %p108 = por %p106, %p107
    %p109 = scmp.ne.s32.totalorder %s101, %s104
    %p110 = scmp.eq.s32.totalorder %s17, 0
    %p111 = por %p109, %p110
    %p112 = scmp.ne.s32.totalorder %s101, %s104
    %p113 = scmp.eq.s32.totalorder %s22, 31
    %p114 = por %p112, %p113
    %p115 = scmp.ne.s32.totalorder %s104, %s105
    %p116 = scmp.eq.s32.totalorder %s22, 0
    %p117 = por %p115, %p116
    %p118 = scmp.ne.s32.totalorder %s104, %s105
    %p119 = scmp.eq.s32.totalorder %s23, 31
    %p120 = por %p118, %p119
    %p122 = scmp.ne.s32.totalorder %s105, %s121
    %p123 = scmp.eq.s32.totalorder %s23, 0
    %p124 = por %p122, %p123
    %s126 = sadd.s32 %s125, 1
    %p129 = scmp.eq.s32.totalorder %s17, 31
    %p130 = scmp.ne.s32.totalorder %s125, %s127
    %p131 = scmp.eq.s32.totalorder %s17, 0
    %p132 = por %p130, %p131
    %p133 = scmp.ne.s32.totalorder %s125, %s127
    %p134 = scmp.eq.s32.totalorder %s22, 31
    %p135 = por %p133, %p134
    %p136 = scmp.ne.s32.totalorder %s127, %s128
    %p137 = scmp.eq.s32.totalorder %s22, 0
    %p138 = por %p136, %p137
    %p139 = scmp.ne.s32.totalorder %s127, %s128
    %p140 = scmp.eq.s32.totalorder %s23, 31
    %p141 = por %p139, %p140
    %p143 = scmp.ne.s32.totalorder %s128, %s142
    %p144 = scmp.eq.s32.totalorder %s23, 0
    %p145 = por %p143, %p144
    %s147 = sadd.s32 %s146, 1
    %p150 = scmp.eq.s32.totalorder %s17, 31
    %p151 = scmp.ne.s32.totalorder %s146, %s148
    %p152 = scmp.eq.s32.totalorder %s17, 0
    %p153 = por %p151, %p152
    %p154 = scmp.ne.s32.totalorder %s146, %s148
    %p155 = scmp.eq.s32.totalorder %s22, 31
    %p156 = por %p154, %p155
    %p157 = scmp.ne.s32.totalorder %s148, %s149
    %p158 = scmp.eq.s32.totalorder %s22, 0
    %p159 = por %p157, %p158
    %p160 = scmp.ne.s32.totalorder %s148, %s149
    %p161 = scmp.eq.s32.totalorder %s23, 31
    %p162 = por %p160, %p161
    %p164 = scmp.ne.s32.totalorder %s149, %s163
    %p165 = scmp.eq.s32.totalorder %s23, 0
    %p166 = por %p164, %p165
    %s168 = sadd.s32 %s167, 1
    %p171 = scmp.eq.s32.totalorder %s17, 31
    %p172 = scmp.ne.s32.totalorder %s167, %s169
    %p173 = scmp.eq.s32.totalorder %s17, 0
    %p174 = por %p172, %p173
    %p175 = scmp.ne.s32.totalorder %s167, %s169
    %p176 = scmp.eq.s32.totalorder %s22, 31
    %p177 = por %p175, %p176
    %p178 = scmp.ne.s32.totalorder %s169, %s170
    %p179 = scmp.eq.s32.totalorder %s22, 0
    %p180 = por %p178, %p179
    %p181 = scmp.ne.s32.totalorder %s169, %s170
    %p182 = scmp.eq.s32.totalorder %s23, 31
    %p183 = por %p181, %p182
    %p185 = scmp.ne.s32.totalorder %s170, %s184
    %p186 = scmp.eq.s32.totalorder %s23, 0
    %p187 = por %p185, %p186
    %s189 = sadd.s32 %s188, 1
    %p192 = scmp.eq.s32.totalorder %s17, 31
    %p193 = scmp.ne.s32.totalorder %s188, %s190
    %p194 = scmp.eq.s32.totalorder %s17, 0
    %p195 = por %p193, %p194
    %p196 = scmp.ne.s32.totalorder %s188, %s190
    %p197 = scmp.eq.s32.totalorder %s22, 31
    %p198 = por %p196, %p197
    %p199 = scmp.ne.s32.totalorder %s190, %s191
    %p200 = scmp.eq.s32.totalorder %s22, 0
    %p201 = por %p199, %p200
    %p202 = scmp.ne.s32.totalorder %s190, %s191
    %p203 = scmp.eq.s32.totalorder %s23, 31
    %p204 = por %p202, %p203
    %p206 = scmp.ne.s32.totalorder %s191, %s205
    %p207 = scmp.eq.s32.totalorder %s23, 0
    %p208 = por %p206, %p207
    %s210 = sadd.s32 %s209, 1
    %p213 = scmp.eq.s32.totalorder %s17, 31
    %p214 = scmp.ne.s32.totalorder %s209, %s211
    %p215 = scmp.eq.s32.totalorder %s17, 0
    %p216 = por %p214, %p215
    %p217 = scmp.ne.s32.totalorder %s209, %s211
    %p218 = scmp.eq.s32.totalorder %s22, 31
    %p219 = por %p217, %p218
    %p220 = scmp.ne.s32.totalorder %s211, %s212
    %p221 = scmp.eq.s32.totalorder %s22, 0
    %p222 = por %p220, %p221
    %p223 = scmp.ne.s32.totalorder %s211, %s212
    %p224 = scmp.eq.s32.totalorder %s23, 31
    %p225 = por %p223, %p224
    %p227 = scmp.ne.s32.totalorder %s212, %s226
    %p228 = scmp.eq.s32.totalorder %s23, 0
    %p229 = por %p227, %p228
    %s231 = sadd.s32 %s230, 1
    %p234 = scmp.eq.s32.totalorder %s17, 31
    %p235 = scmp.ne.s32.totalorder %s230, %s232
    %p236 = scmp.eq.s32.totalorder %s17, 0
    %p237 = por %p235, %p236
    %p238 = scmp.ne.s32.totalorder %s230, %s232
    %p239 = scmp.eq.s32.totalorder %s22, 31
    %p240 = por %p238, %p239
    %p241 = scmp.ne.s32.totalorder %s232, %s233
    %p242 = scmp.eq.s32.totalorder %s22, 0
    %p243 = por %p241, %p242
    %p244 = scmp.ne.s32.totalorder %s232, %s233
    %p245 = scmp.eq.s32.totalorder %s23, 31
    %p246 = por %p244, %p245
    %p248 = scmp.ne.s32.totalorder %s233, %s247
    %p249 = scmp.eq.s32.totalorder %s23, 0
    %p250 = por %p248, %p249
    %s252 = sadd.s32 %s251, 1
    %p255 = scmp.eq.s32.totalorder %s17, 31
    %p256 = scmp.ne.s32.totalorder %s251, %s253
    %p257 = scmp.eq.s32.totalorder %s17, 0
    %p258 = por %p256, %p257
    %p259 = scmp.ne.s32.totalorder %s251, %s253
    %p260 = scmp.eq.s32.totalorder %s22, 31
    %p261 = por %p259, %p260
    %p262 = scmp.ne.s32.totalorder %s253, %s254
    %p263 = scmp.eq.s32.totalorder %s22, 0
    %p264 = por %p262, %p263
    %p265 = scmp.ne.s32.totalorder %s253, %s254
    %p266 = scmp.eq.s32.totalorder %s23, 31
    %p267 = por %p265, %p266
    %p269 = scmp.ne.s32.totalorder %s254, %s268
    %p270 = scmp.eq.s32.totalorder %s23, 0
    %p271 = por %p269, %p270
    %s273 = sadd.s32 %s272, 1
    %p276 = scmp.eq.s32.totalorder %s17, 31
    %p277 = scmp.ne.s32.totalorder %s272, %s274
    %p278 = scmp.eq.s32.totalorder %s17, 0
    %p279 = por %p277, %p278
    %p280 = scmp.ne.s32.totalorder %s272, %s274
    %p281 = scmp.eq.s32.totalorder %s22, 31
    %p282 = por %p280, %p281
    %p283 = scmp.ne.s32.totalorder %s274, %s275
    %p284 = scmp.eq.s32.totalorder %s22, 0
    %p285 = por %p283, %p284
    %p286 = scmp.ne.s32.totalorder %s274, %s275
    %p287 = scmp.eq.s32.totalorder %s23, 31
    %p288 = por %p286, %p287
    %p290 = scmp.ne.s32.totalorder %s275, %s289
    %p291 = scmp.eq.s32.totalorder %s23, 0
    %p292 = por %p290, %p291
    %s293 = ssub.s32 %s24, %s36
    %s294 = ssub.s32 %s25, %s32
    %s295 = sor.u32 %s293, %s294
    %p296 = scmp.eq.s32.totalorder %s295, 0
    %s298 = sadd.s32 %s297, 1
    %s299 = scalar_select %p296, %s297, %s298
    %p302 = pneg %p296
    %p303 = scmp.eq.s32.totalorder %s17, 31
    %p304 = por %p302, %p303
    %p305 = scmp.ne.s32.totalorder %s297, %s300
    %p306 = scmp.eq.s32.totalorder %s17, 0
    %p307 = por %p305, %p306
    %p308 = scmp.ne.s32.totalorder %s297, %s300
    %p309 = scmp.eq.s32.totalorder %s22, 31
    %p310 = por %p308, %p309
    %p311 = scmp.ne.s32.totalorder %s300, %s301
    %p312 = scmp.eq.s32.totalorder %s22, 0
    %p313 = por %p311, %p312
    %p314 = scmp.ne.s32.totalorder %s300, %s301
    %p315 = scmp.eq.s32.totalorder %s23, 31
    %p316 = por %p314, %p315
    %p318 = scmp.ne.s32.totalorder %s301, %s317
    %p319 = scmp.eq.s32.totalorder %s23, 0
    %p320 = por %p318, %p319
    %p321 = scmp.le.s32.totalorder 1, %s17
    %p322 = scmp.lt.s32.totalorder %s17, 33
    %p323 = pnand %p321, %p322
    %p324 = pneg %p323
    // Predicated region
    $region9: #{basic_block1_forward.4} parent=5 // pred_check
      _
    $region10: #{basic_block1_forward.4} parent=5 // pred_check_branch
      %326 = sbr.rel (%p323) target = $region12
    $region11: #{basic_block1_forward.4} parent=5 // pred_region
      %s327 = ssub.s32 %s17, 1
      // Predicated region
      $region13: #{basic_block1_forward.4} parent=11 // pred_check
        %p328 = pneg %p138
      $region14: #{basic_block1_forward.4} parent=11 // pred_check_branch
        %330 = sbr.rel (%p328) target = $region16
      $region15: #{basic_block1_forward.4} parent=11 // pred_region
        _
      $region16: #{basic_block1_forward.4} parent=11 // pred_fallthru
        _
      // Predicated region
      $region17: #{basic_block1_forward.4} parent=11 // pred_check
        %p331 = pneg %p159
      $region18: #{basic_block1_forward.4} parent=11 // pred_check_branch
        %333 = sbr.rel (%p331) target = $region20
      $region19: #{basic_block1_forward.4} parent=11 // pred_region
        _
      $region20: #{basic_block1_forward.4} parent=11 // pred_fallthru
        _
      // Predicated region
      $region21: #{basic_block1_forward.4} parent=11 // pred_check
        %p334 = pneg %p180
      $region22: #{basic_block1_forward.4} parent=11 // pred_check_branch
        %336 = sbr.rel (%p334) target = $region24
      $region23: #{basic_block1_forward.4} parent=11 // pred_region
        _
      $region24: #{basic_block1_forward.4} parent=11 // pred_fallthru
        _
      // Predicated region
      $region25: #{basic_block1_forward.4} parent=11 // pred_check
        %p337 = pneg %p201
      $region26: #{basic_block1_forward.4} parent=11 // pred_check_branch
        %339 = sbr.rel (%p337) target = $region28
      $region27: #{basic_block1_forward.4} parent=11 // pred_region
        _
      $region28: #{basic_block1_forward.4} parent=11 // pred_fallthru
        _
      // Predicated region
      $region29: #{basic_block1_forward.4} parent=11 // pred_check
        %p340 = pneg %p222
      $region30: #{basic_block1_forward.4} parent=11 // pred_check_branch
        %342 = sbr.rel (%p340) target = $region32
      $region31: #{basic_block1_forward.4} parent=11 // pred_region
        _
      $region32: #{basic_block1_forward.4} parent=11 // pred_fallthru
        _
      // Predicated region
      $region33: #{basic_block1_forward.4} parent=11 // pred_check
        %p343 = pneg %p243
      $region34: #{basic_block1_forward.4} parent=11 // pred_check_branch
        %345 = sbr.rel (%p343) target = $region36
      $region35: #{basic_block1_forward.4} parent=11 // pred_region
        _
      $region36: #{basic_block1_forward.4} parent=11 // pred_fallthru
        _
      // Predicated region
      $region37: #{basic_block1_forward.4} parent=11 // pred_check
        %p346 = pneg %p264
      $region38: #{basic_block1_forward.4} parent=11 // pred_check_branch
        %348 = sbr.rel (%p346) target = $region40
      $region39: #{basic_block1_forward.4} parent=11 // pred_region
        _
      $region40: #{basic_block1_forward.4} parent=11 // pred_fallthru
        _
      // Predicated region
      $region41: #{basic_block1_forward.4} parent=11 // pred_check
        %p349 = pneg %p285
      $region42: #{basic_block1_forward.4} parent=11 // pred_check_branch
        %351 = sbr.rel (%p349) target = $region44
      $region43: #{basic_block1_forward.4} parent=11 // pred_region
        _
      $region44: #{basic_block1_forward.4} parent=11 // pred_fallthru
        _
    $region12: #{basic_block1_forward.4} parent=5 // pred_fallthru
      _
    %p352 = scmp.lt.s32.totalorder %s17, 32
    // Predicated region
    $region45: #{basic_block1_forward.4} parent=5 // pred_check
      %p353 = pneg %p352
    $region46: #{basic_block1_forward.4} parent=5 // pred_check_branch
      %355 = sbr.rel (%p353) target = $region48
    $region47: #{basic_block1_forward.4} parent=5 // pred_region
      // Predicated region
      $region49: #{basic_block1_forward.4} parent=47 // pred_check
        %p356 = pneg %p51
      $region50: #{basic_block1_forward.4} parent=47 // pred_check_branch
        %358 = sbr.rel (%p356) target = $region52
      $region51: #{basic_block1_forward.4} parent=47 // pred_region
        %p359 = scmp.lt.s32.totalorder %s24, 1
        %s360 = scalar_select %p359, %s24, 1
        %p361 = scmp.lt.s32.totalorder %s25, 17
        %s362 = scalar_select %p361, %s25, 17
        %s363 = smul.addr %s362, 3
        %s364 = smul.addr %s360, 54
        %s365 = sadd.s32 %s363, %s364
        %s366 = smul.addr %s365, 4
        %s367 = scalar_lea.vmem %s0, %s366
      $region52: #{basic_block1_forward.4} parent=47 // pred_fallthru
        _
      // Predicated region
      $region53: #{basic_block1_forward.4} parent=47 // pred_check
        %p368 = pneg %p81
      $region54: #{basic_block1_forward.4} parent=47 // pred_check_branch
        %370 = sbr.rel (%p368) target = $region56
      $region55: #{basic_block1_forward.4} parent=47 // pred_region
        %s371 = sadd.s32 %s25, 1
        %p372 = scmp.lt.s32.totalorder %s24, 1
        %s373 = scalar_select %p372, %s24, 1
        %p374 = scmp.lt.s32.totalorder %s371, 17
        %s375 = scalar_select %p374, %s371, 17
        %s376 = smul.addr %s375, 3
        %s377 = smul.addr %s373, 54
        %s378 = sadd.s32 %s376, %s377
        %s379 = smul.addr %s378, 4
        %s380 = scalar_lea.vmem %s1, %s379
        %s381 = sadd.s32 %s25, 1
      $region56: #{basic_block1_forward.4} parent=47 // pred_fallthru
        _
      // Predicated region
      $region57: #{basic_block1_forward.4} parent=47 // pred_check
        %p382 = pneg %p111
      $region58: #{basic_block1_forward.4} parent=47 // pred_check_branch
        %384 = sbr.rel (%p382) target = $region60
      $region59: #{basic_block1_forward.4} parent=47 // pred_region
        %s385 = sadd.s32 %s25, 2
        %p386 = scmp.lt.s32.totalorder %s24, 1
        %s387 = scalar_select %p386, %s24, 1
        %p388 = scmp.lt.s32.totalorder %s385, 17
        %s389 = scalar_select %p388, %s385, 17
        %s390 = smul.addr %s389, 3
        %s391 = smul.addr %s387, 54
        %s392 = sadd.s32 %s390, %s391
        %s393 = smul.addr %s392, 4
        %s394 = scalar_lea.vmem %s2, %s393
        %s395 = sadd.s32 %s25, 2
      $region60: #{basic_block1_forward.4} parent=47 // pred_fallthru
        _
    $region48: #{basic_block1_forward.4} parent=5 // pred_fallthru
      _
    %p396 = scmp.le.s32.totalorder 1, %s17
    %p397 = scmp.lt.s32.totalorder %s17, 33
    %p398 = pnand %p396, %p397
    %p399 = pneg %p398
    // Predicated region
    $region61: #{basic_block1_forward.4} parent=5 // pred_check
      _
    $region62: #{basic_block1_forward.4} parent=5 // pred_check_branch
      %401 = sbr.rel (%p398) target = $region64
    $region63: #{basic_block1_forward.4} parent=5 // pred_region
      %s402 = ssub.s32 %s17, 1
      %p403 = scmp.lt.s32.totalorder %s26, 1
      %s404 = scalar_select %p403, %s26, 1
      %p405 = scmp.lt.s32.totalorder %s27, 17
      %s406 = scalar_select %p405, %s27, 17
      %s407 = smul.addr %s406, 3
      %s408 = smul.addr %s404, 54
      %s409 = sadd.s32 %s407, %s408
      %s410 = smul.addr %s409, 4
      %s411 = scalar_lea.vmem %s0, %s410
      %p412 = pneg %p57
      %p413 = pneg %p54
      %s414 = sadd.s32 %s27, 1
      %p415 = scmp.lt.s32.totalorder %s26, 1
      %s416 = scalar_select %p415, %s26, 1
      %p417 = scmp.lt.s32.totalorder %s414, 17
      %s418 = scalar_select %p417, %s414, 17
      %s419 = smul.addr %s418, 3
      %s420 = smul.addr %s416, 54
      %s421 = sadd.s32 %s419, %s420
      %s422 = smul.addr %s421, 4
      %s423 = scalar_lea.vmem %s1, %s422
      %p424 = pneg %p87
      %p425 = pneg %p84
      %s426 = sadd.s32 %s27, 2
      %p427 = scmp.lt.s32.totalorder %s26, 1
      %s428 = scalar_select %p427, %s26, 1
      %p429 = scmp.lt.s32.totalorder %s426, 17
      %s430 = scalar_select %p429, %s426, 17
      %s431 = smul.addr %s430, 3
      %s432 = smul.addr %s428, 54
      %s433 = sadd.s32 %s431, %s432
      %s434 = smul.addr %s433, 4
      %s435 = scalar_lea.vmem %s2, %s434
      %p436 = pneg %p117
      %p437 = pneg %p114
      %p438 = pneg %p138
      %p439 = pneg %p135
      %p440 = pneg %p159
      %p441 = pneg %p156
      %p442 = pneg %p180
      %p443 = pneg %p177
      %p444 = pneg %p201
      %p445 = pneg %p198
      %p446 = pneg %p222
      %p447 = pneg %p219
      %p448 = pneg %p243
      %p449 = pneg %p240
      %p450 = pneg %p264
      %p451 = pneg %p261
      %p452 = pneg %p285
      %p453 = pneg %p282
      %p454 = pneg %p313
      %p455 = pneg %p310
      %p456 = scmp.lt.s32.totalorder %s26, 1
      %s457 = scalar_select %p456, %s26, 1
      %p458 = scmp.lt.s32.totalorder %s27, 15
      %s459 = scalar_select %p458, %s27, 15
      %s460 = smul.addr %s459, 2
      %s461 = smul.addr %s457, 32
      %s462 = sadd.s32 %s460, %s461
      %s463 = smul.addr %s462, 4
      %s464 = scalar_lea.vmem %s11, %s463
      %p465 = scmp.lt.s32.totalorder %s26, 1
      %s466 = scalar_select %p465, %s26, 1
      %p467 = scmp.lt.s32.totalorder %s27, 17
      %s468 = scalar_select %p467, %s27, 17
      %s469 = smul.addr %s468, 3
      %s470 = smul.addr %s466, 54
      %s471 = sadd.s32 %s469, %s470
      %s472 = smul.addr %s471, 4
      %s473 = scalar_lea.vmem %s0, %s472
      %s474 = sadd.s32 %s27, 1
      %p475 = scmp.lt.s32.totalorder %s26, 1
      %s476 = scalar_select %p475, %s26, 1
      %p477 = scmp.lt.s32.totalorder %s474, 17
      %s478 = scalar_select %p477, %s474, 17
      %s479 = smul.addr %s478, 3
      %s480 = smul.addr %s476, 54
      %s481 = sadd.s32 %s479, %s480
      %s482 = smul.addr %s481, 4
      %s483 = scalar_lea.vmem %s1, %s482
      %s484 = sadd.s32 %s27, 1
      %s485 = sadd.s32 %s27, 2
      %p486 = scmp.lt.s32.totalorder %s26, 1
      %s487 = scalar_select %p486, %s26, 1
      %p488 = scmp.lt.s32.totalorder %s485, 17
      %s489 = scalar_select %p488, %s485, 17
      %s490 = smul.addr %s489, 3
      %s491 = smul.addr %s487, 54
      %s492 = sadd.s32 %s490, %s491
      %s493 = smul.addr %s492, 4
      %s494 = scalar_lea.vmem %s2, %s493
      %s495 = sadd.s32 %s27, 2
      %p496 = scmp.lt.s32.totalorder %s26, 1
      %s497 = scalar_select %p496, %s26, 1
      %p498 = scmp.lt.s32.totalorder %s27, 15
      %s499 = scalar_select %p498, %s27, 15
      %s500 = smul.addr %s499, 2
      %s501 = smul.addr %s497, 32
      %s502 = sadd.s32 %s500, %s501
      %s503 = smul.addr %s502, 4
      %s504 = scalar_lea.vmem %s11, %s503
      %v506 = vld [vmem:[%s3] sm:$0xf]
      %v507 = vld [vmem:[%s3 + $0x4] sm:$0xf]
      %v508 = vld [vmem:[%s3 + $0x8] sm:$0xf]
      %v509 = vld [vmem:[%s3 + $0xc] sm:$0xf]
      %v510 = vld [vmem:[%s3 + $0x10] sm:$0xf]
      %v511 = vld [vmem:[%s3 + $0x14] sm:$0xf]
      %v512 = vld [vmem:[%s3 + $0x18] sm:$0xf]
      %v513 = vld [vmem:[%s3 + $0x1c] sm:$0xf]
      %v514 = vld [vmem:[%s4] sm:$0x1]
      %v515 = vld [vmem:[%s5] sm:$0x1]
      %v516 = vlaneseq
      %v517 = vshrl.u32 %v516, 7
      %v518 = vadd.s32 %v517, 8
      %v519 = vadd.s32 %v517, 16
      %vm520 = vcmp.ge.s32.totalorder %v517, 1
      %vm521 = vcmp.ge.s32.totalorder %v518, 1
      %vm522 = vcmp.ge.s32.totalorder %v519, 1
      %vm523 = vcmp.le.s32.totalorder %v517, 16
      %vm524 = vcmp.le.s32.totalorder %v518, 16
      %vm525 = vcmp.le.s32.totalorder %v519, 16
      %vm526 = vmand %vm520, %vm523
      %vm527 = vmand %vm521, %vm524
      %vm528 = vmand %vm522, %vm525
      %v529 = vld [vmem:[%s473] sm:$0xf]
      %v530 = vld [vmem:[%s473 + $0x4] sm:$0xf]
      %v531 = vld [vmem:[%s473 + $0x8] sm:$0x1]
      %v535 = vunpack.c.l.b16 %v529
      %v536 = vunpack.c.l.b16 %v530
      %v537 = vunpack.c.l.b16 %v531
      %v538 = vpack.c.b16 %v536, %v535
      %v539 = vpack.c.b16 %v537, %v537
      %v548 = vunpack.c.l.b16 %v506
      %v549 = vunpack.c.l.b16 %v507
      %v550 = vunpack.c.l.b16 %v508
      %v551 = vunpack.c.l.b16 %v509
      %v552 = vunpack.c.l.b16 %v510
      %v553 = vunpack.c.l.b16 %v511
      %v554 = vunpack.c.l.b16 %v512
      %v555 = vunpack.c.l.b16 %v513
      %v556 = vpack.c.b16 %v549, %v548
      %v557 = vpack.c.b16 %v551, %v550
      %v558 = vpack.c.b16 %v553, %v552
      %v559 = vpack.c.b16 %v555, %v554
      %vm564 = vcmask 523264
      %v566 = vsel %vm564, %v538, 0
      %v569 = vsel %vm564, %v539, 0
      %571 = vmatprep.subr.bf16.mxu0 0
      %572 = vmatpush1.bf16.msra.mxu0 %v556
      %573 = vmatprep.subr.bf16.mxu0 0
      %574 = vmatpush1.bf16.msra.mxu0 %v557
      %575 = vmatprep.subr.bf16.mxu0 0
      %576 = vmatpush1.bf16.msra.mxu0 %v558
      %577 = vmatprep.subr.bf16.mxu0 0
      %578 = vmatpush1.bf16.msra.mxu0 %v559
      %579 = vmatprep.subr.bf16.mxu0 0
      %580 = vmatpush1.bf16.msra.mxu0 0
      %581 = vmatprep.subr.bf16.mxu0 0
      %582 = vmatpush1.bf16.msra.mxu0 0
      %583 = vmatprep.subr.bf16.mxu0 0
      %584 = vmatpush1.bf16.msra.mxu0 0
      %585 = vmatprep.subr.bf16.mxu0 0
      %586 = vmatpush1.bf16.msra.mxu0 0
      %587 = vmatprep.subr.bf16.mxu0 0
      %588 = vmatpush1.bf16.msra.mxu0 0
      %589 = vmatprep.subr.bf16.mxu0 0
      %590 = vmatpush1.bf16.msra.mxu0 0
      %591 = vmatprep.subr.bf16.mxu0 0
      %592 = vmatpush1.bf16.msra.mxu0 0
      %593 = vmatprep.subr.bf16.mxu0 0
      %594 = vmatpush1.bf16.msra.mxu0 0
      %595 = vmatprep.subr.bf16.mxu0 0
      %596 = vmatpush1.bf16.msra.mxu0 0
      %597 = vmatprep.subr.bf16.mxu0 0
      %598 = vmatpush1.bf16.msra.mxu0 0
      %599 = vmatprep.subr.bf16.mxu0 0
      %600 = vmatpush1.bf16.msra.mxu0 0
      %601 = vmatprep.subr.bf16.mxu0 0
      %602 = vmatpush1.bf16.msra.mxu0 0
      %603 = vmatprep.mubr.bf16.mxu0 0
      %604 = vmatmul.mubr.bf16.gmra.mrb[0].mxu0 %v566
      %v605 = vpop.f32.mrb[0].mxu0
      %v606 = vadd.f32 0.0, %v605
      %v607 = vpop.f32.mrb[0].mxu0
      %v608 = vpop.f32.mrb[0].mxu0
      %v609 = vadd.f32 0.0, %v608
      %v610 = vpop.f32.mrb[0].mxu0
      %611 = vmatprep.mubr.bf16.mxu0 0
      %612 = vmatmul.mubr.bf16.gmra.mrb[0].mxu0 %v569
      %v613 = vpop.f32.mrb[0].mxu0
      %v614 = vadd.f32 0.0, %v613
      %v615 = vpop.f32.mrb[0].mxu0
      %v616 = vpop.f32.mrb[0].mxu0
      %v617 = vpop.f32.mrb[0].mxu0
      %618 = vdwg.mxu0
      %v620 = vlaneseq
      %v621 = vshrl.u32 %v620, 7
      %v622 = vsub.s32 0, %v621
      %v623 = vrot.slane %v514, %v622
      %v625 = vmul.f32 %v606, %v623
      %v626 = vmul.f32 %v609, %v623
      %v627 = vmul.f32 %v614, %v623
      %v629 = vlaneseq
      %v630 = vshrl.u32 %v629, 7
      %v631 = vsub.s32 0, %v630
      %v632 = vrot.slane %v515, %v631
      %v634 = vadd.f32 %v625, %v632
      %v635 = vadd.f32 %v626, %v632
      %v636 = vadd.f32 %v627, %v632
      %v637 = vmax.f32 %v634, 0.0
      %v638 = vmax.f32 %v635, 0.0
      %v639 = vmax.f32 %v636, 0.0
      %s640 = ssub.s32 %s27, 1
      %p641 = scmp.ge.s32.totalorder %s640, 0
      %p642 = scmp.lt.s32.totalorder %s640, 16
      %p643 = pnand %p641, %p642
      %p644 = pneg %p643
      %v645 = vsel %vm526, 1, 0
      %v646 = vsel %vm527, 1, 0
      %v647 = vsel %vm528, 1, 0
      %vm648 = vcmp.eq.s32.totalorder %v645, 1
      %vm649 = vcmp.eq.s32.totalorder %v646, 1
      %vm650 = vcmp.eq.s32.totalorder %v647, 1
      %v651 = vsel %vm648, %v637, 0.0
      %v652 = vsel %vm649, %v638, 0.0
      %v653 = vsel %vm650, %v639, 0.0
      %s654 = scalar_select %p644, 1.0, 0.0
      %v655 = vstv %s654
      %v656 = vmul.f32 %v651, %v655
      %v657 = vmul.f32 %v652, %v655
      %v658 = vmul.f32 %v653, %v655
      %v659 = vld [vmem:[%s483] sm:$0xf]
      %v660 = vld [vmem:[%s483 + $0x4] sm:$0xf]
      %v661 = vld [vmem:[%s483 + $0x8] sm:$0x1]
      %v665 = vunpack.c.l.b16 %v659
      %v666 = vunpack.c.l.b16 %v660
      %v667 = vunpack.c.l.b16 %v661
      %v668 = vpack.c.b16 %v666, %v665
      %v669 = vpack.c.b16 %v667, %v667
      %v671 = vsel %vm564, %v668, 0
      %v674 = vsel %vm564, %v669, 0
      %676 = vmatprep.subr.bf16.mxu0 0
      %677 = vmatpush1.bf16.msra.mxu0 %v556
      %678 = vmatprep.subr.bf16.mxu0 0
      %679 = vmatpush1.bf16.msra.mxu0 %v557
      %680 = vmatprep.subr.bf16.mxu0 0
      %681 = vmatpush1.bf16.msra.mxu0 %v558
      %682 = vmatprep.subr.bf16.mxu0 0
      %683 = vmatpush1.bf16.msra.mxu0 %v559
      %684 = vmatprep.subr.bf16.mxu0 0
      %685 = vmatpush1.bf16.msra.mxu0 0
      %686 = vmatprep.subr.bf16.mxu0 0
      %687 = vmatpush1.bf16.msra.mxu0 0
      %688 = vmatprep.subr.bf16.mxu0 0
      %689 = vmatpush1.bf16.msra.mxu0 0
      %690 = vmatprep.subr.bf16.mxu0 0
      %691 = vmatpush1.bf16.msra.mxu0 0
      %692 = vmatprep.subr.bf16.mxu0 0
      %693 = vmatpush1.bf16.msra.mxu0 0
      %694 = vmatprep.subr.bf16.mxu0 0
      %695 = vmatpush1.bf16.msra.mxu0 0
      %696 = vmatprep.subr.bf16.mxu0 0
      %697 = vmatpush1.bf16.msra.mxu0 0
      %698 = vmatprep.subr.bf16.mxu0 0
      %699 = vmatpush1.bf16.msra.mxu0 0
      %700 = vmatprep.subr.bf16.mxu0 0
      %701 = vmatpush1.bf16.msra.mxu0 0
      %702 = vmatprep.subr.bf16.mxu0 0
      %703 = vmatpush1.bf16.msra.mxu0 0
      %704 = vmatprep.subr.bf16.mxu0 0
      %705 = vmatpush1.bf16.msra.mxu0 0
      %706 = vmatprep.subr.bf16.mxu0 0
      %707 = vmatpush1.bf16.msra.mxu0 0
      %708 = vmatprep.mubr.bf16.mxu0 0
      %709 = vmatmul.mubr.bf16.gmra.mrb[0].mxu0 %v671
      %v710 = vpop.f32.mrb[0].mxu0
      %v711 = vadd.f32 0.0, %v710
      %v712 = vpop.f32.mrb[0].mxu0
      %v713 = vpop.f32.mrb[0].mxu0
      %v714 = vadd.f32 0.0, %v713
      %v715 = vpop.f32.mrb[0].mxu0
      %716 = vmatprep.mubr.bf16.mxu0 0
      %717 = vmatmul.mubr.bf16.gmra.mrb[0].mxu0 %v674
      %v718 = vpop.f32.mrb[0].mxu0
      %v719 = vadd.f32 0.0, %v718
      %v720 = vpop.f32.mrb[0].mxu0
      %v721 = vpop.f32.mrb[0].mxu0
      %v722 = vpop.f32.mrb[0].mxu0
      %723 = vdwg.mxu0
      %v724 = vmul.f32 %v711, %v623
      %v725 = vmul.f32 %v714, %v623
      %v726 = vmul.f32 %v719, %v623
      %v727 = vadd.f32 %v724, %v632
      %v728 = vadd.f32 %v725, %v632
      %v729 = vadd.f32 %v726, %v632
      %v730 = vmax.f32 %v727, 0.0
      %v731 = vmax.f32 %v728, 0.0
      %v732 = vmax.f32 %v729, 0.0
      %p733 = scmp.ge.s32.totalorder %s27, 0
      %p734 = scmp.lt.s32.totalorder %s27, 16
      %p735 = pnand %p733, %p734
      %p736 = pneg %p735
      %v737 = vsel %vm648, %v730, 0.0
      %v738 = vsel %vm649, %v731, 0.0
      %v739 = vsel %vm650, %v732, 0.0
      %s740 = scalar_select %p736, 1.0, 0.0
      %v741 = vstv %s740
      %v742 = vmul.f32 %v737, %v741
      %v743 = vmul.f32 %v738, %v741
      %v744 = vmul.f32 %v739, %v741
      %v745 = vld [vmem:[%s494] sm:$0xf]
      %v746 = vld [vmem:[%s494 + $0x4] sm:$0xf]
      %v747 = vld [vmem:[%s494 + $0x8] sm:$0x1]
      %v751 = vunpack.c.l.b16 %v745
      %v752 = vunpack.c.l.b16 %v746
      %v753 = vunpack.c.l.b16 %v747
      %v754 = vpack.c.b16 %v752, %v751
      %v755 = vpack.c.b16 %v753, %v753
      %v757 = vsel %vm564, %v754, 0
      %v760 = vsel %vm564, %v755, 0
      %762 = vmatprep.subr.bf16.mxu0 0
      %763 = vmatpush1.bf16.msra.mxu0 %v556
      %764 = vmatprep.subr.bf16.mxu0 0
      %765 = vmatpush1.bf16.msra.mxu0 %v557
      %766 = vmatprep.subr.bf16.mxu0 0
      %767 = vmatpush1.bf16.msra.mxu0 %v558
      %768 = vmatprep.subr.bf16.mxu0 0
      %769 = vmatpush1.bf16.msra.mxu0 %v559
      %770 = vmatprep.subr.bf16.mxu0 0
      %771 = vmatpush1.bf16.msra.mxu0 0
      %772 = vmatprep.subr.bf16.mxu0 0
      %773 = vmatpush1.bf16.msra.mxu0 0
      %774 = vmatprep.subr.bf16.mxu0 0
      %775 = vmatpush1.bf16.msra.mxu0 0
      %776 = vmatprep.subr.bf16.mxu0 0
      %777 = vmatpush1.bf16.msra.mxu0 0
      %778 = vmatprep.subr.bf16.mxu0 0
      %779 = vmatpush1.bf16.msra.mxu0 0
      %780 = vmatprep.subr.bf16.mxu0 0
      %781 = vmatpush1.bf16.msra.mxu0 0
      %782 = vmatprep.subr.bf16.mxu0 0
      %783 = vmatpush1.bf16.msra.mxu0 0
      %784 = vmatprep.subr.bf16.mxu0 0
      %785 = vmatpush1.bf16.msra.mxu0 0
      %786 = vmatprep.subr.bf16.mxu0 0
      %787 = vmatpush1.bf16.msra.mxu0 0
      %788 = vmatprep.subr.bf16.mxu0 0
      %789 = vmatpush1.bf16.msra.mxu0 0
      %790 = vmatprep.subr.bf16.mxu0 0
      %791 = vmatpush1.bf16.msra.mxu0 0
      %792 = vmatprep.subr.bf16.mxu0 0
      %793 = vmatpush1.bf16.msra.mxu0 0
      %794 = vmatprep.mubr.bf16.mxu0 0
      %795 = vmatmul.mubr.bf16.gmra.mrb[0].mxu0 %v757
      %v796 = vpop.f32.mrb[0].mxu0
      %v797 = vadd.f32 0.0, %v796
      %v798 = vpop.f32.mrb[0].mxu0
      %v799 = vpop.f32.mrb[0].mxu0
      %v800 = vadd.f32 0.0, %v799
      %v801 = vpop.f32.mrb[0].mxu0
      %802 = vmatprep.mubr.bf16.mxu0 0
      %803 = vmatmul.mubr.bf16.gmra.mrb[0].mxu0 %v760
      %v804 = vpop.f32.mrb[0].mxu0
      %v805 = vadd.f32 0.0, %v804
      %v806 = vpop.f32.mrb[0].mxu0
      %v807 = vpop.f32.mrb[0].mxu0
      %v808 = vpop.f32.mrb[0].mxu0
      %809 = vdwg.mxu0
      %v810 = vmul.f32 %v797, %v623
      %v811 = vmul.f32 %v800, %v623
      %v812 = vmul.f32 %v805, %v623
      %v813 = vadd.f32 %v810, %v632
      %v814 = vadd.f32 %v811, %v632
      %v815 = vadd.f32 %v812, %v632
      %v816 = vmax.f32 %v813, 0.0
      %v817 = vmax.f32 %v814, 0.0
      %v818 = vmax.f32 %v815, 0.0
      %s819 = sadd.s32 %s27, 1
      %p820 = scmp.ge.s32.totalorder %s819, 0
      %p821 = scmp.lt.s32.totalorder %s819, 16
      %p822 = pnand %p820, %p821
      %p823 = pneg %p822
      %v824 = vsel %vm648, %v816, 0.0
      %v825 = vsel %vm649, %v817, 0.0
      %v826 = vsel %vm650, %v818, 0.0
      %s827 = scalar_select %p823, 1.0, 0.0
      %v828 = vstv %s827
      %v829 = vmul.f32 %v824, %v828
      %v830 = vmul.f32 %v825, %v828
      %v831 = vmul.f32 %v826, %v828
      %v832 = vld [vmem:[%s6] sm:$0xff]
      %v833 = vld [vmem:[%s6 + $0x8] sm:$0x1]
      %v834 = vlaneseq
      %v835 = vshrl.u32 %v834, 7
      %v836 = vsub.s32 0, %v835
      %v837 = vrot.slane %v832, %v836
      %v838 = vmul.f32 %v656, %v837
      %v839 = vmul.f32 %v657, %v837
      %v840 = vadd.f32 %v838, 0.0
      %v841 = vadd.f32 %v839, 0.0
      %v842 = vlaneseq
      %v843 = vshrl.u32 %v842, 7
      %v844 = vsub.s32 1, %v843
      %v845 = vrot.slane %v832, %v844
      %v846 = vmul.f32 %v656, %v845
      %v847 = vmul.f32 %v657, %v845
      %v848 = vmul.f32 %v658, %v845
      %vm852 = vcmask 1046528
      %v853 = vrot.slane %v846, 1
      %v854 = vrot.slane %v847, 1
      %v855 = vsel %vm852, %v853, %v854
      %v856 = vrot.slane %v848, 1
      %v857 = vsel %vm852, %v854, %v856
      %v860 = vadd.f32 %v840, %v855
      %v861 = vadd.f32 %v841, %v857
      %v862 = vlaneseq
      %v863 = vshrl.u32 %v862, 7
      %v864 = vsub.s32 2, %v863
      %v865 = vrot.slane %v832, %v864
      %v866 = vmul.f32 %v656, %v865
      %v867 = vmul.f32 %v657, %v865
      %v868 = vmul.f32 %v658, %v865
      %vm872 = vcmask 1045504
      %v873 = vrot.slane %v866, 2
      %v874 = vrot.slane %v867, 2
      %v875 = vsel %vm872, %v873, %v874
      %v876 = vrot.slane %v868, 2
      %v877 = vsel %vm872, %v874, %v876
      %v880 = vadd.f32 %v860, %v875
      %v881 = vadd.f32 %v861, %v877
      %v882 = vlaneseq
      %v883 = vshrl.u32 %v882, 7
      %v884 = vsub.s32 3, %v883
      %v885 = vrot.slane %v832, %v884
      %v886 = vmul.f32 %v742, %v885
      %v887 = vmul.f32 %v743, %v885
      %v888 = vadd.f32 %v880, %v886
      %v889 = vadd.f32 %v881, %v887
      %v890 = vlaneseq
      %v891 = vshrl.u32 %v890, 7
      %v892 = vsub.s32 4, %v891
      %v893 = vrot.slane %v832, %v892
      %v894 = vmul.f32 %v742, %v893
      %v895 = vmul.f32 %v743, %v893
      %v896 = vmul.f32 %v744, %v893
      %v900 = vrot.slane %v894, 1
      %v901 = vrot.slane %v895, 1
      %v902 = vsel %vm852, %v900, %v901
      %v903 = vrot.slane %v896, 1
      %v904 = vsel %vm852, %v901, %v903
      %v907 = vadd.f32 %v888, %v902
      %v908 = vadd.f32 %v889, %v904
      %v909 = vlaneseq
      %v910 = vshrl.u32 %v909, 7
      %v911 = vsub.s32 5, %v910
      %v912 = vrot.slane %v832, %v911
      %v913 = vmul.f32 %v742, %v912
      %v914 = vmul.f32 %v743, %v912
      %v915 = vmul.f32 %v744, %v912
      %v919 = vrot.slane %v913, 2
      %v920 = vrot.slane %v914, 2
      %v921 = vsel %vm872, %v919, %v920
      %v922 = vrot.slane %v915, 2
      %v923 = vsel %vm872, %v920, %v922
      %v926 = vadd.f32 %v907, %v921
      %v927 = vadd.f32 %v908, %v923
      %v928 = vlaneseq
      %v929 = vshrl.u32 %v928, 7
      %v930 = vsub.s32 6, %v929
      %v931 = vrot.slane %v832, %v930
      %v932 = vmul.f32 %v829, %v931
      %v933 = vmul.f32 %v830, %v931
      %v934 = vadd.f32 %v926, %v932
      %v935 = vadd.f32 %v927, %v933
      %v936 = vlaneseq
      %v937 = vshrl.u32 %v936, 7
      %v938 = vsub.s32 7, %v937
      %v939 = vrot.slane %v832, %v938
      %v940 = vmul.f32 %v829, %v939
      %v941 = vmul.f32 %v830, %v939
      %v942 = vmul.f32 %v831, %v939
      %v946 = vrot.slane %v940, 1
      %v947 = vrot.slane %v941, 1
      %v948 = vsel %vm852, %v946, %v947
      %v949 = vrot.slane %v942, 1
      %v950 = vsel %vm852, %v947, %v949
      %v953 = vadd.f32 %v934, %v948
      %v954 = vadd.f32 %v935, %v950
      %v955 = vlaneseq
      %v956 = vshrl.u32 %v955, 7
      %v957 = vsub.s32 0, %v956
      %v958 = vrot.slane %v833, %v957
      %v959 = vmul.f32 %v829, %v958
      %v960 = vmul.f32 %v830, %v958
      %v961 = vmul.f32 %v831, %v958
      %v965 = vrot.slane %v959, 2
      %v966 = vrot.slane %v960, 2
      %v967 = vsel %vm872, %v965, %v966
      %v968 = vrot.slane %v961, 2
      %v969 = vsel %vm872, %v966, %v968
      %v972 = vadd.f32 %v953, %v967
      %v973 = vadd.f32 %v954, %v969
      %v974 = vld [vmem:[%s7] sm:$0x1]
      %v976 = vlaneseq
      %v977 = vshrl.u32 %v976, 7
      %v978 = vsub.s32 0, %v977
      %v979 = vrot.slane %v974, %v978
      %v981 = vmul.f32 %v972, %v979
      %v982 = vmul.f32 %v973, %v979
      %v983 = vld [vmem:[%s8] sm:$0x1]
      %v985 = vlaneseq
      %v986 = vshrl.u32 %v985, 7
      %v987 = vsub.s32 0, %v986
      %v988 = vrot.slane %v983, %v987
      %v990 = vadd.f32 %v981, %v988
      %v991 = vadd.f32 %v982, %v988
      %v992 = vmax.f32 %v990, 0.0
      %v993 = vmax.f32 %v991, 0.0
      %vm996 = vcmask 1040384
      %v997 = vrot.slane %v992, 7
      %v998 = vrot.slane %v993, 7
      %v999 = vsel %vm996, %v997, %v998
      %1000 = vrot.lane.b32.xlu0 %v997, 16
      %v1001 = vpop.permute.xlu0 %1000
      %1002 = vrot.lane.b32.xlu0 %v999, 16
      %v1003 = vpop.permute.xlu0 %1002
      %1004 = vrot.lane.b32.xlu0 %v998, 16
      %v1005 = vpop.permute.xlu0 %1004
      %vm1009 = vcmask 130048
      %v1010 = vsel %vm1009, %v742, %v1001
      %v1011 = vsel %vm1009, %v743, %v1003
      %v1012 = vsel %vm1009, %v744, %v1005
      %v1013 = vld [vmem:[%s9] sm:$0x1]
      %v1015 = vlaneseq
      %v1016 = vshrl.u32 %v1015, 7
      %v1017 = vsub.s32 0, %v1016
      %v1018 = vrot.slane %v1013, %v1017
      %v1020 = vmul.f32 %v1010, %v1018
      %v1021 = vmul.f32 %v1011, %v1018
      %v1022 = vmul.f32 %v1012, %v1018
      %v1023 = vld [vmem:[%s10] sm:$0x1]
      %v1025 = vlaneseq
      %v1026 = vshrl.u32 %v1025, 7
      %v1027 = vsub.s32 0, %v1026
      %v1028 = vrot.slane %v1023, %v1027
      %v1030 = vadd.f32 %v1020, %v1028
      %v1031 = vadd.f32 %v1021, %v1028
      %v1032 = vadd.f32 %v1022, %v1028
      %v1033 = vmax.f32 %v1030, 0.0
      %v1034 = vmax.f32 %v1031, 0.0
      %v1035 = vmax.f32 %v1032, 0.0
      %v1036 = vmin.f32 %v1033, 6.0
      %v1037 = vmin.f32 %v1034, 6.0
      %v1038 = vmin.f32 %v1035, 6.0
      %v1039 = vpack.c.bf16 %v1037, %v1036
      %v1040 = vpack.c.bf16 %v1038, %v1038
      %v1043 = vunpack.c.l.b16 %v1039
      %v1044 = vunpack.c.h.b16 %v1039
      %v1045 = vunpack.c.l.b16 %v1040
      %v1046 = vpack.c.b16 %v1043, %v1043
      %v1047 = vpack.c.b16 %v1044, %v1044
      %v1048 = vpack.c.b16 %v1045, %v1045
      %vm1049 = vsmask.f32 3328
      %vm1050 = vsmask.f32 7440
      %vm1051 = vmor %vm1049, %vm1050
      %v1053 = vshrl.u32 %v1046, 16
      %v1055 = vrot.slane %v1053, 4
      %v1056 = vshll.u32 %v1046, 16
      %v1058 = vrot.slane %v1056, 5
      %v1059 = vor.u32 %v1055, %v1058
      %v1060 = vrot.slane %v1059, 4
      %v1062 = vshll.u32 %v1047, 16
      %v1064 = vrot.slane %v1062, 5
      %v1065 = vsel %vm1051, %v1060, %v1064
      %v1066 = vshrl.u32 %v1047, 16
      %v1068 = vrot.slane %v1066, 4
      %v1069 = vor.u32 %v1068, %v1064
      %v1070 = vrot.slane %v1069, 4
      %v1072 = vshll.u32 %v1048, 16
      %v1074 = vrot.slane %v1072, 5
      %v1075 = vsel %vm1051, %v1070, %v1074
      %vm1078 = vcmask 257024
      %1079 = vst.msk [vmem:[%s504] sm:$0xf] %vm1078, %v1065
      %1080 = vst.msk [vmem:[%s504 + $0x4] sm:$0xf] %vm1078, %v1075
      %p1081 = scmp.lt.s32.totalorder %s26, 1
      %s1082 = scalar_select %p1081, %s26, 1
      %p1083 = scmp.lt.s32.totalorder %s27, 15
      %s1084 = scalar_select %p1083, %s27, 15
      %s1085 = smul.addr %s1084, 2
      %s1086 = smul.addr %s1082, 32
      %s1087 = sadd.s32 %s1085, %s1086
      %s1088 = smul.addr %s1087, 4
      %s1089 = scalar_lea.vmem %s11, %s1088
      // Predicated region
      $region65: #{basic_block1_forward.4} parent=63 // pred_check
        %p1090 = pneg %p310
      $region66: #{basic_block1_forward.4} parent=63 // pred_check_branch
        %1092 = sbr.rel (%p1090) target = $region68
      $region67: #{basic_block1_forward.4} parent=63 // pred_region
        _
      $region68: #{basic_block1_forward.4} parent=63 // pred_fallthru
        _
    $region64: #{basic_block1_forward.4} parent=5 // pred_fallthru
      _
    %p1093 = scmp.le.s32.totalorder 2, %s17
    // Predicated region
    $region69: #{basic_block1_forward.4} parent=5 // pred_check
      %p1094 = pneg %p1093
    $region70: #{basic_block1_forward.4} parent=5 // pred_check_branch
      %1096 = sbr.rel (%p1094) target = $region72
    $region71: #{basic_block1_forward.4} parent=5 // pred_region
      %s1097 = ssub.s32 %s17, 2
      // Predicated region
      $region73: #{basic_block1_forward.4} parent=71 // pred_check
        %p1098 = pneg %p316
      $region74: #{basic_block1_forward.4} parent=71 // pred_check_branch
        %1100 = sbr.rel (%p1098) target = $region76
      $region75: #{basic_block1_forward.4} parent=71 // pred_region
        %p1101 = scmp.lt.s32.totalorder %s28, 1
        %s1102 = scalar_select %p1101, %s28, 1
        %p1103 = scmp.lt.s32.totalorder %s29, 15
        %s1104 = scalar_select %p1103, %s29, 15
        %s1105 = smul.addr %s1104, 2
        %s1106 = smul.addr %s1102, 32
        %s1107 = sadd.s32 %s1105, %s1106
        %s1108 = smul.addr %s1107, 4
        %s1109 = scalar_lea.vmem %s11, %s1108
      $region76: #{basic_block1_forward.4} parent=71 // pred_fallthru
        _
    $region72: #{basic_block1_forward.4} parent=5 // pred_fallthru
      _
  $region6: #{basic_block1_forward.4} parent=0 // loop_footer
    %s21 = sadd.s32 1, %s17
  $region7: #{basic_block1_forward.4} parent=0 // loop_footer_branch
    %16 = sbr.rel target = $region3
  $region8: #{basic_block1_forward.4} parent=0 // loop_exit
    _

// kernel: basic_block1_forward.5
$region0: #{basic_block1_forward.5}
  #allocation0 [shape = 'u32[]', space=smem, size = 0x4, offset = 0x4, fixed_abs, tag = 'smem constant byte address 0x4 - core index']
  #allocation1 [shape = 'u32[144,128]{1,0:T(1,128)}', space=vmem, size = 0x12000, scoped, tag = 'internal scratch']
  %s0 = inlined_call_operand.vmem [shape: bf16[2,18,18,32], index: 0, kind: input, shape index: {}, may-alias: {0,1,2}]
  %s1 = inlined_call_operand.vmem [shape: bf16[2,18,18,32], index: 1, kind: input, shape index: {}, may-alias: {0,1,2}]
  %s2 = inlined_call_operand.vmem [shape: bf16[2,18,18,32], index: 2, kind: input, shape index: {}, may-alias: {0,1,2}]
  %s3 = inlined_call_operand.vmem [shape: bf16[32,32], index: 3, kind: input, shape index: {}]
  %s4 = inlined_call_operand.vmem [shape: f32[1,32], index: 4, kind: input, shape index: {}]
  %s5 = inlined_call_operand.vmem [shape: f32[1,32], index: 5, kind: input, shape index: {}]
  %s6 = inlined_call_operand.vmem [shape: f32[9,32], index: 6, kind: input, shape index: {}]
  %s7 = inlined_call_operand.vmem [shape: f32[1,32], index: 7, kind: input, shape index: {}]
  %s8 = inlined_call_operand.vmem [shape: f32[1,32], index: 8, kind: input, shape index: {}]
  %s9 = inlined_call_operand.vmem [shape: f32[1,64], index: 9, kind: input, shape index: {}]
  %s10 = inlined_call_operand.vmem [shape: f32[1,64], index: 10, kind: input, shape index: {}]
  %s11 = inlined_call_operand.vmem [shape: f32[2,16,16,64], index: 11, kind: input, shape index: {}]
  %s12 = inlined_call_operand.hbm [shape: f32[2,16,16,64], index: 12, kind: output, shape index: {}]
  %s13 = sld [smem:[#allocation0]]
  $region81: #{basic_block1_forward.5} parent=0
    _
  %s15 = ssub.s32 1, %s13
  %s16 = scalar_select 0, %s15, %s13
  $region1: #{basic_block1_forward.5} parent=0
    #allocation2 [shape = 'u8[16384]{0}', space=vmem, size = 0x4000, scoped, tag = 'output window, operand 0']
    #allocation3 [shape = 's32[2]{0}', space=sflag, size = 0x8, scoped, tag = 'scoped memory for basic_block1_forward.5']
    %17 = vsyncpa [#allocation3], 0
    %s18 = scalar_lea.sflag [#allocation3], 1
    %19 = vsyncpa %s18, 0
    loop: start=0, step=1, limit=34
    $region2: #{basic_block1_forward.5} parent=1 // loop_pre_header
      _
    $region3: #{basic_block1_forward.5} parent=1 // loop_header
      %s21 = sphi 0, %s25
      %p22 = scmp.ge.s32.totalorder %s21, 34
      %s28 = sphi 0, %s40
      %s29 = sphi 0, %s36
      %s30 = sphi 0, %s28
      %s31 = sphi 0, %s29
      %s32 = sphi 0, %s30
      %s33 = sphi 0, %s31
      %s45 = sphi 0, %s47
      %s48 = sphi 0, %s45
      %s49 = sphi 0, %s48
      %s65 = sphi 0, %s49
      %s75 = sphi 0, %s77
      %s78 = sphi 0, %s75
      %s79 = sphi 0, %s78
      %s95 = sphi 0, %s79
      %s105 = sphi 0, %s107
      %s108 = sphi 0, %s105
      %s109 = sphi 0, %s108
      %s125 = sphi 0, %s109
      %s129 = sphi 0, %s129
      %s131 = sphi 0, %s129
      %s132 = sphi 0, %s131
      %s146 = sphi 0, %s132
      %s150 = sphi 0, %s150
      %s152 = sphi 0, %s150
      %s153 = sphi 0, %s152
      %s167 = sphi 0, %s153
      %s171 = sphi 0, %s171
      %s173 = sphi 0, %s171
      %s174 = sphi 0, %s173
      %s188 = sphi 0, %s174
      %s192 = sphi 0, %s192
      %s194 = sphi 0, %s192
      %s195 = sphi 0, %s194
      %s209 = sphi 0, %s195
      %s213 = sphi 0, %s213
      %s215 = sphi 0, %s213
      %s216 = sphi 0, %s215
      %s230 = sphi 0, %s216
      %s234 = sphi 0, %s234
      %s236 = sphi 0, %s234
      %s237 = sphi 0, %s236
      %s251 = sphi 0, %s237
      %s255 = sphi 0, %s255
      %s257 = sphi 0, %s255
      %s258 = sphi 0, %s257
      %s272 = sphi 0, %s258
      %s276 = sphi 0, %s276
      %s278 = sphi 0, %s276
      %s279 = sphi 0, %s278
      %s293 = sphi 0, %s279
      %s301 = sphi 0, %s303
      %s304 = sphi 0, %s301
      %s305 = sphi 0, %s304
      %s321 = sphi 0, %s305
      %s329 = sphi 0, %s331
      %s332 = sphi 0, %s329
      %s333 = sphi 0, %s332
      %s349 = sphi 0, %s333
    $region4: #{basic_block1_forward.5} parent=1 // loop_header_branch
      %24 = sbr.rel (%p22) target = $region8
    $region5: #{basic_block1_forward.5} parent=1 // loop_body
      %s26 = ssub.s32 %s21, 1
      %s27 = ssub.s32 %s21, 2
      %s34 = sadd.s32 1, %s29
      %p35 = scmp.ge.s32.totalorder %s34, 16
      %s36 = scalar_select %p35, 0, %s34
      %s37 = sadd.s32 1, %s28
      %s38 = scalar_select %p35, %s37, %s28
      %p39 = scmp.ge.s32.totalorder %s38, 2
      %s40 = scalar_select %p39, 0, %s38
      %s41 = ssub.s32 %s28, %s40
      %s42 = ssub.s32 %s29, %s36
      %s43 = sor.u32 %s41, %s42
      %p44 = scmp.eq.s32.totalorder %s43, 0
      %s46 = sadd.s32 %s45, 1
      %s47 = scalar_select %p44, %s45, %s46
      %p50 = pneg %p44
      %p51 = scmp.eq.s32.totalorder %s21, 31
      %p52 = por %p50, %p51
      %p53 = scmp.ne.s32.totalorder %s45, %s48
      %p54 = scmp.eq.s32.totalorder %s21, 0
      %p55 = por %p53, %p54
      %p56 = scmp.ne.s32.totalorder %s45, %s48
      %p57 = scmp.eq.s32.totalorder %s26, 31
      %p58 = por %p56, %p57
      %p59 = scmp.ne.s32.totalorder %s48, %s49
      %p60 = scmp.eq.s32.totalorder %s26, 0
      %p61 = por %p59, %p60
      %p62 = scmp.ne.s32.totalorder %s48, %s49
      %p63 = scmp.eq.s32.totalorder %s27, 31
      %p64 = por %p62, %p63
      %p66 = scmp.ne.s32.totalorder %s49, %s65
      %p67 = scmp.eq.s32.totalorder %s27, 0
      %p68 = por %p66, %p67
      %s69 = sadd.s32 %s29, 1
      %s70 = sadd.s32 %s36, 1
      %s71 = ssub.s32 %s28, %s40
      %s72 = ssub.s32 %s69, %s70
      %s73 = sor.u32 %s71, %s72
      %p74 = scmp.eq.s32.totalorder %s73, 0
      %s76 = sadd.s32 %s75, 1
      %s77 = scalar_select %p74, %s75, %s76
      %p80 = pneg %p74
      %p81 = scmp.eq.s32.totalorder %s21, 31
      %p82 = por %p80, %p81
      %p83 = scmp.ne.s32.totalorder %s75, %s78
      %p84 = scmp.eq.s32.totalorder %s21, 0
      %p85 = por %p83, %p84
      %p86 = scmp.ne.s32.totalorder %s75, %s78
      %p87 = scmp.eq.s32.totalorder %s26, 31
      %p88 = por %p86, %p87
      %p89 = scmp.ne.s32.totalorder %s78, %s79
      %p90 = scmp.eq.s32.totalorder %s26, 0
      %p91 = por %p89, %p90
      %p92 = scmp.ne.s32.totalorder %s78, %s79
      %p93 = scmp.eq.s32.totalorder %s27, 31
      %p94 = por %p92, %p93
      %p96 = scmp.ne.s32.totalorder %s79, %s95
      %p97 = scmp.eq.s32.totalorder %s27, 0
      %p98 = por %p96, %p97
      %s99 = sadd.s32 %s29, 2
      %s100 = sadd.s32 %s36, 2
      %s101 = ssub.s32 %s28, %s40
      %s102 = ssub.s32 %s99, %s100
      %s103 = sor.u32 %s101, %s102
      %p104 = scmp.eq.s32.totalorder %s103, 0
      %s106 = sadd.s32 %s105, 1
      %s107 = scalar_select %p104, %s105, %s106
      %p110 = pneg %p104
      %p111 = scmp.eq.s32.totalorder %s21, 31
      %p112 = por %p110, %p111
      %p113 = scmp.ne.s32.totalorder %s105, %s108
      %p114 = scmp.eq.s32.totalorder %s21, 0
      %p115 = por %p113, %p114
      %p116 = scmp.ne.s32.totalorder %s105, %s108
      %p117 = scmp.eq.s32.totalorder %s26, 31
      %p118 = por %p116, %p117
      %p119 = scmp.ne.s32.totalorder %s108, %s109
      %p120 = scmp.eq.s32.totalorder %s26, 0
      %p121 = por %p119, %p120
      %p122 = scmp.ne.s32.totalorder %s108, %s109
      %p123 = scmp.eq.s32.totalorder %s27, 31
      %p124 = por %p122, %p123
      %p126 = scmp.ne.s32.totalorder %s109, %s125
      %p127 = scmp.eq.s32.totalorder %s27, 0
      %p128 = por %p126, %p127
      %s130 = sadd.s32 %s129, 1
      %p133 = scmp.eq.s32.totalorder %s21, 31
      %p134 = scmp.ne.s32.totalorder %s129, %s131
      %p135 = scmp.eq.s32.totalorder %s21, 0
      %p136 = por %p134, %p135
      %p137 = scmp.ne.s32.totalorder %s129, %s131
      %p138 = scmp.eq.s32.totalorder %s26, 31
      %p139 = por %p137, %p138
      %p140 = scmp.ne.s32.totalorder %s131, %s132
      %p141 = scmp.eq.s32.totalorder %s26, 0
      %p142 = por %p140, %p141
      %p143 = scmp.ne.s32.totalorder %s131, %s132
      %p144 = scmp.eq.s32.totalorder %s27, 31
      %p145 = por %p143, %p144
      %p147 = scmp.ne.s32.totalorder %s132, %s146
      %p148 = scmp.eq.s32.totalorder %s27, 0
      %p149 = por %p147, %p148
      %s151 = sadd.s32 %s150, 1
      %p154 = scmp.eq.s32.totalorder %s21, 31
      %p155 = scmp.ne.s32.totalorder %s150, %s152
      %p156 = scmp.eq.s32.totalorder %s21, 0
      %p157 = por %p155, %p156
      %p158 = scmp.ne.s32.totalorder %s150, %s152
      %p159 = scmp.eq.s32.totalorder %s26, 31
      %p160 = por %p158, %p159
      %p161 = scmp.ne.s32.totalorder %s152, %s153
      %p162 = scmp.eq.s32.totalorder %s26, 0
      %p163 = por %p161, %p162
      %p164 = scmp.ne.s32.totalorder %s152, %s153
      %p165 = scmp.eq.s32.totalorder %s27, 31
      %p166 = por %p164, %p165
      %p168 = scmp.ne.s32.totalorder %s153, %s167
      %p169 = scmp.eq.s32.totalorder %s27, 0
      %p170 = por %p168, %p169
      %s172 = sadd.s32 %s171, 1
      %p175 = scmp.eq.s32.totalorder %s21, 31
      %p176 = scmp.ne.s32.totalorder %s171, %s173
      %p177 = scmp.eq.s32.totalorder %s21, 0
      %p178 = por %p176, %p177
      %p179 = scmp.ne.s32.totalorder %s171, %s173
      %p180 = scmp.eq.s32.totalorder %s26, 31
      %p181 = por %p179, %p180
      %p182 = scmp.ne.s32.totalorder %s173, %s174
      %p183 = scmp.eq.s32.totalorder %s26, 0
      %p184 = por %p182, %p183
      %p185 = scmp.ne.s32.totalorder %s173, %s174
      %p186 = scmp.eq.s32.totalorder %s27, 31
      %p187 = por %p185, %p186
      %p189 = scmp.ne.s32.totalorder %s174, %s188
      %p190 = scmp.eq.s32.totalorder %s27, 0
      %p191 = por %p189, %p190
      %s193 = sadd.s32 %s192, 1
      %p196 = scmp.eq.s32.totalorder %s21, 31
      %p197 = scmp.ne.s32.totalorder %s192, %s194
      %p198 = scmp.eq.s32.totalorder %s21, 0
      %p199 = por %p197, %p198
      %p200 = scmp.ne.s32.totalorder %s192, %s194
      %p201 = scmp.eq.s32.totalorder %s26, 31
      %p202 = por %p200, %p201
      %p203 = scmp.ne.s32.totalorder %s194, %s195
      %p204 = scmp.eq.s32.totalorder %s26, 0
      %p205 = por %p203, %p204
      %p206 = scmp.ne.s32.totalorder %s194, %s195
      %p207 = scmp.eq.s32.totalorder %s27, 31
      %p208 = por %p206, %p207
      %p210 = scmp.ne.s32.totalorder %s195, %s209
      %p211 = scmp.eq.s32.totalorder %s27, 0
      %p212 = por %p210, %p211
      %s214 = sadd.s32 %s213, 1
      %p217 = scmp.eq.s32.totalorder %s21, 31
      %p218 = scmp.ne.s32.totalorder %s213, %s215
      %p219 = scmp.eq.s32.totalorder %s21, 0
      %p220 = por %p218, %p219
      %p221 = scmp.ne.s32.totalorder %s213, %s215
      %p222 = scmp.eq.s32.totalorder %s26, 31
      %p223 = por %p221, %p222
      %p224 = scmp.ne.s32.totalorder %s215, %s216
      %p225 = scmp.eq.s32.totalorder %s26, 0
      %p226 = por %p224, %p225
      %p227 = scmp.ne.s32.totalorder %s215, %s216
      %p228 = scmp.eq.s32.totalorder %s27, 31
      %p229 = por %p227, %p228
      %p231 = scmp.ne.s32.totalorder %s216, %s230
      %p232 = scmp.eq.s32.totalorder %s27, 0
      %p233 = por %p231, %p232
      %s235 = sadd.s32 %s234, 1
      %p238 = scmp.eq.s32.totalorder %s21, 31
      %p239 = scmp.ne.s32.totalorder %s234, %s236
      %p240 = scmp.eq.s32.totalorder %s21, 0
      %p241 = por %p239, %p240
      %p242 = scmp.ne.s32.totalorder %s234, %s236
      %p243 = scmp.eq.s32.totalorder %s26, 31
      %p244 = por %p242, %p243
      %p245 = scmp.ne.s32.totalorder %s236, %s237
      %p246 = scmp.eq.s32.totalorder %s26, 0
      %p247 = por %p245, %p246
      %p248 = scmp.ne.s32.totalorder %s236, %s237
      %p249 = scmp.eq.s32.totalorder %s27, 31
      %p250 = por %p248, %p249
      %p252 = scmp.ne.s32.totalorder %s237, %s251
      %p253 = scmp.eq.s32.totalorder %s27, 0
      %p254 = por %p252, %p253
      %s256 = sadd.s32 %s255, 1
      %p259 = scmp.eq.s32.totalorder %s21, 31
      %p260 = scmp.ne.s32.totalorder %s255, %s257
      %p261 = scmp.eq.s32.totalorder %s21, 0
      %p262 = por %p260, %p261
      %p263 = scmp.ne.s32.totalorder %s255, %s257
      %p264 = scmp.eq.s32.totalorder %s26, 31
      %p265 = por %p263, %p264
      %p266 = scmp.ne.s32.totalorder %s257, %s258
      %p267 = scmp.eq.s32.totalorder %s26, 0
      %p268 = por %p266, %p267
      %p269 = scmp.ne.s32.totalorder %s257, %s258
      %p270 = scmp.eq.s32.totalorder %s27, 31
      %p271 = por %p269, %p270
      %p273 = scmp.ne.s32.totalorder %s258, %s272
      %p274 = scmp.eq.s32.totalorder %s27, 0
      %p275 = por %p273, %p274
      %s277 = sadd.s32 %s276, 1
      %p280 = scmp.eq.s32.totalorder %s21, 31
      %p281 = scmp.ne.s32.totalorder %s276, %s278
      %p282 = scmp.eq.s32.totalorder %s21, 0
      %p283 = por %p281, %p282
      %p284 = scmp.ne.s32.totalorder %s276, %s278
      %p285 = scmp.eq.s32.totalorder %s26, 31
      %p286 = por %p284, %p285
      %p287 = scmp.ne.s32.totalorder %s278, %s279
      %p288 = scmp.eq.s32.totalorder %s26, 0
      %p289 = por %p287, %p288
      %p290 = scmp.ne.s32.totalorder %s278, %s279
      %p291 = scmp.eq.s32.totalorder %s27, 31
      %p292 = por %p290, %p291
      %p294 = scmp.ne.s32.totalorder %s279, %s293
      %p295 = scmp.eq.s32.totalorder %s27, 0
      %p296 = por %p294, %p295
      %s297 = ssub.s32 %s28, %s40
      %s298 = ssub.s32 %s29, %s36
      %s299 = sor.u32 %s297, %s298
      %p300 = scmp.eq.s32.totalorder %s299, 0
      %s302 = sadd.s32 %s301, 1
      %s303 = scalar_select %p300, %s301, %s302
      %p306 = pneg %p300
      %p307 = scmp.eq.s32.totalorder %s21, 31
      %p308 = por %p306, %p307
      %p309 = scmp.ne.s32.totalorder %s301, %s304
      %p310 = scmp.eq.s32.totalorder %s21, 0
      %p311 = por %p309, %p310
      %p312 = scmp.ne.s32.totalorder %s301, %s304
      %p313 = scmp.eq.s32.totalorder %s26, 31
      %p314 = por %p312, %p313
      %p315 = scmp.ne.s32.totalorder %s304, %s305
      %p316 = scmp.eq.s32.totalorder %s26, 0
      %p317 = por %p315, %p316
      %p318 = scmp.ne.s32.totalorder %s304, %s305
      %p319 = scmp.eq.s32.totalorder %s27, 31
      %p320 = por %p318, %p319
      %p322 = scmp.ne.s32.totalorder %s305, %s321
      %p323 = scmp.eq.s32.totalorder %s27, 0
      %p324 = por %p322, %p323
      %s325 = ssub.s32 %s28, %s40
      %s326 = ssub.s32 %s29, %s36
      %s327 = sor.u32 %s325, %s326
      %p328 = scmp.eq.s32.totalorder %s327, 0
      %s330 = sadd.s32 %s329, 1
      %s331 = scalar_select %p328, %s329, %s330
      %p334 = pneg %p328
      %p335 = scmp.eq.s32.totalorder %s21, 31
      %p336 = por %p334, %p335
      %p337 = scmp.ne.s32.totalorder %s329, %s332
      %p338 = scmp.eq.s32.totalorder %s21, 0
      %p339 = por %p337, %p338
      %p340 = scmp.ne.s32.totalorder %s329, %s332
      %p341 = scmp.eq.s32.totalorder %s26, 31
      %p342 = por %p340, %p341
      %p343 = scmp.ne.s32.totalorder %s332, %s333
      %p344 = scmp.eq.s32.totalorder %s26, 0
      %p345 = por %p343, %p344
      %p346 = scmp.ne.s32.totalorder %s332, %s333
      %p347 = scmp.eq.s32.totalorder %s27, 31
      %p348 = por %p346, %p347
      %p350 = scmp.ne.s32.totalorder %s333, %s349
      %p351 = scmp.eq.s32.totalorder %s27, 0
      %p352 = por %p350, %p351
      %p353 = scmp.le.s32.totalorder 1, %s21
      %p354 = scmp.lt.s32.totalorder %s21, 33
      %p355 = pnand %p353, %p354
      %p356 = pneg %p355
      // Predicated region
      $region9: #{basic_block1_forward.5} parent=5 // pred_check
        _
      $region10: #{basic_block1_forward.5} parent=5 // pred_check_branch
        %358 = sbr.rel (%p355) target = $region12
      $region11: #{basic_block1_forward.5} parent=5 // pred_region
        %s359 = ssub.s32 %s21, 1
        // Predicated region
        $region13: #{basic_block1_forward.5} parent=11 // pred_check
          %p360 = pneg %p142
        $region14: #{basic_block1_forward.5} parent=11 // pred_check_branch
          %362 = sbr.rel (%p360) target = $region16
        $region15: #{basic_block1_forward.5} parent=11 // pred_region
          _
        $region16: #{basic_block1_forward.5} parent=11 // pred_fallthru
          _
        // Predicated region
        $region17: #{basic_block1_forward.5} parent=11 // pred_check
          %p363 = pneg %p163
        $region18: #{basic_block1_forward.5} parent=11 // pred_check_branch
          %365 = sbr.rel (%p363) target = $region20
        $region19: #{basic_block1_forward.5} parent=11 // pred_region
          _
        $region20: #{basic_block1_forward.5} parent=11 // pred_fallthru
          _
        // Predicated region
        $region21: #{basic_block1_forward.5} parent=11 // pred_check
          %p366 = pneg %p184
        $region22: #{basic_block1_forward.5} parent=11 // pred_check_branch
          %368 = sbr.rel (%p366) target = $region24
        $region23: #{basic_block1_forward.5} parent=11 // pred_region
          _
        $region24: #{basic_block1_forward.5} parent=11 // pred_fallthru
          _
        // Predicated region
        $region25: #{basic_block1_forward.5} parent=11 // pred_check
          %p369 = pneg %p205
        $region26: #{basic_block1_forward.5} parent=11 // pred_check_branch
          %371 = sbr.rel (%p369) target = $region28
        $region27: #{basic_block1_forward.5} parent=11 // pred_region
          _
        $region28: #{basic_block1_forward.5} parent=11 // pred_fallthru
          _
        // Predicated region
        $region29: #{basic_block1_forward.5} parent=11 // pred_check
          %p372 = pneg %p226
        $region30: #{basic_block1_forward.5} parent=11 // pred_check_branch
          %374 = sbr.rel (%p372) target = $region32
        $region31: #{basic_block1_forward.5} parent=11 // pred_region
          _
        $region32: #{basic_block1_forward.5} parent=11 // pred_fallthru
          _
        // Predicated region
        $region33: #{basic_block1_forward.5} parent=11 // pred_check
          %p375 = pneg %p247
        $region34: #{basic_block1_forward.5} parent=11 // pred_check_branch
          %377 = sbr.rel (%p375) target = $region36
        $region35: #{basic_block1_forward.5} parent=11 // pred_region
          _
        $region36: #{basic_block1_forward.5} parent=11 // pred_fallthru
          _
        // Predicated region
        $region37: #{basic_block1_forward.5} parent=11 // pred_check
          %p378 = pneg %p268
        $region38: #{basic_block1_forward.5} parent=11 // pred_check_branch
          %380 = sbr.rel (%p378) target = $region40
        $region39: #{basic_block1_forward.5} parent=11 // pred_region
          _
        $region40: #{basic_block1_forward.5} parent=11 // pred_fallthru
          _
        // Predicated region
        $region41: #{basic_block1_forward.5} parent=11 // pred_check
          %p381 = pneg %p289
        $region42: #{basic_block1_forward.5} parent=11 // pred_check_branch
          %383 = sbr.rel (%p381) target = $region44
        $region43: #{basic_block1_forward.5} parent=11 // pred_region
          _
        $region44: #{basic_block1_forward.5} parent=11 // pred_fallthru
          _
      $region12: #{basic_block1_forward.5} parent=5 // pred_fallthru
        _
      %p384 = scmp.lt.s32.totalorder %s21, 32
      // Predicated region
      $region45: #{basic_block1_forward.5} parent=5 // pred_check
        %p385 = pneg %p384
      $region46: #{basic_block1_forward.5} parent=5 // pred_check_branch
        %387 = sbr.rel (%p385) target = $region48
      $region47: #{basic_block1_forward.5} parent=5 // pred_region
        // Predicated region
        $region49: #{basic_block1_forward.5} parent=47 // pred_check
          %p388 = pneg %p55
        $region50: #{basic_block1_forward.5} parent=47 // pred_check_branch
          %390 = sbr.rel (%p388) target = $region52
        $region51: #{basic_block1_forward.5} parent=47 // pred_region
          %p391 = scmp.lt.s32.totalorder %s28, 1
          %s392 = scalar_select %p391, %s28, 1
          %p393 = scmp.lt.s32.totalorder %s29, 17
          %s394 = scalar_select %p393, %s29, 17
          %s395 = smul.addr %s394, 3
          %s396 = smul.addr %s392, 54
          %s397 = sadd.s32 %s395, %s396
          %s398 = smul.addr %s397, 4
          %s399 = scalar_lea.vmem %s0, %s398
        $region52: #{basic_block1_forward.5} parent=47 // pred_fallthru
          _
        // Predicated region
        $region53: #{basic_block1_forward.5} parent=47 // pred_check
          %p400 = pneg %p85
        $region54: #{basic_block1_forward.5} parent=47 // pred_check_branch
          %402 = sbr.rel (%p400) target = $region56
        $region55: #{basic_block1_forward.5} parent=47 // pred_region
          %s403 = sadd.s32 %s29, 1
          %p404 = scmp.lt.s32.totalorder %s28, 1
          %s405 = scalar_select %p404, %s28, 1
          %p406 = scmp.lt.s32.totalorder %s403, 17
          %s407 = scalar_select %p406, %s403, 17
          %s408 = smul.addr %s407, 3
          %s409 = smul.addr %s405, 54
          %s410 = sadd.s32 %s408, %s409
          %s411 = smul.addr %s410, 4
          %s412 = scalar_lea.vmem %s1, %s411
          %s413 = sadd.s32 %s29, 1
        $region56: #{basic_block1_forward.5} parent=47 // pred_fallthru
          _
        // Predicated region
        $region57: #{basic_block1_forward.5} parent=47 // pred_check
          %p414 = pneg %p115
        $region58: #{basic_block1_forward.5} parent=47 // pred_check_branch
          %416 = sbr.rel (%p414) target = $region60
        $region59: #{basic_block1_forward.5} parent=47 // pred_region
          %s417 = sadd.s32 %s29, 2
          %p418 = scmp.lt.s32.totalorder %s28, 1
          %s419 = scalar_select %p418, %s28, 1
          %p420 = scmp.lt.s32.totalorder %s417, 17
          %s421 = scalar_select %p420, %s417, 17
          %s422 = smul.addr %s421, 3
          %s423 = smul.addr %s419, 54
          %s424 = sadd.s32 %s422, %s423
          %s425 = smul.addr %s424, 4
          %s426 = scalar_lea.vmem %s2, %s425
          %s427 = sadd.s32 %s29, 2
        $region60: #{basic_block1_forward.5} parent=47 // pred_fallthru
          _
        // Predicated region
        $region61: #{basic_block1_forward.5} parent=47 // pred_check
          %p428 = pneg %p311
        $region62: #{basic_block1_forward.5} parent=47 // pred_check_branch
          %430 = sbr.rel (%p428) target = $region64
        $region63: #{basic_block1_forward.5} parent=47 // pred_region
          %p431 = scmp.lt.s32.totalorder %s28, 1
          %s432 = scalar_select %p431, %s28, 1
          %p433 = scmp.lt.s32.totalorder %s29, 15
          %s434 = scalar_select %p433, %s29, 15
          %s435 = smul.addr %s434, 2
          %s436 = smul.addr %s432, 32
          %s437 = sadd.s32 %s435, %s436
          %s438 = smul.addr %s437, 8
          %s439 = scalar_lea.vmem %s11, %s438
        $region64: #{basic_block1_forward.5} parent=47 // pred_fallthru
          _
      $region48: #{basic_block1_forward.5} parent=5 // pred_fallthru
        _
      %p440 = scmp.le.s32.totalorder 1, %s21
      %p441 = scmp.lt.s32.totalorder %s21, 33
      %p442 = pnand %p440, %p441
      %p443 = pneg %p442
      // Predicated region
      $region65: #{basic_block1_forward.5} parent=5 // pred_check
        _
      $region66: #{basic_block1_forward.5} parent=5 // pred_check_branch
        %445 = sbr.rel (%p442) target = $region68
      $region67: #{basic_block1_forward.5} parent=5 // pred_region
        %s446 = ssub.s32 %s21, 1
        %p447 = scmp.lt.s32.totalorder %s30, 1
        %s448 = scalar_select %p447, %s30, 1
        %p449 = scmp.lt.s32.totalorder %s31, 17
        %s450 = scalar_select %p449, %s31, 17
        %s451 = smul.addr %s450, 3
        %s452 = smul.addr %s448, 54
        %s453 = sadd.s32 %s451, %s452
        %s454 = smul.addr %s453, 4
        %s455 = scalar_lea.vmem %s0, %s454
        %p456 = pneg %p61
        %p457 = pneg %p58
        %s458 = sadd.s32 %s31, 1
        %p459 = scmp.lt.s32.totalorder %s30, 1
        %s460 = scalar_select %p459, %s30, 1
        %p461 = scmp.lt.s32.totalorder %s458, 17
        %s462 = scalar_select %p461, %s458, 17
        %s463 = smul.addr %s462, 3
        %s464 = smul.addr %s460, 54
        %s465 = sadd.s32 %s463, %s464
        %s466 = smul.addr %s465, 4
        %s467 = scalar_lea.vmem %s1, %s466
        %p468 = pneg %p91
        %p469 = pneg %p88
        %s470 = sadd.s32 %s31, 2
        %p471 = scmp.lt.s32.totalorder %s30, 1
        %s472 = scalar_select %p471, %s30, 1
        %p473 = scmp.lt.s32.totalorder %s470, 17
        %s474 = scalar_select %p473, %s470, 17
        %s475 = smul.addr %s474, 3
        %s476 = smul.addr %s472, 54
        %s477 = sadd.s32 %s475, %s476
        %s478 = smul.addr %s477, 4
        %s479 = scalar_lea.vmem %s2, %s478
        %p480 = pneg %p121
        %p481 = pneg %p118
        %p482 = pneg %p142
        %p483 = pneg %p139
        %p484 = pneg %p163
        %p485 = pneg %p160
        %p486 = pneg %p184
        %p487 = pneg %p181
        %p488 = pneg %p205
        %p489 = pneg %p202
        %p490 = pneg %p226
        %p491 = pneg %p223
        %p492 = pneg %p247
        %p493 = pneg %p244
        %p494 = pneg %p268
        %p495 = pneg %p265
        %p496 = pneg %p289
        %p497 = pneg %p286
        %p498 = scmp.lt.s32.totalorder %s30, 1
        %s499 = scalar_select %p498, %s30, 1
        %p500 = scmp.lt.s32.totalorder %s31, 15
        %s501 = scalar_select %p500, %s31, 15
        %s502 = smul.addr %s501, 2
        %s503 = smul.addr %s499, 32
        %s504 = sadd.s32 %s502, %s503
        %s505 = smul.addr %s504, 8
        %s506 = scalar_lea.vmem %s11, %s505
        %p507 = pneg %p317
        %p508 = pneg %p314
        %p509 = pneg %p345
        %p510 = pneg %p342
        %s511 = sand.u32 %s332, 1
        %s512 = scalar_lea.sflag [#allocation3], %s511
        %s513 = sand.u32 %s332, 1
        %s514 = smul.addr %s513, 16
        %s515 = scalar_lea.vmem [#allocation2], %s514
        %p516 = scmp.lt.s32.totalorder %s30, 1
        %s517 = scalar_select %p516, %s30, 1
        %p518 = scmp.lt.s32.totalorder %s31, 17
        %s519 = scalar_select %p518, %s31, 17
        %s520 = smul.addr %s519, 3
        %s521 = smul.addr %s517, 54
        %s522 = sadd.s32 %s520, %s521
        %s523 = smul.addr %s522, 4
        %s524 = scalar_lea.vmem %s0, %s523
        %s525 = sadd.s32 %s31, 1
        %p526 = scmp.lt.s32.totalorder %s30, 1
        %s527 = scalar_select %p526, %s30, 1
        %p528 = scmp.lt.s32.totalorder %s525, 17
        %s529 = scalar_select %p528, %s525, 17
        %s530 = smul.addr %s529, 3
        %s531 = smul.addr %s527, 54
        %s532 = sadd.s32 %s530, %s531
        %s533 = smul.addr %s532, 4
        %s534 = scalar_lea.vmem %s1, %s533
        %s535 = sadd.s32 %s31, 1
        %s536 = sadd.s32 %s31, 2
        %p537 = scmp.lt.s32.totalorder %s30, 1
        %s538 = scalar_select %p537, %s30, 1
        %p539 = scmp.lt.s32.totalorder %s536, 17
        %s540 = scalar_select %p539, %s536, 17
        %s541 = smul.addr %s540, 3
        %s542 = smul.addr %s538, 54
        %s543 = sadd.s32 %s541, %s542
        %s544 = smul.addr %s543, 4
        %s545 = scalar_lea.vmem %s2, %s544
        %s546 = sadd.s32 %s31, 2
        %p547 = scmp.lt.s32.totalorder %s30, 1
        %s548 = scalar_select %p547, %s30, 1
        %p549 = scmp.lt.s32.totalorder %s31, 15
        %s550 = scalar_select %p549, %s31, 15
        %s551 = smul.addr %s550, 2
        %s552 = smul.addr %s548, 32
        %s553 = sadd.s32 %s551, %s552
        %s554 = smul.addr %s553, 8
        %s555 = scalar_lea.vmem %s11, %s554
        %v557 = vld [vmem:[%s3] sm:$0xf]
        %v558 = vld [vmem:[%s3 + $0x4] sm:$0xf]
        %v559 = vld [vmem:[%s3 + $0x8] sm:$0xf]
        %v560 = vld [vmem:[%s3 + $0xc] sm:$0xf]
        %v561 = vld [vmem:[%s4] sm:$0x1]
        %v562 = vld [vmem:[%s5] sm:$0x1]
        %v563 = vlaneseq
        %v564 = vshrl.u32 %v563, 7
        %v565 = vadd.s32 %v564, 8
        %v566 = vadd.s32 %v564, 16
        %vm567 = vcmp.ge.s32.totalorder %v564, 1
        %vm568 = vcmp.ge.s32.totalorder %v565, 1
        %vm569 = vcmp.ge.s32.totalorder %v566, 1
        %vm570 = vcmp.le.s32.totalorder %v564, 16
        %vm571 = vcmp.le.s32.totalorder %v565, 16
        %vm572 = vcmp.le.s32.totalorder %v566, 16
        %vm573 = vmand %vm567, %vm570
        %vm574 = vmand %vm568, %vm571
        %vm575 = vmand %vm569, %vm572
        %v576 = vld [vmem:[%s524] sm:$0xf]
        %v577 = vld [vmem:[%s524 + $0x4] sm:$0xf]
        %v578 = vld [vmem:[%s524 + $0x8] sm:$0x1]
        %v582 = vunpack.c.l.b16 %v576
        %v583 = vunpack.c.l.b16 %v577
        %v584 = vunpack.c.l.b16 %v578
        %v585 = vpack.c.b16 %v583, %v582
        %v586 = vpack.c.b16 %v584, %v584
        %v591 = vunpack.c.l.b16 %v557
        %v592 = vunpack.c.l.b16 %v558
        %v593 = vunpack.c.l.b16 %v559
        %v594 = vunpack.c.l.b16 %v560
        %v595 = vpack.c.b16 %v592, %v591
        %v596 = vpack.c.b16 %v594, %v593
        %vm599 = vcmask 261120
        %v601 = vsel %vm599, %v585, 0
        %v604 = vsel %vm599, %v586, 0
        %606 = vmatprep.subr.bf16.mxu0 0
        %607 = vmatpush1.bf16.msra.mxu0 %v595
        %608 = vmatprep.subr.bf16.mxu0 0
        %609 = vmatpush1.bf16.msra.mxu0 %v596
        %610 = vmatprep.subr.bf16.mxu0 0
        %611 = vmatpush1.bf16.msra.mxu0 0
        %612 = vmatprep.subr.bf16.mxu0 0
        %613 = vmatpush1.bf16.msra.mxu0 0
        %614 = vmatprep.subr.bf16.mxu0 0
        %615 = vmatpush1.bf16.msra.mxu0 0
        %616 = vmatprep.subr.bf16.mxu0 0
        %617 = vmatpush1.bf16.msra.mxu0 0
        %618 = vmatprep.subr.bf16.mxu0 0
        %619 = vmatpush1.bf16.msra.mxu0 0
        %620 = vmatprep.subr.bf16.mxu0 0
        %621 = vmatpush1.bf16.msra.mxu0 0
        %622 = vmatprep.subr.bf16.mxu0 0
        %623 = vmatpush1.bf16.msra.mxu0 0
        %624 = vmatprep.subr.bf16.mxu0 0
        %625 = vmatpush1.bf16.msra.mxu0 0
        %626 = vmatprep.subr.bf16.mxu0 0
        %627 = vmatpush1.bf16.msra.mxu0 0
        %628 = vmatprep.subr.bf16.mxu0 0
        %629 = vmatpush1.bf16.msra.mxu0 0
        %630 = vmatprep.subr.bf16.mxu0 0
        %631 = vmatpush1.bf16.msra.mxu0 0
        %632 = vmatprep.subr.bf16.mxu0 0
        %633 = vmatpush1.bf16.msra.mxu0 0
        %634 = vmatprep.subr.bf16.mxu0 0
        %635 = vmatpush1.bf16.msra.mxu0 0
        %636 = vmatprep.subr.bf16.mxu0 0
        %637 = vmatpush1.bf16.msra.mxu0 0
        %638 = vmatprep.mubr.bf16.mxu0 0
        %639 = vmatmul.mubr.bf16.gmra.mrb[0].mxu0 %v601
        %v640 = vpop.f32.mrb[0].mxu0
        %v641 = vadd.f32 0.0, %v640
        %v642 = vpop.f32.mrb[0].mxu0
        %v643 = vpop.f32.mrb[0].mxu0
        %v644 = vadd.f32 0.0, %v643
        %v645 = vpop.f32.mrb[0].mxu0
        %646 = vmatprep.mubr.bf16.mxu0 0
        %647 = vmatmul.mubr.bf16.gmra.mrb[0].mxu0 %v604
        %v648 = vpop.f32.mrb[0].mxu0
        %v649 = vadd.f32 0.0, %v648
        %v650 = vpop.f32.mrb[0].mxu0
        %v651 = vpop.f32.mrb[0].mxu0
        %v652 = vpop.f32.mrb[0].mxu0
        %653 = vdwg.mxu0
        %v655 = vlaneseq
        %v656 = vshrl.u32 %v655, 7
        %v657 = vsub.s32 0, %v656
        %v658 = vrot.slane %v561, %v657
        %v660 = vmul.f32 %v641, %v658
        %v661 = vmul.f32 %v644, %v658
        %v662 = vmul.f32 %v649, %v658
        %v664 = vlaneseq
        %v665 = vshrl.u32 %v664, 7
        %v666 = vsub.s32 0, %v665
        %v667 = vrot.slane %v562, %v666
        %v669 = vadd.f32 %v660, %v667
        %v670 = vadd.f32 %v661, %v667
        %v671 = vadd.f32 %v662, %v667
        %v672 = vmax.f32 %v669, 0.0
        %v673 = vmax.f32 %v670, 0.0
        %v674 = vmax.f32 %v671, 0.0
        %s675 = ssub.s32 %s31, 1
        %p676 = scmp.ge.s32.totalorder %s675, 0
        %p677 = scmp.lt.s32.totalorder %s675, 16
        %p678 = pnand %p676, %p677
        %p679 = pneg %p678
        %v680 = vsel %vm573, 1, 0
        %v681 = vsel %vm574, 1, 0
        %v682 = vsel %vm575, 1, 0
        %vm683 = vcmp.eq.s32.totalorder %v680, 1
        %vm684 = vcmp.eq.s32.totalorder %v681, 1
        %vm685 = vcmp.eq.s32.totalorder %v682, 1
        %v686 = vsel %vm683, %v672, 0.0
        %v687 = vsel %vm684, %v673, 0.0
        %v688 = vsel %vm685, %v674, 0.0
        %s689 = scalar_select %p679, 1.0, 0.0
        %v690 = vstv %s689
        %v691 = vmul.f32 %v686, %v690
        %v692 = vmul.f32 %v687, %v690
        %v693 = vmul.f32 %v688, %v690
        %v694 = vld [vmem:[%s534] sm:$0xf]
        %v695 = vld [vmem:[%s534 + $0x4] sm:$0xf]
        %v696 = vld [vmem:[%s534 + $0x8] sm:$0x1]
        %v700 = vunpack.c.l.b16 %v694
        %v701 = vunpack.c.l.b16 %v695
        %v702 = vunpack.c.l.b16 %v696
        %v703 = vpack.c.b16 %v701, %v700
        %v704 = vpack.c.b16 %v702, %v702
        %v706 = vsel %vm599, %v703, 0
        %v709 = vsel %vm599, %v704, 0
        %711 = vmatprep.subr.bf16.mxu0 0
        %712 = vmatpush1.bf16.msra.mxu0 %v595
        %713 = vmatprep.subr.bf16.mxu0 0
        %714 = vmatpush1.bf16.msra.mxu0 %v596
        %715 = vmatprep.subr.bf16.mxu0 0
        %716 = vmatpush1.bf16.msra.mxu0 0
        %717 = vmatprep.subr.bf16.mxu0 0
        %718 = vmatpush1.bf16.msra.mxu0 0
        %719 = vmatprep.subr.bf16.mxu0 0
        %720 = vmatpush1.bf16.msra.mxu0 0
        %721 = vmatprep.subr.bf16.mxu0 0
        %722 = vmatpush1.bf16.msra.mxu0 0
        %723 = vmatprep.subr.bf16.mxu0 0
        %724 = vmatpush1.bf16.msra.mxu0 0
        %725 = vmatprep.subr.bf16.mxu0 0
        %726 = vmatpush1.bf16.msra.mxu0 0
        %727 = vmatprep.subr.bf16.mxu0 0
        %728 = vmatpush1.bf16.msra.mxu0 0
        %729 = vmatprep.subr.bf16.mxu0 0
        %730 = vmatpush1.bf16.msra.mxu0 0
        %731 = vmatprep.subr.bf16.mxu0 0
        %732 = vmatpush1.bf16.msra.mxu0 0
        %733 = vmatprep.subr.bf16.mxu0 0
        %734 = vmatpush1.bf16.msra.mxu0 0
        %735 = vmatprep.subr.bf16.mxu0 0
        %736 = vmatpush1.bf16.msra.mxu0 0
        %737 = vmatprep.subr.bf16.mxu0 0
        %738 = vmatpush1.bf16.msra.mxu0 0
        %739 = vmatprep.subr.bf16.mxu0 0
        %740 = vmatpush1.bf16.msra.mxu0 0
        %741 = vmatprep.subr.bf16.mxu0 0
        %742 = vmatpush1.bf16.msra.mxu0 0
        %743 = vmatprep.mubr.bf16.mxu0 0
        %744 = vmatmul.mubr.bf16.gmra.mrb[0].mxu0 %v706
        %v745 = vpop.f32.mrb[0].mxu0
        %v746 = vadd.f32 0.0, %v745
        %v747 = vpop.f32.mrb[0].mxu0
        %v748 = vpop.f32.mrb[0].mxu0
        %v749 = vadd.f32 0.0, %v748
        %v750 = vpop.f32.mrb[0].mxu0
        %751 = vmatprep.mubr.bf16.mxu0 0
        %752 = vmatmul.mubr.bf16.gmra.mrb[0].mxu0 %v709
        %v753 = vpop.f32.mrb[0].mxu0
        %v754 = vadd.f32 0.0, %v753
        %v755 = vpop.f32.mrb[0].mxu0
        %v756 = vpop.f32.mrb[0].mxu0
        %v757 = vpop.f32.mrb[0].mxu0
        %758 = vdwg.mxu0
        %v759 = vmul.f32 %v746, %v658
        %v760 = vmul.f32 %v749, %v658
        %v761 = vmul.f32 %v754, %v658
        %v762 = vadd.f32 %v759, %v667
        %v763 = vadd.f32 %v760, %v667
        %v764 = vadd.f32 %v761, %v667
        %v765 = vmax.f32 %v762, 0.0
        %v766 = vmax.f32 %v763, 0.0
        %v767 = vmax.f32 %v764, 0.0
        %p768 = scmp.ge.s32.totalorder %s31, 0
        %p769 = scmp.lt.s32.totalorder %s31, 16
        %p770 = pnand %p768, %p769
        %p771 = pneg %p770
        %v772 = vsel %vm683, %v765, 0.0
        %v773 = vsel %vm684, %v766, 0.0
        %v774 = vsel %vm685, %v767, 0.0
        %s775 = scalar_select %p771, 1.0, 0.0
        %v776 = vstv %s775
        %v777 = vmul.f32 %v772, %v776
        %v778 = vmul.f32 %v773, %v776
        %v779 = vmul.f32 %v774, %v776
        %v780 = vld [vmem:[%s545] sm:$0xf]
        %v781 = vld [vmem:[%s545 + $0x4] sm:$0xf]
        %v782 = vld [vmem:[%s545 + $0x8] sm:$0x1]
        %v786 = vunpack.c.l.b16 %v780
        %v787 = vunpack.c.l.b16 %v781
        %v788 = vunpack.c.l.b16 %v782
        %v789 = vpack.c.b16 %v787, %v786
        %v790 = vpack.c.b16 %v788, %v788
        %v792 = vsel %vm599, %v789, 0
        %v795 = vsel %vm599, %v790, 0
        %797 = vmatprep.subr.bf16.mxu0 0
        %798 = vmatpush1.bf16.msra.mxu0 %v595
        %799 = vmatprep.subr.bf16.mxu0 0
        %800 = vmatpush1.bf16.msra.mxu0 %v596
        %801 = vmatprep.subr.bf16.mxu0 0
        %802 = vmatpush1.bf16.msra.mxu0 0
        %803 = vmatprep.subr.bf16.mxu0 0
        %804 = vmatpush1.bf16.msra.mxu0 0
        %805 = vmatprep.subr.bf16.mxu0 0
        %806 = vmatpush1.bf16.msra.mxu0 0
        %807 = vmatprep.subr.bf16.mxu0 0
        %808 = vmatpush1.bf16.msra.mxu0 0
        %809 = vmatprep.subr.bf16.mxu0 0
        %810 = vmatpush1.bf16.msra.mxu0 0
        %811 = vmatprep.subr.bf16.mxu0 0
        %812 = vmatpush1.bf16.msra.mxu0 0
        %813 = vmatprep.subr.bf16.mxu0 0
        %814 = vmatpush1.bf16.msra.mxu0 0
        %815 = vmatprep.subr.bf16.mxu0 0
        %816 = vmatpush1.bf16.msra.mxu0 0
        %817 = vmatprep.subr.bf16.mxu0 0
        %818 = vmatpush1.bf16.msra.mxu0 0
        %819 = vmatprep.subr.bf16.mxu0 0
        %820 = vmatpush1.bf16.msra.mxu0 0
        %821 = vmatprep.subr.bf16.mxu0 0
        %822 = vmatpush1.bf16.msra.mxu0 0
        %823 = vmatprep.subr.bf16.mxu0 0
        %824 = vmatpush1.bf16.msra.mxu0 0
        %825 = vmatprep.subr.bf16.mxu0 0
        %826 = vmatpush1.bf16.msra.mxu0 0
        %827 = vmatprep.subr.bf16.mxu0 0
        %828 = vmatpush1.bf16.msra.mxu0 0
        %829 = vmatprep.mubr.bf16.mxu0 0
        %830 = vmatmul.mubr.bf16.gmra.mrb[0].mxu0 %v792
        %v831 = vpop.f32.mrb[0].mxu0
        %v832 = vadd.f32 0.0, %v831
        %v833 = vpop.f32.mrb[0].mxu0
        %v834 = vpop.f32.mrb[0].mxu0
        %v835 = vadd.f32 0.0, %v834
        %v836 = vpop.f32.mrb[0].mxu0
        %837 = vmatprep.mubr.bf16.mxu0 0
        %838 = vmatmul.mubr.bf16.gmra.mrb[0].mxu0 %v795
        %v839 = vpop.f32.mrb[0].mxu0
        %v840 = vadd.f32 0.0, %v839
        %v841 = vpop.f32.mrb[0].mxu0
        %v842 = vpop.f32.mrb[0].mxu0
        %v843 = vpop.f32.mrb[0].mxu0
        %844 = vdwg.mxu0
        %v845 = vmul.f32 %v832, %v658
        %v846 = vmul.f32 %v835, %v658
        %v847 = vmul.f32 %v840, %v658
        %v848 = vadd.f32 %v845, %v667
        %v849 = vadd.f32 %v846, %v667
        %v850 = vadd.f32 %v847, %v667
        %v851 = vmax.f32 %v848, 0.0
        %v852 = vmax.f32 %v849, 0.0
        %v853 = vmax.f32 %v850, 0.0
        %s854 = sadd.s32 %s31, 1
        %p855 = scmp.ge.s32.totalorder %s854, 0
        %p856 = scmp.lt.s32.totalorder %s854, 16
        %p857 = pnand %p855, %p856
        %p858 = pneg %p857
        %v859 = vsel %vm683, %v851, 0.0
        %v860 = vsel %vm684, %v852, 0.0
        %v861 = vsel %vm685, %v853, 0.0
        %s862 = scalar_select %p858, 1.0, 0.0
        %v863 = vstv %s862
        %v864 = vmul.f32 %v859, %v863
        %v865 = vmul.f32 %v860, %v863
        %v866 = vmul.f32 %v861, %v863
        %v867 = vld [vmem:[%s6] sm:$0xff]
        %v868 = vld [vmem:[%s6 + $0x8] sm:$0x1]
        %v869 = vlaneseq
        %v870 = vshrl.u32 %v869, 7
        %v871 = vsub.s32 0, %v870
        %v872 = vrot.slane %v867, %v871
        %v873 = vmul.f32 %v691, %v872
        %v874 = vmul.f32 %v692, %v872
        %v875 = vadd.f32 %v873, 0.0
        %v876 = vadd.f32 %v874, 0.0
        %v877 = vlaneseq
        %v878 = vshrl.u32 %v877, 7
        %v879 = vsub.s32 1, %v878
        %v880 = vrot.slane %v867, %v879
        %v881 = vmul.f32 %v691, %v880
        %v882 = vmul.f32 %v692, %v880
        %v883 = vmul.f32 %v693, %v880
        %vm887 = vcmask 1046528
        %v888 = vrot.slane %v881, 1
        %v889 = vrot.slane %v882, 1
        %v890 = vsel %vm887, %v888, %v889
        %v891 = vrot.slane %v883, 1
        %v892 = vsel %vm887, %v889, %v891
        %v895 = vadd.f32 %v875, %v890
        %v896 = vadd.f32 %v876, %v892
        %v897 = vlaneseq
        %v898 = vshrl.u32 %v897, 7
        %v899 = vsub.s32 2, %v898
        %v900 = vrot.slane %v867, %v899
        %v901 = vmul.f32 %v691, %v900
        %v902 = vmul.f32 %v692, %v900
        %v903 = vmul.f32 %v693, %v900
        %vm907 = vcmask 1045504
        %v908 = vrot.slane %v901, 2
        %v909 = vrot.slane %v902, 2
        %v910 = vsel %vm907, %v908, %v909
        %v911 = vrot.slane %v903, 2
        %v912 = vsel %vm907, %v909, %v911
        %v915 = vadd.f32 %v895, %v910
        %v916 = vadd.f32 %v896, %v912
        %v917 = vlaneseq
        %v918 = vshrl.u32 %v917, 7
        %v919 = vsub.s32 3, %v918
        %v920 = vrot.slane %v867, %v919
        %v921 = vmul.f32 %v777, %v920
        %v922 = vmul.f32 %v778, %v920
        %v923 = vadd.f32 %v915, %v921
        %v924 = vadd.f32 %v916, %v922
        %v925 = vlaneseq
        %v926 = vshrl.u32 %v925, 7
        %v927 = vsub.s32 4, %v926
        %v928 = vrot.slane %v867, %v927
        %v929 = vmul.f32 %v777, %v928
        %v930 = vmul.f32 %v778, %v928
        %v931 = vmul.f32 %v779, %v928
        %v935 = vrot.slane %v929, 1
        %v936 = vrot.slane %v930, 1
        %v937 = vsel %vm887, %v935, %v936
        %v938 = vrot.slane %v931, 1
        %v939 = vsel %vm887, %v936, %v938
        %v942 = vadd.f32 %v923, %v937
        %v943 = vadd.f32 %v924, %v939
        %v944 = vlaneseq
        %v945 = vshrl.u32 %v944, 7
        %v946 = vsub.s32 5, %v945
        %v947 = vrot.slane %v867, %v946
        %v948 = vmul.f32 %v777, %v947
        %v949 = vmul.f32 %v778, %v947
        %v950 = vmul.f32 %v779, %v947
        %v954 = vrot.slane %v948, 2
        %v955 = vrot.slane %v949, 2
        %v956 = vsel %vm907, %v954, %v955
        %v957 = vrot.slane %v950, 2
        %v958 = vsel %vm907, %v955, %v957
        %v961 = vadd.f32 %v942, %v956
        %v962 = vadd.f32 %v943, %v958
        %v963 = vlaneseq
        %v964 = vshrl.u32 %v963, 7
        %v965 = vsub.s32 6, %v964
        %v966 = vrot.slane %v867, %v965
        %v967 = vmul.f32 %v864, %v966
        %v968 = vmul.f32 %v865, %v966
        %v969 = vadd.f32 %v961, %v967
        %v970 = vadd.f32 %v962, %v968
        %v971 = vlaneseq
        %v972 = vshrl.u32 %v971, 7
        %v973 = vsub.s32 7, %v972
        %v974 = vrot.slane %v867, %v973
        %v975 = vmul.f32 %v864, %v974
        %v976 = vmul.f32 %v865, %v974
        %v977 = vmul.f32 %v866, %v974
        %v981 = vrot.slane %v975, 1
        %v982 = vrot.slane %v976, 1
        %v983 = vsel %vm887, %v981, %v982
        %v984 = vrot.slane %v977, 1
        %v985 = vsel %vm887, %v982, %v984
        %v988 = vadd.f32 %v969, %v983
        %v989 = vadd.f32 %v970, %v985
        %v990 = vlaneseq
        %v991 = vshrl.u32 %v990, 7
        %v992 = vsub.s32 0, %v991
        %v993 = vrot.slane %v868, %v992
        %v994 = vmul.f32 %v864, %v993
        %v995 = vmul.f32 %v865, %v993
        %v996 = vmul.f32 %v866, %v993
        %v1000 = vrot.slane %v994, 2
        %v1001 = vrot.slane %v995, 2
        %v1002 = vsel %vm907, %v1000, %v1001
        %v1003 = vrot.slane %v996, 2
        %v1004 = vsel %vm907, %v1001, %v1003
        %v1007 = vadd.f32 %v988, %v1002
        %v1008 = vadd.f32 %v989, %v1004
        %v1009 = vld [vmem:[%s7] sm:$0x1]
        %v1011 = vlaneseq
        %v1012 = vshrl.u32 %v1011, 7
        %v1013 = vsub.s32 0, %v1012
        %v1014 = vrot.slane %v1009, %v1013
        %v1016 = vmul.f32 %v1007, %v1014
        %v1017 = vmul.f32 %v1008, %v1014
        %v1018 = vld [vmem:[%s8] sm:$0x1]
        %v1020 = vlaneseq
        %v1021 = vshrl.u32 %v1020, 7
        %v1022 = vsub.s32 0, %v1021
        %v1023 = vrot.slane %v1018, %v1022
        %v1025 = vadd.f32 %v1016, %v1023
        %v1026 = vadd.f32 %v1017, %v1023
        %v1027 = vmax.f32 %v1025, 0.0
        %v1028 = vmax.f32 %v1026, 0.0
        %vm1031 = vcmask 1040384
        %v1032 = vrot.slane %v1027, 7
        %v1033 = vrot.slane %v1028, 7
        %v1034 = vsel %vm1031, %v1032, %v1033
        %1035 = vrot.lane.b32.xlu0 %v1032, 32
        %v1036 = vpop.permute.xlu0 %1035
        %1037 = vrot.lane.b32.xlu0 %v1034, 32
        %v1038 = vpop.permute.xlu0 %1037
        %1039 = vrot.lane.b32.xlu0 %v1033, 32
        %v1040 = vpop.permute.xlu0 %1039
        %v1044 = vsel %vm599, %v777, %v1036
        %v1045 = vsel %vm599, %v778, %v1038
        %v1046 = vsel %vm599, %v779, %v1040
        %v1047 = vld [vmem:[%s9] sm:$0x1]
        %v1049 = vlaneseq
        %v1050 = vshrl.u32 %v1049, 7
        %v1051 = vsub.s32 0, %v1050
        %v1052 = vrot.slane %v1047, %v1051
        %v1054 = vmul.f32 %v1044, %v1052
        %v1055 = vmul.f32 %v1045, %v1052
        %v1056 = vmul.f32 %v1046, %v1052
        %v1057 = vld [vmem:[%s10] sm:$0x1]
        %v1059 = vlaneseq
        %v1060 = vshrl.u32 %v1059, 7
        %v1061 = vsub.s32 0, %v1060
        %v1062 = vrot.slane %v1057, %v1061
        %v1064 = vadd.f32 %v1054, %v1062
        %v1065 = vadd.f32 %v1055, %v1062
        %v1066 = vadd.f32 %v1056, %v1062
        %v1067 = vld [vmem:[%s555] sm:$0xff]
        %v1068 = vld [vmem:[%s555 + $0x8] sm:$0xff]
        %v1071 = vrot.slane %v1067, 7
        %v1072 = vrot.slane %v1068, 7
        %v1073 = vsel %vm1031, %v1071, %v1072
        %v1077 = vadd.f32 %v1064, %v1071
        %v1078 = vadd.f32 %v1065, %v1073
        %v1079 = vadd.f32 %v1066, %v1072
        %vm1080 = vcmask 523265
        %1081 = vst.msk [vmem:[%s515 - $0x1] sm:$0xfe] %vm1080, %v1077
        %vm1082 = vcmask 523264
        %1083 = vst.msk [vmem:[%s515 + $0x7] sm:$0xff] %vm1082, %v1078
        %vm1084 = vcmask 516096
        %1085 = vst.msk [vmem:[%s515 + $0xf] sm:$0x1] %vm1084, %v1079
        %s1086 = sand.u32 %s332, 1
        %s1087 = scalar_lea.sflag [#allocation3], %s1086
        %s1088 = sand.u32 %s332, 1
        %s1089 = smul.addr %s1088, 16
        %s1090 = scalar_lea.vmem [#allocation2], %s1089
        // Predicated region
        $region69: #{basic_block1_forward.5} parent=67 // pred_check
          %p1091 = pneg %p342
        $region70: #{basic_block1_forward.5} parent=67 // pred_check_branch
          %1093 = sbr.rel (%p1091) target = $region72
        $region71: #{basic_block1_forward.5} parent=67 // pred_region
          %s1095 = ssub.s32 256, 256
          %1096 = vsyncadd %s1087, %s1095
          %s1097 = smul.addr %s31, 2
          %s1098 = smul.addr %s30, 32
          %s1099 = sadd.s32 %s1097, %s1098
          %s1100 = smul.addr %s1099, 128
          %s1101 = scalar_lea.hbm %s12, %s1100
          %s1102 = sshll.u32 %s1090, 4
          %s1103 = int_to_ptr.vmem [resolvable:$true] %s1102
          %1108 = dma.vmem_to_hbm [thread:$0]  %s1103, 256, %s1101, %s1087, 128, 128, 8
        $region72: #{basic_block1_forward.5} parent=67 // pred_fallthru
          _
      $region68: #{basic_block1_forward.5} parent=5 // pred_fallthru
        _
      %p1109 = scmp.le.s32.totalorder 2, %s21
      // Predicated region
      $region73: #{basic_block1_forward.5} parent=5 // pred_check
        %p1110 = pneg %p1109
      $region74: #{basic_block1_forward.5} parent=5 // pred_check_branch
        %1112 = sbr.rel (%p1110) target = $region76
      $region75: #{basic_block1_forward.5} parent=5 // pred_region
        %s1113 = ssub.s32 %s21, 2
        // Predicated region
        $region77: #{basic_block1_forward.5} parent=75 // pred_check
          %p1114 = pneg %p348
        $region78: #{basic_block1_forward.5} parent=75 // pred_check_branch
          %1116 = sbr.rel (%p1114) target = $region80
        $region79: #{basic_block1_forward.5} parent=75 // pred_region
          %s1117 = sand.u32 %s333, 1
          %s1118 = scalar_lea.sflag [#allocation3], %s1117
          %s1119 = sand.u32 %s333, 1
          %s1120 = smul.addr %s1119, 16
          %s1121 = scalar_lea.vmem [#allocation2], %s1120
          %1122 = dma.done %s1118, 256
        $region80: #{basic_block1_forward.5} parent=75 // pred_fallthru
          _
      $region76: #{basic_block1_forward.5} parent=5 // pred_fallthru
        _
    $region6: #{basic_block1_forward.5} parent=1 // loop_footer
      %s25 = sadd.s32 1, %s21
    $region7: #{basic_block1_forward.5} parent=1 // loop_footer_branch
      %20 = sbr.rel target = $region3
    $region8: #{basic_block1_forward.5} parent=1 // loop_exit
      _
    %1123 = vsyncpa [#allocation3], 1
    %s1124 = scalar_lea.sflag [#allocation3], 1
    %1125 = vsyncpa %s1124, 1

</llo_original>
